<compile_context>
chip_gen: v6e
topology: v6e:2x2x1
jax: 0.10.0
libtpu: 0.0.40
codegen_flags: <defaults>
</compile_context>

<pallas_src>
import functools

import jax
import jax.numpy as jnp
from jax.experimental import pallas as pl
from jax.experimental.pallas import tpu as pltpu


LRELU_SLOPE = 0.2
BN_EPS = 1e-5
VMEM_LIMIT = 48 * 1024 * 1024     # sized for v7x's 64 MiB VMEM (also ok on v5e/v6e)
TILE_M_MAX = 256
TILE_K_MAX = 512


# ----------------------------------------------------------------------------
# Small helpers
# ----------------------------------------------------------------------------
def _round_up(x, m):
    return (x + m - 1) // m * m


def _pick_tile_m(dim, max_tile=TILE_M_MAX):
    """Largest tile <= max_tile that divides dim and keeps sublane alignment."""
    if dim <= max_tile:
        return dim
    t = (max_tile // 8) * 8
    while t >= 8:
        if dim % t == 0:
            return t
        t -= 8
    return dim


def _pick_tile_k(kdim, max_tile=TILE_K_MAX):
    """Largest multiple of 128 <= max_tile that divides kdim (kdim % 128 == 0)."""
    t = min(max_tile, kdim)
    t = (t // 128) * 128
    while kdim % t:
        t -= 128
    return t


def _pad_last(a, target):
    pad = target - a.shape[-1]
    if pad == 0:
        return a
    cfg = [(0, 0)] * (a.ndim - 1) + [(0, pad)]
    return jnp.pad(a, cfg)


# ----------------------------------------------------------------------------
# Pallas kernels
# ----------------------------------------------------------------------------
def _conv_lrelu_kernel(p_ref, w_ref, b_ref, o_ref, acc_ref):
    """patches @ W  (K-tiled, f32 VMEM accumulator) + bias + LeakyReLU."""
    k = pl.program_id(1)

    @pl.when(k == 0)
    def _():
        acc_ref[...] = jnp.zeros_like(acc_ref)

    acc_ref[...] += jnp.dot(p_ref[...], w_ref[...],
                            preferred_element_type=jnp.float32)

    @pl.when(k == pl.num_programs(1) - 1)
    def _():
        y = acc_ref[...] + b_ref[...]
        o_ref[...] = jnp.where(y >= 0, y, LRELU_SLOPE * y).astype(o_ref.dtype)


def _conv_stats_kernel(p_ref, w_ref, b_ref, y_ref, stats_ref, acc_ref):
    """Pass 1 of BN layers: matmul + bias; accumulate per-channel sum and
    sum-of-squares across ALL M tiles into a grid-resident stats output."""
    i = pl.program_id(0)
    k = pl.program_id(1)

    @pl.when((i == 0) & (k == 0))
    def _():
        stats_ref[...] = jnp.zeros_like(stats_ref)

    @pl.when(k == 0)
    def _():
        acc_ref[...] = jnp.zeros_like(acc_ref)

    acc_ref[...] += jnp.dot(p_ref[...], w_ref[...],
                            preferred_element_type=jnp.float32)

    @pl.when(k == pl.num_programs(1) - 1)
    def _():
        y = acc_ref[...] + b_ref[...]
        y_ref[...] = y
        s = jnp.sum(y, axis=0, keepdims=True)
        ss = jnp.sum(y * y, axis=0, keepdims=True)
        stats_ref[...] += jnp.concatenate([s, ss], axis=0)


def _bn_lrelu_kernel(y_ref, stats_ref, g_ref, be_ref, o_ref, *, count):
    """Pass 2 of BN layers: train-mode BatchNorm (biased variance) + affine +
    LeakyReLU.  Pure VPU work, M-parallel."""
    inv_n = 1.0 / count
    mean = stats_ref[0:1, :] * inv_n
    var = stats_ref[1:2, :] * inv_n - mean * mean
    scale = g_ref[...] * jax.lax.rsqrt(var + BN_EPS)
    shift = be_ref[...] - mean * scale
    y = y_ref[...] * scale + shift
    o_ref[...] = jnp.where(y >= 0, y, LRELU_SLOPE * y).astype(o_ref.dtype)


def _fc_sigmoid_kernel(x_ref, w_ref, b_ref, o_ref):
    y = jnp.dot(x_ref[...], w_ref[...], preferred_element_type=jnp.float32)
    o_ref[...] = jax.nn.sigmoid(y + b_ref[...])


# ----------------------------------------------------------------------------
# pallas_call wrappers
# ----------------------------------------------------------------------------
def conv_layer(patches, w, b, gamma=None, beta=None, *, use_bn):
    """patches: (M, Kp) bf16, w: (Kp, Cp) bf16, b/gamma/beta: (1, Cp) f32.
    Returns (M, Cp) bf16 post-activation."""
    M, Kp = patches.shape
    Cp = w.shape[1]
    tm = _pick_tile_m(M)
    tk = _pick_tile_k(Kp)
    grid = (M // tm, Kp // tk)

    p_spec = pl.BlockSpec((tm, tk), lambda i, k: (i, k))
    w_spec = pl.BlockSpec((tk, Cp), lambda i, k: (k, 0))   # weights stay resident in M
    c_spec = pl.BlockSpec((1, Cp), lambda i, k: (0, 0))    # grid-invariant bias

    if not use_bn:
        return pl.pallas_call(
            _conv_lrelu_kernel,
            out_shape=jax.ShapeDtypeStruct((M, Cp), jnp.bfloat16),
            grid=grid,
            in_specs=[p_spec, w_spec, c_spec],
            out_specs=pl.BlockSpec((tm, Cp), lambda i, k: (i, 0)),
            scratch_shapes=[pltpu.VMEM((tm, Cp), jnp.float32)],
            compiler_params=pltpu.CompilerParams(
                dimension_semantics=("parallel", "arbitrary"),
                vmem_limit_bytes=VMEM_LIMIT),
        )(patches, w, b)

    # Pass 1: matmul + bias + cross-tile sum / sum-of-squares accumulation.
    # The stats output block is resident across the whole grid, so both axes
    # are reductions ("arbitrary").
    y, stats = pl.pallas_call(
        _conv_stats_kernel,
        out_shape=(jax.ShapeDtypeStruct((M, Cp), jnp.float32),
                   jax.ShapeDtypeStruct((2, Cp), jnp.float32)),
        grid=grid,
        in_specs=[p_spec, w_spec, c_spec],
        out_specs=(pl.BlockSpec((tm, Cp), lambda i, k: (i, 0)),
                   pl.BlockSpec((2, Cp), lambda i, k: (0, 0))),
        scratch_shapes=[pltpu.VMEM((tm, Cp), jnp.float32)],
        compiler_params=pltpu.CompilerParams(
            dimension_semantics=("arbitrary", "arbitrary"),
            vmem_limit_bytes=VMEM_LIMIT),
    )(patches, w, b)

    # Pass 2: normalize + affine + LeakyReLU (M-parallel, megacore-friendly).
    return pl.pallas_call(
        functools.partial(_bn_lrelu_kernel, count=float(M)),
        out_shape=jax.ShapeDtypeStruct((M, Cp), jnp.bfloat16),
        grid=(M // tm,),
        in_specs=[pl.BlockSpec((tm, Cp), lambda i: (i, 0)),
                  pl.BlockSpec((2, Cp), lambda i: (0, 0)),
                  pl.BlockSpec((1, Cp), lambda i: (0, 0)),
                  pl.BlockSpec((1, Cp), lambda i: (0, 0))],
        out_specs=pl.BlockSpec((tm, Cp), lambda i: (i, 0)),
        compiler_params=pltpu.CompilerParams(
            dimension_semantics=("parallel",),
            vmem_limit_bytes=VMEM_LIMIT),
    )(y, stats, gamma, beta)


def fc_sigmoid(x, w, b):
    """x: (M, Kp) bf16, w: (Kp, 128) bf16 (output padded to 128 lanes)."""
    M, Kp = x.shape
    Cp = w.shape[1]
    tm = _pick_tile_m(M)
    return pl.pallas_call(
        _fc_sigmoid_kernel,
        out_shape=jax.ShapeDtypeStruct((M, Cp), jnp.float32),
        grid=(M // tm,),
        in_specs=[pl.BlockSpec((tm, Kp), lambda i: (i, 0)),
                  pl.BlockSpec((Kp, Cp), lambda i: (0, 0)),
                  pl.BlockSpec((1, Cp), lambda i: (0, 0))],
        out_specs=pl.BlockSpec((tm, Cp), lambda i: (i, 0)),
        compiler_params=pltpu.CompilerParams(
            dimension_semantics=("parallel",),
            vmem_limit_bytes=VMEM_LIMIT),
    )(x, w, b)


# ----------------------------------------------------------------------------
# Glue: NHWC im2col for 5x5 / stride 2 / pad 2
# ----------------------------------------------------------------------------
def im2col_5x5_s2_p2_nhwc(x):
    """x: (N, H, W, C) -> patches (N*Ho*Wo, 25*C), feature index (kh*5+kw)*C+c."""
    N, H, W, C = x.shape
    Ho, Wo = (H + 4 - 5) // 2 + 1, (W + 4 - 5) // 2 + 1
    xp = jnp.pad(x, ((0, 0), (2, 2), (2, 2), (0, 0)))
    cols = [xp[:, kh:kh + 2 * Ho:2, kw:kw + 2 * Wo:2, :]
            for kh in range(5) for kw in range(5)]
    patches = jnp.stack(cols, axis=3)                 # (N, Ho, Wo, 25, C)
    return patches.reshape(N * Ho * Wo, 25 * C), (N, Ho, Wo)


# ----------------------------------------------------------------------------
# Parameters (weights pre-reshaped / zero-padded to lane-dense K and C_out)
# ----------------------------------------------------------------------------
def init_params(key, featmap_dim, n_channel):
    c1, c2, c3 = featmap_dim // 4, featmap_dim // 2, featmap_dim
    s = 0.05
    ks = iter(jax.random.split(key, 16))

    def conv_params(cin, cout):
        kp = _round_up(cin * 25, 128)
        cp = _round_up(cout, 128)
        w = s * jax.random.normal(next(ks), (5, 5, cin, cout), jnp.float32)
        w = w.reshape(cin * 25, cout)                         # (kh*5+kw)*cin + ci
        w = jnp.pad(w, ((0, kp - cin * 25), (0, cp - cout))).astype(jnp.bfloat16)
        b = jnp.pad(s * jax.random.normal(next(ks), (1, cout), jnp.float32),
                    ((0, 0), (0, cp - cout)))
        return w, b, cp

    def bn_params(c, cp):
        g = 1.0 + s * jax.random.normal(next(ks), (1, c), jnp.float32)
        be = s * jax.random.normal(next(ks), (1, c), jnp.float32)
        return (jnp.pad(g, ((0, 0), (0, cp - c))),
                jnp.pad(be, ((0, 0), (0, cp - c))))

    w1, b1, cp1 = conv_params(n_channel, c1)
    w2, b2, cp2 = conv_params(c1, c2)
    w3, b3, cp3 = conv_params(c2, c3)
    g2, be2 = bn_params(c2, cp2)
    g3, be3 = bn_params(c3, cp3)

    kf = featmap_dim * 4 * 4
    kf_pad = _round_up(kf, 128)
    wf = s * jax.random.normal(next(ks), (kf, 1), jnp.float32)
    wf = jnp.pad(wf, ((0, kf_pad - kf), (0, 127))).astype(jnp.bfloat16)
    bf = jnp.pad(s * jax.random.normal(next(ks), (1, 1), jnp.float32),
                 ((0, 0), (0, 127)))

    return dict(w1=w1, b1=b1, w2=w2, b2=b2, g2=g2, be2=be2,
                w3=w3, b3=b3, g3=g3, be3=be3, wf=wf, bf=bf)


# ----------------------------------------------------------------------------
# Forward pass
# ----------------------------------------------------------------------------
def dcgan_discriminator_forward(params, x, featmap_dim):
    c1, c2, c3 = featmap_dim // 4, featmap_dim // 2, featmap_dim
    n, cin0 = x.shape[0], x.shape[1]

    # NCHW -> NHWC (lane-dense channel axis); bf16 operands halve HBM traffic.
    h = jnp.transpose(x, (0, 2, 3, 1)).astype(jnp.bfloat16)

    def conv_block(h, cin, w, b, gamma=None, beta=None, *, use_bn):
        # TODO(synk): im2col still materializes the 25x patch matrix in HBM;
        # a fully fused version would assemble patches in-kernel from a
        # haloed spatial tile DMA.
        patches, (nn_, ho, wo) = im2col_5x5_s2_p2_nhwc(h[..., :cin])
        patches = _pad_last(patches, w.shape[0])
        y = conv_layer(patches, w, b, gamma, beta, use_bn=use_bn)
        return y.reshape(nn_, ho, wo, -1)

    h = conv_block(h, cin0, params["w1"], params["b1"], use_bn=False)
    h = conv_block(h, c1, params["w2"], params["b2"],
                   params["g2"], params["be2"], use_bn=True)
    h = conv_block(h, c2, params["w3"], params["b3"],
                   params["g3"], params["be3"], use_bn=True)

    # x.view(-1, featmap_dim*4*4): NCHW-contiguous flatten of the real (un-
    # padded) channels, then zero-pad features for a lane-dense fc matmul.
    h = jnp.transpose(h[..., :c3], (0, 3, 1, 2)).reshape(n, featmap_dim * 4 * 4)
    h = _pad_last(h, params["wf"].shape[0]).astype(jnp.bfloat16)

    out = fc_sigmoid(h, params["wf"], params["bf"])   # (n, 128) padded output
    return out[:, :1]


if __name__ == "__main__":
    # Small shapes consistent with the module: the fc layer requires the
    # spatial size to reach 4x4 after three stride-2 convs -> input 32x32.
    featmap_dim = 32   # scaled-down stand-in for 512
    n_channel = 1
    batch = 2

    key = jax.random.PRNGKey(0)
    kx, kp = jax.random.split(key)
    x = jax.random.normal(kx, (batch, n_channel, 32, 32), dtype=jnp.float32)
    params = init_params(kp, featmap_dim, n_channel)

    fwd = jax.jit(functools.partial(dcgan_discriminator_forward,
                                    featmap_dim=featmap_dim))
    out = jax.block_until_ready(fwd(params, x))
    assert out.shape == (batch, 1), out.shape
    assert bool(jnp.all((out >= 0.0) & (out <= 1.0)))
    print("KERNEL_OK")
</pallas_src>

<mosaic_0001>
module attributes {stable_mosaic.version = 11 : i64} {
  func.func @_conv_lrelu_kernel(%arg0: i32, %arg1: i32, %arg2: memref<256x128xbf16, #tpu.memory_space<vmem>>, %arg3: memref<128x128xbf16, #tpu.memory_space<vmem>>, %arg4: memref<1x128xf32, #tpu.memory_space<vmem>>, %arg5: memref<256x128xbf16, #tpu.memory_space<vmem>>, %arg6: memref<256x128xf32, #tpu.memory_space<vmem>>) attributes {dimension_semantics = [#tpu.dimension_semantics<parallel>, #tpu.dimension_semantics<arbitrary>], iteration_bounds = array<i64: 2, 1>, scalar_prefetch = 0 : i64, scratch_operands = 1 : i64, tpu.core_type = #tpu.core_type<tc>, window_params = [{transform_indices = @transform_0, window_bounds = array<i64: 256, 128>}, {transform_indices = @transform_1, window_bounds = array<i64: 128, 128>}, {pipeline_mode = #tpu.pipeline_mode<synchronous>, transform_indices = @transform_2, window_bounds = array<i64: 1, 128>}, {transform_indices = @transform_3, window_bounds = array<i64: 256, 128>}]} {
    %c0_i32 = arith.constant 0 : i32
    %0 = arith.cmpi eq, %arg1, %c0_i32 : i32
    %1 = arith.extui %0 : i1 to i32
    %c0_i32_0 = arith.constant 0 : i32
    %2 = arith.cmpi ne, %1, %c0_i32_0 : i32
    scf.if %2 {
      %cst_10 = arith.constant 0.000000e+00 : f32
      %12 = vector.broadcast %cst_10 : f32 to vector<256x128xf32>
      %c0_11 = arith.constant 0 : index
      %c0_12 = arith.constant 0 : index
      %13 = vector.load %arg6[%c0_11, %c0_12] : memref<256x128xf32, #tpu.memory_space<vmem>>, vector<256x128xf32>
      tpu.vector_store %arg6[%c0_11, %c0_12], %12 {strides = array<i32>} : memref<256x128xf32, #tpu.memory_space<vmem>>, vector<256x128xf32>,
    } else {
    }
    %c0 = arith.constant 0 : index
    %c0_1 = arith.constant 0 : index
    %3 = vector.load %arg6[%c0, %c0_1] : memref<256x128xf32, #tpu.memory_space<vmem>>, vector<256x128xf32>
    %c0_2 = arith.constant 0 : index
    %c0_3 = arith.constant 0 : index
    %4 = vector.load %arg2[%c0_2, %c0_3] : memref<256x128xbf16, #tpu.memory_space<vmem>>, vector<256x128xbf16>
    %c0_4 = arith.constant 0 : index
    %c0_5 = arith.constant 0 : index
    %5 = vector.load %arg3[%c0_4, %c0_5] : memref<128x128xbf16, #tpu.memory_space<vmem>>, vector<128x128xbf16>
    %cst = arith.constant dense<0.000000e+00> : vector<256x128xf32>
    %6 = tpu.matmul %4, %5, %cst {dimension_numbers = #tpu.dot_dimension_numbers<[1], [0], [0], [1], [0, 0, 1, 1], [], []>} : vector<256x128xbf16>, vector<128x128xbf16>, vector<256x128xf32> -> vector<256x128xf32>
    %7 = arith.addf %3, %6 : vector<256x128xf32>
    %c0_6 = arith.constant 0 : index
    %c0_7 = arith.constant 0 : index
    %8 = vector.load %arg6[%c0_6, %c0_7] : memref<256x128xf32, #tpu.memory_space<vmem>>, vector<256x128xf32>
    tpu.vector_store %arg6[%c0_6, %c0_7], %7 {strides = array<i32>} : memref<256x128xf32, #tpu.memory_space<vmem>>, vector<256x128xf32>,
    %c0_i32_8 = arith.constant 0 : i32
    %9 = arith.cmpi eq, %arg1, %c0_i32_8 : i32
    %10 = arith.extui %9 : i1 to i32
    %c0_i32_9 = arith.constant 0 : i32
    %11 = arith.cmpi ne, %10, %c0_i32_9 : i32
    scf.if %11 {
      %c0_10 = arith.constant 0 : index
      %c0_11 = arith.constant 0 : index
      %12 = vector.load %arg6[%c0_10, %c0_11] : memref<256x128xf32, #tpu.memory_space<vmem>>, vector<256x128xf32>
      %c0_12 = arith.constant 0 : index
      %c0_13 = arith.constant 0 : index
      %13 = vector.load %arg4[%c0_12, %c0_13] : memref<1x128xf32, #tpu.memory_space<vmem>>, vector<1x128xf32>
      %14 = vector.broadcast %13 : vector<1x128xf32> to vector<256x128xf32>
      %15 = arith.addf %12, %14 : vector<256x128xf32>
      %cst_14 = arith.constant 0.000000e+00 : f32
      %16 = vector.broadcast %cst_14 : f32 to vector<256x128xf32>
      %17 = arith.cmpf oge, %15, %16 : vector<256x128xf32>
      %cst_15 = arith.constant 2.000000e-01 : f32
      %18 = vector.broadcast %cst_15 : f32 to vector<256x128xf32>
      %19 = arith.mulf %18, %15 : vector<256x128xf32>
      %20 = arith.select %17, %15, %19 : vector<256x128xi1>, vector<256x128xf32>
      %21 = arith.truncf %20 : vector<256x128xf32> to vector<256x128xbf16>
      %c0_16 = arith.constant 0 : index
      %c0_17 = arith.constant 0 : index
      %22 = vector.load %arg5[%c0_16, %c0_17] : memref<256x128xbf16, #tpu.memory_space<vmem>>, vector<256x128xbf16>
      tpu.vector_store %arg5[%c0_16, %c0_17], %21 {strides = array<i32>} : memref<256x128xbf16, #tpu.memory_space<vmem>>, vector<256x128xbf16>,
    } else {
    }
    return
  }
  func.func @transform_0(%arg0: i32, %arg1: i32) -> (i32, i32) {
    %c0_i32 = arith.constant 0 : i32
    return %arg0, %arg1 : i32, i32
  }
  func.func @transform_1(%arg0: i32, %arg1: i32) -> (i32, i32) {
    %c0_i32 = arith.constant 0 : i32
    %c0_i32_0 = arith.constant 0 : i32
    return %arg1, %c0_i32 : i32, i32
  }
  func.func @transform_2(%arg0: i32, %arg1: i32) -> (i32, i32) {
    %c0_i32 = arith.constant 0 : i32
    %c0_i32_0 = arith.constant 0 : i32
    %c0_i32_1 = arith.constant 0 : i32
    return %c0_i32, %c0_i32_0 : i32, i32
  }
  func.func @transform_3(%arg0: i32, %arg1: i32) -> (i32, i32) {
    %c0_i32 = arith.constant 0 : i32
    %c0_i32_0 = arith.constant 0 : i32
    return %arg0, %c0_i32 : i32, i32
  }
}

module attributes {stable_mosaic.version = 11 : i64} {
  func.func @_conv_stats_kernel(%arg0: i32, %arg1: i32, %arg2: memref<128x256xbf16, #tpu.memory_space<vmem>>, %arg3: memref<256x128xbf16, #tpu.memory_space<vmem>>, %arg4: memref<1x128xf32, #tpu.memory_space<vmem>>, %arg5: memref<128x128xf32, #tpu.memory_space<vmem>>, %arg6: memref<2x128xf32, #tpu.memory_space<vmem>>, %arg7: memref<128x128xf32, #tpu.memory_space<vmem>>) attributes {dimension_semantics = [#tpu.dimension_semantics<arbitrary>, #tpu.dimension_semantics<arbitrary>], iteration_bounds = array<i64: 1, 1>, scalar_prefetch = 0 : i64, scratch_operands = 1 : i64, tpu.core_type = #tpu.core_type<tc>, window_params = [{transform_indices = @transform_0, window_bounds = array<i64: 128, 256>}, {transform_indices = @transform_1, window_bounds = array<i64: 256, 128>}, {pipeline_mode = #tpu.pipeline_mode<synchronous>, transform_indices = @transform_2, window_bounds = array<i64: 1, 128>}, {transform_indices = @transform_3, window_bounds = array<i64: 128, 128>}, {pipeline_mode = #tpu.pipeline_mode<synchronous>, transform_indices = @transform_4, window_bounds = array<i64: 2, 128>}]} {
    %c0_i32 = arith.constant 0 : i32
    %0 = arith.cmpi eq, %arg0, %c0_i32 : i32
    %c0_i32_0 = arith.constant 0 : i32
    %1 = arith.cmpi eq, %arg1, %c0_i32_0 : i32
    %2 = arith.andi %0, %1 : i1
    %3 = arith.extui %2 : i1 to i32
    %c0_i32_1 = arith.constant 0 : i32
    %4 = arith.cmpi ne, %3, %c0_i32_1 : i32
    scf.if %4 {
      %cst_13 = arith.constant 0.000000e+00 : f32
      %17 = vector.broadcast %cst_13 : f32 to vector<2x128xf32>
      %c0_14 = arith.constant 0 : index
      %c0_15 = arith.constant 0 : index
      %18 = vector.load %arg6[%c0_14, %c0_15] : memref<2x128xf32, #tpu.memory_space<vmem>>, vector<2x128xf32>
      tpu.vector_store %arg6[%c0_14, %c0_15], %17 {strides = array<i32>} : memref<2x128xf32, #tpu.memory_space<vmem>>, vector<2x128xf32>,
    } else {
    }
    %c0_i32_2 = arith.constant 0 : i32
    %5 = arith.cmpi eq, %arg1, %c0_i32_2 : i32
    %6 = arith.extui %5 : i1 to i32
    %c0_i32_3 = arith.constant 0 : i32
    %7 = arith.cmpi ne, %6, %c0_i32_3 : i32
    scf.if %7 {
      %cst_13 = arith.constant 0.000000e+00 : f32
      %17 = vector.broadcast %cst_13 : f32 to vector<128x128xf32>
      %c0_14 = arith.constant 0 : index
      %c0_15 = arith.constant 0 : index
      %18 = vector.load %arg7[%c0_14, %c0_15] : memref<128x128xf32, #tpu.memory_space<vmem>>, vector<128x128xf32>
      tpu.vector_store %arg7[%c0_14, %c0_15], %17 {strides = array<i32>} : memref<128x128xf32, #tpu.memory_space<vmem>>, vector<128x128xf32>,
    } else {
    }
    %c0 = arith.constant 0 : index
    %c0_4 = arith.constant 0 : index
    %8 = vector.load %arg7[%c0, %c0_4] : memref<128x128xf32, #tpu.memory_space<vmem>>, vector<128x128xf32>
    %c0_5 = arith.constant 0 : index
    %c0_6 = arith.constant 0 : index
    %9 = vector.load %arg2[%c0_5, %c0_6] : memref<128x256xbf16, #tpu.memory_space<vmem>>, vector<128x256xbf16>
    %c0_7 = arith.constant 0 : index
    %c0_8 = arith.constant 0 : index
    %10 = vector.load %arg3[%c0_7, %c0_8] : memref<256x128xbf16, #tpu.memory_space<vmem>>, vector<256x128xbf16>
    %cst = arith.constant dense<0.000000e+00> : vector<128x128xf32>
    %11 = tpu.matmul %9, %10, %cst {dimension_numbers = #tpu.dot_dimension_numbers<[1], [0], [0], [1], [0, 0, 1, 1], [], []>} : vector<128x256xbf16>, vector<256x128xbf16>, vector<128x128xf32> -> vector<128x128xf32>
    %12 = arith.addf %8, %11 : vector<128x128xf32>
    %c0_9 = arith.constant 0 : index
    %c0_10 = arith.constant 0 : index
    %13 = vector.load %arg7[%c0_9, %c0_10] : memref<128x128xf32, #tpu.memory_space<vmem>>, vector<128x128xf32>
    tpu.vector_store %arg7[%c0_9, %c0_10], %12 {strides = array<i32>} : memref<128x128xf32, #tpu.memory_space<vmem>>, vector<128x128xf32>,
    %c0_i32_11 = arith.constant 0 : i32
    %14 = arith.cmpi eq, %arg1, %c0_i32_11 : i32
    %15 = arith.extui %14 : i1 to i32
    %c0_i32_12 = arith.constant 0 : i32
    %16 = arith.cmpi ne, %15, %c0_i32_12 : i32
    scf.if %16 {
      %c0_13 = arith.constant 0 : index
      %c0_14 = arith.constant 0 : index
      %17 = vector.load %arg7[%c0_13, %c0_14] : memref<128x128xf32, #tpu.memory_space<vmem>>, vector<128x128xf32>
      %c0_15 = arith.constant 0 : index
      %c0_16 = arith.constant 0 : index
      %18 = vector.load %arg4[%c0_15, %c0_16] : memref<1x128xf32, #tpu.memory_space<vmem>>, vector<1x128xf32>
      %19 = vector.broadcast %18 : vector<1x128xf32> to vector<128x128xf32>
      %20 = arith.addf %17, %19 : vector<128x128xf32>
      %c0_17 = arith.constant 0 : index
      %c0_18 = arith.constant 0 : index
      %21 = vector.load %arg5[%c0_17, %c0_18] : memref<128x128xf32, #tpu.memory_space<vmem>>, vector<128x128xf32>
      tpu.vector_store %arg5[%c0_17, %c0_18], %20 {strides = array<i32>} : memref<128x128xf32, #tpu.memory_space<vmem>>, vector<128x128xf32>,
      %cst_19 = arith.constant dense<0.000000e+00> : vector<128xf32>
      %22 = vector.multi_reduction <add>, %20, %cst_19 [0] : vector<128x128xf32> to vector<128xf32>
      %23 = vector.shape_cast %22 : vector<128xf32> to vector<1x128xf32>
      %24 = arith.mulf %20, %20 : vector<128x128xf32>
      %cst_20 = arith.constant dense<0.000000e+00> : vector<128xf32>
      %25 = vector.multi_reduction <add>, %24, %cst_20 [0] : vector<128x128xf32> to vector<128xf32>
      %26 = vector.shape_cast %25 : vector<128xf32> to vector<1x128xf32>
      %c0_21 = arith.constant 0 : index
      %c0_22 = arith.constant 0 : index
      %27 = vector.load %arg6[%c0_21, %c0_22] : memref<2x128xf32, #tpu.memory_space<vmem>>, vector<2x128xf32>
      %28 = tpu.concatenate %23, %26 in 0 : vector<1x128xf32>, vector<1x128xf32> -> vector<2x128xf32>
      %29 = arith.addf %27, %28 : vector<2x128xf32>
      %c0_23 = arith.constant 0 : index
      %c0_24 = arith.constant 0 : index
      %30 = vector.load %arg6[%c0_23, %c0_24] : memref<2x128xf32, #tpu.memory_space<vmem>>, vector<2x128xf32>
      tpu.vector_store %arg6[%c0_23, %c0_24], %29 {strides = array<i32>} : memref<2x128xf32, #tpu.memory_space<vmem>>, vector<2x128xf32>,
    } else {
    }
    return
  }
  func.func @transform_0(%arg0: i32, %arg1: i32) -> (i32, i32) {
    %c0_i32 = arith.constant 0 : i32
    return %arg0, %arg1 : i32, i32
  }
  func.func @transform_1(%arg0: i32, %arg1: i32) -> (i32, i32) {
    %c0_i32 = arith.constant 0 : i32
    %c0_i32_0 = arith.constant 0 : i32
    return %arg1, %c0_i32 : i32, i32
  }
  func.func @transform_2(%arg0: i32, %arg1: i32) -> (i32, i32) {
    %c0_i32 = arith.constant 0 : i32
    %c0_i32_0 = arith.constant 0 : i32
    %c0_i32_1 = arith.constant 0 : i32
    return %c0_i32, %c0_i32_0 : i32, i32
  }
  func.func @transform_3(%arg0: i32, %arg1: i32) -> (i32, i32) {
    %c0_i32 = arith.constant 0 : i32
    %c0_i32_0 = arith.constant 0 : i32
    return %arg0, %c0_i32 : i32, i32
  }
  func.func @transform_4(%arg0: i32, %arg1: i32) -> (i32, i32) {
    %c0_i32 = arith.constant 0 : i32
    %c0_i32_0 = arith.constant 0 : i32
    %c0_i32_1 = arith.constant 0 : i32
    return %c0_i32, %c0_i32_0 : i32, i32
  }
}

module attributes {stable_mosaic.version = 11 : i64} {
  func.func @_bn_lrelu_kernel(%arg0: i32, %arg1: memref<128x128xf32, #tpu.memory_space<vmem>>, %arg2: memref<2x128xf32, #tpu.memory_space<vmem>>, %arg3: memref<1x128xf32, #tpu.memory_space<vmem>>, %arg4: memref<1x128xf32, #tpu.memory_space<vmem>>, %arg5: memref<128x128xbf16, #tpu.memory_space<vmem>>) attributes {dimension_semantics = [#tpu.dimension_semantics<parallel>], iteration_bounds = array<i64: 1>, scalar_prefetch = 0 : i64, scratch_operands = 0 : i64, tpu.core_type = #tpu.core_type<tc>, window_params = [{transform_indices = @transform_0, window_bounds = array<i64: 128, 128>}, {pipeline_mode = #tpu.pipeline_mode<synchronous>, transform_indices = @transform_1, window_bounds = array<i64: 2, 128>}, {pipeline_mode = #tpu.pipeline_mode<synchronous>, transform_indices = @transform_2, window_bounds = array<i64: 1, 128>}, {pipeline_mode = #tpu.pipeline_mode<synchronous>, transform_indices = @transform_3, window_bounds = array<i64: 1, 128>}, {transform_indices = @transform_4, window_bounds = array<i64: 128, 128>}]} {
    %c0 = arith.constant 0 : index
    %c0_0 = arith.constant 0 : index
    %0 = vector.load %arg2[%c0, %c0_0] : memref<2x128xf32, #tpu.memory_space<vmem>>, vector<1x128xf32>
    %cst = arith.constant 7.812500e-03 : f32
    %1 = vector.broadcast %cst : f32 to vector<1x128xf32>
    %2 = arith.mulf %0, %1 : vector<1x128xf32>
    %c1 = arith.constant 1 : index
    %c0_1 = arith.constant 0 : index
    %3 = vector.load %arg2[%c1, %c0_1] : memref<2x128xf32, #tpu.memory_space<vmem>>, vector<1x128xf32>
    %cst_2 = arith.constant 7.812500e-03 : f32
    %4 = vector.broadcast %cst_2 : f32 to vector<1x128xf32>
    %5 = arith.mulf %3, %4 : vector<1x128xf32>
    %6 = arith.mulf %2, %2 : vector<1x128xf32>
    %7 = arith.subf %5, %6 : vector<1x128xf32>
    %c0_3 = arith.constant 0 : index
    %c0_4 = arith.constant 0 : index
    %8 = vector.load %arg3[%c0_3, %c0_4] : memref<1x128xf32, #tpu.memory_space<vmem>>, vector<1x128xf32>
    %cst_5 = arith.constant 9.99999974E-6 : f32
    %9 = vector.broadcast %cst_5 : f32 to vector<1x128xf32>
    %10 = arith.addf %7, %9 : vector<1x128xf32>
    %11 = math.rsqrt %10 : vector<1x128xf32>
    %12 = arith.mulf %8, %11 : vector<1x128xf32>
    %c0_6 = arith.constant 0 : index
    %c0_7 = arith.constant 0 : index
    %13 = vector.load %arg4[%c0_6, %c0_7] : memref<1x128xf32, #tpu.memory_space<vmem>>, vector<1x128xf32>
    %14 = arith.mulf %2, %12 : vector<1x128xf32>
    %15 = arith.subf %13, %14 : vector<1x128xf32>
    %c0_8 = arith.constant 0 : index
    %c0_9 = arith.constant 0 : index
    %16 = vector.load %arg1[%c0_8, %c0_9] : memref<128x128xf32, #tpu.memory_space<vmem>>, vector<128x128xf32>
    %17 = vector.broadcast %12 : vector<1x128xf32> to vector<128x128xf32>
    %18 = arith.mulf %16, %17 : vector<128x128xf32>
    %19 = vector.broadcast %15 : vector<1x128xf32> to vector<128x128xf32>
    %20 = arith.addf %18, %19 : vector<128x128xf32>
    %cst_10 = arith.constant 0.000000e+00 : f32
    %21 = vector.broadcast %cst_10 : f32 to vector<128x128xf32>
    %22 = arith.cmpf oge, %20, %21 : vector<128x128xf32>
    %cst_11 = arith.constant 2.000000e-01 : f32
    %23 = vector.broadcast %cst_11 : f32 to vector<128x128xf32>
    %24 = arith.mulf %23, %20 : vector<128x128xf32>
    %25 = arith.select %22, %20, %24 : vector<128x128xi1>, vector<128x128xf32>
    %26 = arith.truncf %25 : vector<128x128xf32> to vector<128x128xbf16>
    %c0_12 = arith.constant 0 : index
    %c0_13 = arith.constant 0 : index
    %27 = vector.load %arg5[%c0_12, %c0_13] : memref<128x128xbf16, #tpu.memory_space<vmem>>, vector<128x128xbf16>
    tpu.vector_store %arg5[%c0_12, %c0_13], %26 {strides = array<i32>} : memref<128x128xbf16, #tpu.memory_space<vmem>>, vector<128x128xbf16>,
    return
  }
  func.func @transform_0(%arg0: i32) -> (i32, i32) {
    %c0_i32 = arith.constant 0 : i32
    %c0_i32_0 = arith.constant 0 : i32
    return %arg0, %c0_i32 : i32, i32
  }
  func.func @transform_1(%arg0: i32) -> (i32, i32) {
    %c0_i32 = arith.constant 0 : i32
    %c0_i32_0 = arith.constant 0 : i32
    %c0_i32_1 = arith.constant 0 : i32
    return %c0_i32, %c0_i32_0 : i32, i32
  }
  func.func @transform_2(%arg0: i32) -> (i32, i32) {
    %c0_i32 = arith.constant 0 : i32
    %c0_i32_0 = arith.constant 0 : i32
    %c0_i32_1 = arith.constant 0 : i32
    return %c0_i32, %c0_i32_0 : i32, i32
  }
  func.func @transform_3(%arg0: i32) -> (i32, i32) {
    %c0_i32 = arith.constant 0 : i32
    %c0_i32_0 = arith.constant 0 : i32
    %c0_i32_1 = arith.constant 0 : i32
    return %c0_i32, %c0_i32_0 : i32, i32
  }
  func.func @transform_4(%arg0: i32) -> (i32, i32) {
    %c0_i32 = arith.constant 0 : i32
    %c0_i32_0 = arith.constant 0 : i32
    return %arg0, %c0_i32 : i32, i32
  }
}

module attributes {stable_mosaic.version = 11 : i64} {
  func.func @_conv_stats_kernel(%arg0: i32, %arg1: i32, %arg2: memref<32x512xbf16, #tpu.memory_space<vmem>>, %arg3: memref<512x128xbf16, #tpu.memory_space<vmem>>, %arg4: memref<1x128xf32, #tpu.memory_space<vmem>>, %arg5: memref<32x128xf32, #tpu.memory_space<vmem>>, %arg6: memref<2x128xf32, #tpu.memory_space<vmem>>, %arg7: memref<32x128xf32, #tpu.memory_space<vmem>>) attributes {dimension_semantics = [#tpu.dimension_semantics<arbitrary>, #tpu.dimension_semantics<arbitrary>], iteration_bounds = array<i64: 1, 1>, scalar_prefetch = 0 : i64, scratch_operands = 1 : i64, tpu.core_type = #tpu.core_type<tc>, window_params = [{transform_indices = @transform_0, window_bounds = array<i64: 32, 512>}, {transform_indices = @transform_1, window_bounds = array<i64: 512, 128>}, {pipeline_mode = #tpu.pipeline_mode<synchronous>, transform_indices = @transform_2, window_bounds = array<i64: 1, 128>}, {transform_indices = @transform_3, window_bounds = array<i64: 32, 128>}, {pipeline_mode = #tpu.pipeline_mode<synchronous>, transform_indices = @transform_4, window_bounds = array<i64: 2, 128>}]} {
    %c0_i32 = arith.constant 0 : i32
    %0 = arith.cmpi eq, %arg0, %c0_i32 : i32
    %c0_i32_0 = arith.constant 0 : i32
    %1 = arith.cmpi eq, %arg1, %c0_i32_0 : i32
    %2 = arith.andi %0, %1 : i1
    %3 = arith.extui %2 : i1 to i32
    %c0_i32_1 = arith.constant 0 : i32
    %4 = arith.cmpi ne, %3, %c0_i32_1 : i32
    scf.if %4 {
      %cst_13 = arith.constant 0.000000e+00 : f32
      %17 = vector.broadcast %cst_13 : f32 to vector<2x128xf32>
      %c0_14 = arith.constant 0 : index
      %c0_15 = arith.constant 0 : index
      %18 = vector.load %arg6[%c0_14, %c0_15] : memref<2x128xf32, #tpu.memory_space<vmem>>, vector<2x128xf32>
      tpu.vector_store %arg6[%c0_14, %c0_15], %17 {strides = array<i32>} : memref<2x128xf32, #tpu.memory_space<vmem>>, vector<2x128xf32>,
    } else {
    }
    %c0_i32_2 = arith.constant 0 : i32
    %5 = arith.cmpi eq, %arg1, %c0_i32_2 : i32
    %6 = arith.extui %5 : i1 to i32
    %c0_i32_3 = arith.constant 0 : i32
    %7 = arith.cmpi ne, %6, %c0_i32_3 : i32
    scf.if %7 {
      %cst_13 = arith.constant 0.000000e+00 : f32
      %17 = vector.broadcast %cst_13 : f32 to vector<32x128xf32>
      %c0_14 = arith.constant 0 : index
      %c0_15 = arith.constant 0 : index
      %18 = vector.load %arg7[%c0_14, %c0_15] : memref<32x128xf32, #tpu.memory_space<vmem>>, vector<32x128xf32>
      tpu.vector_store %arg7[%c0_14, %c0_15], %17 {strides = array<i32>} : memref<32x128xf32, #tpu.memory_space<vmem>>, vector<32x128xf32>,
    } else {
    }
    %c0 = arith.constant 0 : index
    %c0_4 = arith.constant 0 : index
    %8 = vector.load %arg7[%c0, %c0_4] : memref<32x128xf32, #tpu.memory_space<vmem>>, vector<32x128xf32>
    %c0_5 = arith.constant 0 : index
    %c0_6 = arith.constant 0 : index
    %9 = vector.load %arg2[%c0_5, %c0_6] : memref<32x512xbf16, #tpu.memory_space<vmem>>, vector<32x512xbf16>
    %c0_7 = arith.constant 0 : index
    %c0_8 = arith.constant 0 : index
    %10 = vector.load %arg3[%c0_7, %c0_8] : memref<512x128xbf16, #tpu.memory_space<vmem>>, vector<512x128xbf16>
    %cst = arith.constant dense<0.000000e+00> : vector<32x128xf32>
    %11 = tpu.matmul %9, %10, %cst {dimension_numbers = #tpu.dot_dimension_numbers<[1], [0], [0], [1], [0, 0, 1, 1], [], []>} : vector<32x512xbf16>, vector<512x128xbf16>, vector<32x128xf32> -> vector<32x128xf32>
    %12 = arith.addf %8, %11 : vector<32x128xf32>
    %c0_9 = arith.constant 0 : index
    %c0_10 = arith.constant 0 : index
    %13 = vector.load %arg7[%c0_9, %c0_10] : memref<32x128xf32, #tpu.memory_space<vmem>>, vector<32x128xf32>
    tpu.vector_store %arg7[%c0_9, %c0_10], %12 {strides = array<i32>} : memref<32x128xf32, #tpu.memory_space<vmem>>, vector<32x128xf32>,
    %c0_i32_11 = arith.constant 0 : i32
    %14 = arith.cmpi eq, %arg1, %c0_i32_11 : i32
    %15 = arith.extui %14 : i1 to i32
    %c0_i32_12 = arith.constant 0 : i32
    %16 = arith.cmpi ne, %15, %c0_i32_12 : i32
    scf.if %16 {
      %c0_13 = arith.constant 0 : index
      %c0_14 = arith.constant 0 : index
      %17 = vector.load %arg7[%c0_13, %c0_14] : memref<32x128xf32, #tpu.memory_space<vmem>>, vector<32x128xf32>
      %c0_15 = arith.constant 0 : index
      %c0_16 = arith.constant 0 : index
      %18 = vector.load %arg4[%c0_15, %c0_16] : memref<1x128xf32, #tpu.memory_space<vmem>>, vector<1x128xf32>
      %19 = vector.broadcast %18 : vector<1x128xf32> to vector<32x128xf32>
      %20 = arith.addf %17, %19 : vector<32x128xf32>
      %c0_17 = arith.constant 0 : index
      %c0_18 = arith.constant 0 : index
      %21 = vector.load %arg5[%c0_17, %c0_18] : memref<32x128xf32, #tpu.memory_space<vmem>>, vector<32x128xf32>
      tpu.vector_store %arg5[%c0_17, %c0_18], %20 {strides = array<i32>} : memref<32x128xf32, #tpu.memory_space<vmem>>, vector<32x128xf32>,
      %cst_19 = arith.constant dense<0.000000e+00> : vector<128xf32>
      %22 = vector.multi_reduction <add>, %20, %cst_19 [0] : vector<32x128xf32> to vector<128xf32>
      %23 = vector.shape_cast %22 : vector<128xf32> to vector<1x128xf32>
      %24 = arith.mulf %20, %20 : vector<32x128xf32>
      %cst_20 = arith.constant dense<0.000000e+00> : vector<128xf32>
      %25 = vector.multi_reduction <add>, %24, %cst_20 [0] : vector<32x128xf32> to vector<128xf32>
      %26 = vector.shape_cast %25 : vector<128xf32> to vector<1x128xf32>
      %c0_21 = arith.constant 0 : index
      %c0_22 = arith.constant 0 : index
      %27 = vector.load %arg6[%c0_21, %c0_22] : memref<2x128xf32, #tpu.memory_space<vmem>>, vector<2x128xf32>
      %28 = tpu.concatenate %23, %26 in 0 : vector<1x128xf32>, vector<1x128xf32> -> vector<2x128xf32>
      %29 = arith.addf %27, %28 : vector<2x128xf32>
      %c0_23 = arith.constant 0 : index
      %c0_24 = arith.constant 0 : index
      %30 = vector.load %arg6[%c0_23, %c0_24] : memref<2x128xf32, #tpu.memory_space<vmem>>, vector<2x128xf32>
      tpu.vector_store %arg6[%c0_23, %c0_24], %29 {strides = array<i32>} : memref<2x128xf32, #tpu.memory_space<vmem>>, vector<2x128xf32>,
    } else {
    }
    return
  }
  func.func @transform_0(%arg0: i32, %arg1: i32) -> (i32, i32) {
    %c0_i32 = arith.constant 0 : i32
    return %arg0, %arg1 : i32, i32
  }
  func.func @transform_1(%arg0: i32, %arg1: i32) -> (i32, i32) {
    %c0_i32 = arith.constant 0 : i32
    %c0_i32_0 = arith.constant 0 : i32
    return %arg1, %c0_i32 : i32, i32
  }
  func.func @transform_2(%arg0: i32, %arg1: i32) -> (i32, i32) {
    %c0_i32 = arith.constant 0 : i32
    %c0_i32_0 = arith.constant 0 : i32
    %c0_i32_1 = arith.constant 0 : i32
    return %c0_i32, %c0_i32_0 : i32, i32
  }
  func.func @transform_3(%arg0: i32, %arg1: i32) -> (i32, i32) {
    %c0_i32 = arith.constant 0 : i32
    %c0_i32_0 = arith.constant 0 : i32
    return %arg0, %c0_i32 : i32, i32
  }
  func.func @transform_4(%arg0: i32, %arg1: i32) -> (i32, i32) {
    %c0_i32 = arith.constant 0 : i32
    %c0_i32_0 = arith.constant 0 : i32
    %c0_i32_1 = arith.constant 0 : i32
    return %c0_i32, %c0_i32_0 : i32, i32
  }
}

module attributes {stable_mosaic.version = 11 : i64} {
  func.func @_bn_lrelu_kernel(%arg0: i32, %arg1: memref<32x128xf32, #tpu.memory_space<vmem>>, %arg2: memref<2x128xf32, #tpu.memory_space<vmem>>, %arg3: memref<1x128xf32, #tpu.memory_space<vmem>>, %arg4: memref<1x128xf32, #tpu.memory_space<vmem>>, %arg5: memref<32x128xbf16, #tpu.memory_space<vmem>>) attributes {dimension_semantics = [#tpu.dimension_semantics<parallel>], iteration_bounds = array<i64: 1>, scalar_prefetch = 0 : i64, scratch_operands = 0 : i64, tpu.core_type = #tpu.core_type<tc>, window_params = [{transform_indices = @transform_0, window_bounds = array<i64: 32, 128>}, {pipeline_mode = #tpu.pipeline_mode<synchronous>, transform_indices = @transform_1, window_bounds = array<i64: 2, 128>}, {pipeline_mode = #tpu.pipeline_mode<synchronous>, transform_indices = @transform_2, window_bounds = array<i64: 1, 128>}, {pipeline_mode = #tpu.pipeline_mode<synchronous>, transform_indices = @transform_3, window_bounds = array<i64: 1, 128>}, {transform_indices = @transform_4, window_bounds = array<i64: 32, 128>}]} {
    %c0 = arith.constant 0 : index
    %c0_0 = arith.constant 0 : index
    %0 = vector.load %arg2[%c0, %c0_0] : memref<2x128xf32, #tpu.memory_space<vmem>>, vector<1x128xf32>
    %cst = arith.constant 3.125000e-02 : f32
    %1 = vector.broadcast %cst : f32 to vector<1x128xf32>
    %2 = arith.mulf %0, %1 : vector<1x128xf32>
    %c1 = arith.constant 1 : index
    %c0_1 = arith.constant 0 : index
    %3 = vector.load %arg2[%c1, %c0_1] : memref<2x128xf32, #tpu.memory_space<vmem>>, vector<1x128xf32>
    %cst_2 = arith.constant 3.125000e-02 : f32
    %4 = vector.broadcast %cst_2 : f32 to vector<1x128xf32>
    %5 = arith.mulf %3, %4 : vector<1x128xf32>
    %6 = arith.mulf %2, %2 : vector<1x128xf32>
    %7 = arith.subf %5, %6 : vector<1x128xf32>
    %c0_3 = arith.constant 0 : index
    %c0_4 = arith.constant 0 : index
    %8 = vector.load %arg3[%c0_3, %c0_4] : memref<1x128xf32, #tpu.memory_space<vmem>>, vector<1x128xf32>
    %cst_5 = arith.constant 9.99999974E-6 : f32
    %9 = vector.broadcast %cst_5 : f32 to vector<1x128xf32>
    %10 = arith.addf %7, %9 : vector<1x128xf32>
    %11 = math.rsqrt %10 : vector<1x128xf32>
    %12 = arith.mulf %8, %11 : vector<1x128xf32>
    %c0_6 = arith.constant 0 : index
    %c0_7 = arith.constant 0 : index
    %13 = vector.load %arg4[%c0_6, %c0_7] : memref<1x128xf32, #tpu.memory_space<vmem>>, vector<1x128xf32>
    %14 = arith.mulf %2, %12 : vector<1x128xf32>
    %15 = arith.subf %13, %14 : vector<1x128xf32>
    %c0_8 = arith.constant 0 : index
    %c0_9 = arith.constant 0 : index
    %16 = vector.load %arg1[%c0_8, %c0_9] : memref<32x128xf32, #tpu.memory_space<vmem>>, vector<32x128xf32>
    %17 = vector.broadcast %12 : vector<1x128xf32> to vector<32x128xf32>
    %18 = arith.mulf %16, %17 : vector<32x128xf32>
    %19 = vector.broadcast %15 : vector<1x128xf32> to vector<32x128xf32>
    %20 = arith.addf %18, %19 : vector<32x128xf32>
    %cst_10 = arith.constant 0.000000e+00 : f32
    %21 = vector.broadcast %cst_10 : f32 to vector<32x128xf32>
    %22 = arith.cmpf oge, %20, %21 : vector<32x128xf32>
    %cst_11 = arith.constant 2.000000e-01 : f32
    %23 = vector.broadcast %cst_11 : f32 to vector<32x128xf32>
    %24 = arith.mulf %23, %20 : vector<32x128xf32>
    %25 = arith.select %22, %20, %24 : vector<32x128xi1>, vector<32x128xf32>
    %26 = arith.truncf %25 : vector<32x128xf32> to vector<32x128xbf16>
    %c0_12 = arith.constant 0 : index
    %c0_13 = arith.constant 0 : index
    %27 = vector.load %arg5[%c0_12, %c0_13] : memref<32x128xbf16, #tpu.memory_space<vmem>>, vector<32x128xbf16>
    tpu.vector_store %arg5[%c0_12, %c0_13], %26 {strides = array<i32>} : memref<32x128xbf16, #tpu.memory_space<vmem>>, vector<32x128xbf16>,
    return
  }
  func.func @transform_0(%arg0: i32) -> (i32, i32) {
    %c0_i32 = arith.constant 0 : i32
    %c0_i32_0 = arith.constant 0 : i32
    return %arg0, %c0_i32 : i32, i32
  }
  func.func @transform_1(%arg0: i32) -> (i32, i32) {
    %c0_i32 = arith.constant 0 : i32
    %c0_i32_0 = arith.constant 0 : i32
    %c0_i32_1 = arith.constant 0 : i32
    return %c0_i32, %c0_i32_0 : i32, i32
  }
  func.func @transform_2(%arg0: i32) -> (i32, i32) {
    %c0_i32 = arith.constant 0 : i32
    %c0_i32_0 = arith.constant 0 : i32
    %c0_i32_1 = arith.constant 0 : i32
    return %c0_i32, %c0_i32_0 : i32, i32
  }
  func.func @transform_3(%arg0: i32) -> (i32, i32) {
    %c0_i32 = arith.constant 0 : i32
    %c0_i32_0 = arith.constant 0 : i32
    %c0_i32_1 = arith.constant 0 : i32
    return %c0_i32, %c0_i32_0 : i32, i32
  }
  func.func @transform_4(%arg0: i32) -> (i32, i32) {
    %c0_i32 = arith.constant 0 : i32
    %c0_i32_0 = arith.constant 0 : i32
    return %arg0, %c0_i32 : i32, i32
  }
}

module attributes {stable_mosaic.version = 11 : i64} {
  func.func @_fc_sigmoid_kernel(%arg0: i32, %arg1: memref<2x512xbf16, #tpu.memory_space<vmem>>, %arg2: memref<512x128xbf16, #tpu.memory_space<vmem>>, %arg3: memref<1x128xf32, #tpu.memory_space<vmem>>, %arg4: memref<2x128xf32, #tpu.memory_space<vmem>>) attributes {dimension_semantics = [#tpu.dimension_semantics<parallel>], iteration_bounds = array<i64: 1>, scalar_prefetch = 0 : i64, scratch_operands = 0 : i64, tpu.core_type = #tpu.core_type<tc>, window_params = [{transform_indices = @transform_0, window_bounds = array<i64: 2, 512>}, {pipeline_mode = #tpu.pipeline_mode<synchronous>, transform_indices = @transform_1, window_bounds = array<i64: 512, 128>}, {pipeline_mode = #tpu.pipeline_mode<synchronous>, transform_indices = @transform_2, window_bounds = array<i64: 1, 128>}, {transform_indices = @transform_3, window_bounds = array<i64: 2, 128>}]} {
    %c0 = arith.constant 0 : index
    %c0_0 = arith.constant 0 : index
    %0 = vector.load %arg1[%c0, %c0_0] : memref<2x512xbf16, #tpu.memory_space<vmem>>, vector<2x512xbf16>
    %c0_1 = arith.constant 0 : index
    %c0_2 = arith.constant 0 : index
    %1 = vector.load %arg2[%c0_1, %c0_2] : memref<512x128xbf16, #tpu.memory_space<vmem>>, vector<512x128xbf16>
    %cst = arith.constant dense<0.000000e+00> : vector<2x128xf32>
    %2 = tpu.matmul %0, %1, %cst {dimension_numbers = #tpu.dot_dimension_numbers<[1], [0], [0], [1], [0, 0, 1, 1], [], []>} : vector<2x512xbf16>, vector<512x128xbf16>, vector<2x128xf32> -> vector<2x128xf32>
    %c0_3 = arith.constant 0 : index
    %c0_4 = arith.constant 0 : index
    %3 = vector.load %arg3[%c0_3, %c0_4] : memref<1x128xf32, #tpu.memory_space<vmem>>, vector<1x128xf32>
    %4 = vector.broadcast %3 : vector<1x128xf32> to vector<2x128xf32>
    %5 = arith.addf %2, %4 : vector<2x128xf32>
    %6 = arith.negf %5 : vector<2x128xf32>
    %7 = math.exp %6 : vector<2x128xf32>
    %cst_5 = arith.constant 1.000000e+00 : f32
    %8 = vector.broadcast %cst_5 : f32 to vector<2x128xf32>
    %9 = arith.addf %8, %7 : vector<2x128xf32>
    %10 = arith.divf %8, %9 : vector<2x128xf32>
    %c0_6 = arith.constant 0 : index
    %c0_7 = arith.constant 0 : index
    %11 = vector.load %arg4[%c0_6, %c0_7] : memref<2x128xf32, #tpu.memory_space<vmem>>, vector<2x128xf32>
    tpu.vector_store %arg4[%c0_6, %c0_7], %10 {strides = array<i32>} : memref<2x128xf32, #tpu.memory_space<vmem>>, vector<2x128xf32>,
    return
  }
  func.func @transform_0(%arg0: i32) -> (i32, i32) {
    %c0_i32 = arith.constant 0 : i32
    %c0_i32_0 = arith.constant 0 : i32
    return %arg0, %c0_i32 : i32, i32
  }
  func.func @transform_1(%arg0: i32) -> (i32, i32) {
    %c0_i32 = arith.constant 0 : i32
    %c0_i32_0 = arith.constant 0 : i32
    %c0_i32_1 = arith.constant 0 : i32
    return %c0_i32, %c0_i32_0 : i32, i32
  }
  func.func @transform_2(%arg0: i32) -> (i32, i32) {
    %c0_i32 = arith.constant 0 : i32
    %c0_i32_0 = arith.constant 0 : i32
    %c0_i32_1 = arith.constant 0 : i32
    return %c0_i32, %c0_i32_0 : i32, i32
  }
  func.func @transform_3(%arg0: i32) -> (i32, i32) {
    %c0_i32 = arith.constant 0 : i32
    %c0_i32_0 = arith.constant 0 : i32
    return %arg0, %c0_i32 : i32, i32
  }
}

</mosaic_0001>

<llo_original>
// kernel: dcgan_discriminator_forward.6
$region0: #{dcgan_discriminator_forward.6}
  #allocation0 [shape = 'u32[]', space=smem, size = 0x4, offset = 0x4, fixed_abs, tag = 'smem constant byte address 0x4 - core index']
  #allocation1 [shape = 'u32[144,128]{1,0:T(1,128)}', space=vmem, size = 0x12000, scoped, tag = 'internal scratch']
  #allocation2 [shape = 'f32[256,128]{1,0:T(8,128)}', space=vmem, size = 0x20000, scoped, tag = 'scratch operand']
  %s0 = inlined_call_operand.vmem [shape: bf16[512,128], index: 0, kind: input, shape index: {}]
  %s1 = inlined_call_operand.vmem [shape: bf16[128,128], index: 1, kind: input, shape index: {}]
  %s2 = inlined_call_operand.vmem [shape: f32[1,128], index: 2, kind: input, shape index: {}]
  %s3 = inlined_call_operand.vmem [shape: bf16[512,128], index: 3, kind: output, shape index: {}]
  %s4 = sld [smem:[#allocation0]]
  $region53: #{dcgan_discriminator_forward.6} parent=0
    _
  %s6 = ssub.s32 1, %s4
  %s7 = scalar_select 0, %s6, %s4
  loop: start=0, step=1, limit=4
  $region2: #{dcgan_discriminator_forward.6} parent=0 // loop_pre_header
    _
  $region3: #{dcgan_discriminator_forward.6} parent=0 // loop_header
    %s9 = sphi 0, %s13
    %p10 = scmp.ge.s32.totalorder %s9, 4
    %s16 = sphi 0, %s28
    %s17 = sphi 0, %s24
    %s18 = sphi 0, %s16
    %s19 = sphi 0, %s17
    %s20 = sphi 0, %s18
    %s21 = sphi 0, %s19
    %s33 = sphi 0, %s35
    %s36 = sphi 0, %s33
    %s37 = sphi 0, %s36
    %s53 = sphi 0, %s37
    %s59 = sphi 0, %s61
    %s62 = sphi 0, %s59
    %s63 = sphi 0, %s62
    %s79 = sphi 0, %s63
    %s83 = sphi 0, %s83
    %s85 = sphi 0, %s83
    %s86 = sphi 0, %s85
    %s100 = sphi 0, %s86
    %s106 = sphi 0, %s108
    %s109 = sphi 0, %s106
    %s110 = sphi 0, %s109
    %s126 = sphi 0, %s110
  $region4: #{dcgan_discriminator_forward.6} parent=0 // loop_header_branch
    %12 = sbr.rel (%p10) target = $region8
  $region5: #{dcgan_discriminator_forward.6} parent=0 // loop_body
    %s14 = ssub.s32 %s9, 1
    %s15 = ssub.s32 %s9, 2
    %s22 = sadd.s32 1, %s17
    %p23 = scmp.ge.s32.totalorder %s22, 1
    %s24 = scalar_select %p23, 0, %s22
    %s25 = sadd.s32 1, %s16
    %s26 = scalar_select %p23, %s25, %s16
    %p27 = scmp.ge.s32.totalorder %s26, 2
    %s28 = scalar_select %p27, 0, %s26
    %s29 = ssub.s32 %s16, %s28
    %s30 = ssub.s32 %s17, %s24
    %s31 = sor.u32 %s29, %s30
    %p32 = scmp.eq.s32.totalorder %s31, 0
    %s34 = sadd.s32 %s33, 1
    %s35 = scalar_select %p32, %s33, %s34
    %p38 = pneg %p32
    %p39 = scmp.eq.s32.totalorder %s9, 1
    %p40 = por %p38, %p39
    %p41 = scmp.ne.s32.totalorder %s33, %s36
    %p42 = scmp.eq.s32.totalorder %s9, 0
    %p43 = por %p41, %p42
    %p44 = scmp.ne.s32.totalorder %s33, %s36
    %p45 = scmp.eq.s32.totalorder %s14, 1
    %p46 = por %p44, %p45
    %p47 = scmp.ne.s32.totalorder %s36, %s37
    %p48 = scmp.eq.s32.totalorder %s14, 0
    %p49 = por %p47, %p48
    %p50 = scmp.ne.s32.totalorder %s36, %s37
    %p51 = scmp.eq.s32.totalorder %s15, 1
    %p52 = por %p50, %p51
    %p54 = scmp.ne.s32.totalorder %s37, %s53
    %p55 = scmp.eq.s32.totalorder %s15, 0
    %p56 = por %p54, %p55
    %s57 = ssub.s32 %s17, %s24
    %p58 = scmp.eq.s32.totalorder %s57, 0
    %s60 = sadd.s32 %s59, 1
    %s61 = scalar_select %p58, %s59, %s60
    %p64 = pneg %p58
    %p65 = scmp.eq.s32.totalorder %s9, 1
    %p66 = por %p64, %p65
    %p67 = scmp.ne.s32.totalorder %s59, %s62
    %p68 = scmp.eq.s32.totalorder %s9, 0
    %p69 = por %p67, %p68
    %p70 = scmp.ne.s32.totalorder %s59, %s62
    %p71 = scmp.eq.s32.totalorder %s14, 1
    %p72 = por %p70, %p71
    %p73 = scmp.ne.s32.totalorder %s62, %s63
    %p74 = scmp.eq.s32.totalorder %s14, 0
    %p75 = por %p73, %p74
    %p76 = scmp.ne.s32.totalorder %s62, %s63
    %p77 = scmp.eq.s32.totalorder %s15, 1
    %p78 = por %p76, %p77
    %p80 = scmp.ne.s32.totalorder %s63, %s79
    %p81 = scmp.eq.s32.totalorder %s15, 0
    %p82 = por %p80, %p81
    %s84 = sadd.s32 %s83, 1
    %p87 = scmp.eq.s32.totalorder %s9, 1
    %p88 = scmp.ne.s32.totalorder %s83, %s85
    %p89 = scmp.eq.s32.totalorder %s9, 0
    %p90 = por %p88, %p89
    %p91 = scmp.ne.s32.totalorder %s83, %s85
    %p92 = scmp.eq.s32.totalorder %s14, 1
    %p93 = por %p91, %p92
    %p94 = scmp.ne.s32.totalorder %s85, %s86
    %p95 = scmp.eq.s32.totalorder %s14, 0
    %p96 = por %p94, %p95
    %p97 = scmp.ne.s32.totalorder %s85, %s86
    %p98 = scmp.eq.s32.totalorder %s15, 1
    %p99 = por %p97, %p98
    %p101 = scmp.ne.s32.totalorder %s86, %s100
    %p102 = scmp.eq.s32.totalorder %s15, 0
    %p103 = por %p101, %p102
    %s104 = ssub.s32 %s16, %s28
    %p105 = scmp.eq.s32.totalorder %s104, 0
    %s107 = sadd.s32 %s106, 1
    %s108 = scalar_select %p105, %s106, %s107
    %p111 = pneg %p105
    %p112 = scmp.eq.s32.totalorder %s9, 1
    %p113 = por %p111, %p112
    %p114 = scmp.ne.s32.totalorder %s106, %s109
    %p115 = scmp.eq.s32.totalorder %s9, 0
    %p116 = por %p114, %p115
    %p117 = scmp.ne.s32.totalorder %s106, %s109
    %p118 = scmp.eq.s32.totalorder %s14, 1
    %p119 = por %p117, %p118
    %p120 = scmp.ne.s32.totalorder %s109, %s110
    %p121 = scmp.eq.s32.totalorder %s14, 0
    %p122 = por %p120, %p121
    %p123 = scmp.ne.s32.totalorder %s109, %s110
    %p124 = scmp.eq.s32.totalorder %s15, 1
    %p125 = por %p123, %p124
    %p127 = scmp.ne.s32.totalorder %s110, %s126
    %p128 = scmp.eq.s32.totalorder %s15, 0
    %p129 = por %p127, %p128
    %p130 = scmp.le.s32.totalorder 1, %s9
    %p131 = scmp.lt.s32.totalorder %s9, 3
    %p132 = pnand %p130, %p131
    %p133 = pneg %p132
    // Predicated region
    $region9: #{dcgan_discriminator_forward.6} parent=5 // pred_check
      _
    $region10: #{dcgan_discriminator_forward.6} parent=5 // pred_check_branch
      %135 = sbr.rel (%p132) target = $region12
    $region11: #{dcgan_discriminator_forward.6} parent=5 // pred_region
      %s136 = ssub.s32 %s9, 1
      // Predicated region
      $region13: #{dcgan_discriminator_forward.6} parent=11 // pred_check
        %p137 = pneg %p75
      $region14: #{dcgan_discriminator_forward.6} parent=11 // pred_check_branch
        %139 = sbr.rel (%p137) target = $region16
      $region15: #{dcgan_discriminator_forward.6} parent=11 // pred_region
        %s140 = smul.u32 16, %s19
        %p141 = scmp.lt.s32.totalorder %s140, 15
        %s142 = scalar_select %p141, %s140, 15
        %s143 = smul.addr %s142, 4
        %s144 = scalar_lea.vmem %s1, %s143
        %s145 = smul.u32 16, %s19
      $region16: #{dcgan_discriminator_forward.6} parent=11 // pred_fallthru
        _
      // Predicated region
      $region17: #{dcgan_discriminator_forward.6} parent=11 // pred_check
        %p146 = pneg %p96
      $region18: #{dcgan_discriminator_forward.6} parent=11 // pred_check_branch
        %148 = sbr.rel (%p146) target = $region20
      $region19: #{dcgan_discriminator_forward.6} parent=11 // pred_region
        _
      $region20: #{dcgan_discriminator_forward.6} parent=11 // pred_fallthru
        _
    $region12: #{dcgan_discriminator_forward.6} parent=5 // pred_fallthru
      _
    %p149 = scmp.lt.s32.totalorder %s9, 2
    // Predicated region
    $region21: #{dcgan_discriminator_forward.6} parent=5 // pred_check
      %p150 = pneg %p149
    $region22: #{dcgan_discriminator_forward.6} parent=5 // pred_check_branch
      %152 = sbr.rel (%p150) target = $region24
    $region23: #{dcgan_discriminator_forward.6} parent=5 // pred_region
      // Predicated region
      $region25: #{dcgan_discriminator_forward.6} parent=23 // pred_check
        %p153 = pneg %p43
      $region26: #{dcgan_discriminator_forward.6} parent=23 // pred_check_branch
        %155 = sbr.rel (%p153) target = $region28
      $region27: #{dcgan_discriminator_forward.6} parent=23 // pred_region
        %s156 = smul.u32 32, %s16
        %p157 = scmp.lt.s32.totalorder %s156, 63
        %s158 = scalar_select %p157, %s156, 63
        %p159 = scmp.lt.s32.totalorder %s17, 0
        %s160 = scalar_select %p159, %s17, 0
        %s161 = sadd.s32 %s160, %s158
        %s162 = smul.addr %s161, 4
        %s163 = scalar_lea.vmem %s0, %s162
        %s164 = smul.u32 32, %s16
      $region28: #{dcgan_discriminator_forward.6} parent=23 // pred_fallthru
        _
    $region24: #{dcgan_discriminator_forward.6} parent=5 // pred_fallthru
      _
    %p165 = scmp.le.s32.totalorder 1, %s9
    %p166 = scmp.lt.s32.totalorder %s9, 3
    %p167 = pnand %p165, %p166
    %p168 = pneg %p167
    // Predicated region
    $region29: #{dcgan_discriminator_forward.6} parent=5 // pred_check
      _
    $region30: #{dcgan_discriminator_forward.6} parent=5 // pred_check_branch
      %170 = sbr.rel (%p167) target = $region32
    $region31: #{dcgan_discriminator_forward.6} parent=5 // pred_region
      %s171 = ssub.s32 %s9, 1
      %s172 = smul.u32 32, %s18
      %p173 = scmp.lt.s32.totalorder %s172, 63
      %s174 = scalar_select %p173, %s172, 63
      %p175 = scmp.lt.s32.totalorder %s19, 0
      %s176 = scalar_select %p175, %s19, 0
      %s177 = sadd.s32 %s176, %s174
      %s178 = smul.addr %s177, 4
      %s179 = scalar_lea.vmem %s0, %s178
      %p180 = pneg %p49
      %p181 = pneg %p46
      %s182 = smul.u32 16, %s19
      %p183 = scmp.lt.s32.totalorder %s182, 15
      %s184 = scalar_select %p183, %s182, 15
      %s185 = smul.addr %s184, 4
      %s186 = scalar_lea.vmem %s1, %s185
      %p187 = pneg %p75
      %p188 = pneg %p72
      %p189 = pneg %p96
      %p190 = pneg %p93
      %p191 = pneg %p122
      %p192 = pneg %p119
      %s193 = smul.u32 32, %s18
      %p194 = scmp.lt.s32.totalorder %s193, 63
      %s195 = scalar_select %p194, %s193, 63
      %s196 = smul.addr %s195, 4
      %s197 = scalar_lea.vmem %s3, %s196
      %s198 = smul.u32 32, %s18
      %p199 = scmp.lt.s32.totalorder %s198, 63
      %s200 = scalar_select %p199, %s198, 63
      %p201 = scmp.lt.s32.totalorder %s19, 0
      %s202 = scalar_select %p201, %s19, 0
      %s203 = sadd.s32 %s202, %s200
      %s204 = smul.addr %s203, 4
      %s205 = scalar_lea.vmem %s0, %s204
      %s206 = smul.u32 32, %s18
      %s207 = smul.u32 16, %s19
      %p208 = scmp.lt.s32.totalorder %s207, 15
      %s209 = scalar_select %p208, %s207, 15
      %s210 = smul.addr %s209, 4
      %s211 = scalar_lea.vmem %s1, %s210
      %s212 = smul.u32 16, %s19
      %s213 = smul.u32 32, %s18
      %p214 = scmp.lt.s32.totalorder %s213, 63
      %s215 = scalar_select %p214, %s213, 63
      %s216 = smul.addr %s215, 4
      %s217 = scalar_lea.vmem %s3, %s216
      %s218 = smul.u32 32, %s18
      %p220 = scmp.eq.s32.totalorder %s19, 0
      // Predicated region
      $region33: #{dcgan_discriminator_forward.6} parent=31 // pred_check
        %p221 = pneg %p220
      $region34: #{dcgan_discriminator_forward.6} parent=31 // pred_check_branch
        %223 = sbr.rel (%p221) target = $region36
      $region35: #{dcgan_discriminator_forward.6} parent=31 // pred_region
        %224 = vst [vmem:[#allocation2] sm:$0xff] 0.0
        %225 = vst [vmem:[#allocation2 + $0x8] sm:$0xff] 0.0
        %226 = vst [vmem:[#allocation2 + $0x10] sm:$0xff] 0.0
        %227 = vst [vmem:[#allocation2 + $0x18] sm:$0xff] 0.0
        %228 = vst [vmem:[#allocation2 + $0x20] sm:$0xff] 0.0
        %229 = vst [vmem:[#allocation2 + $0x28] sm:$0xff] 0.0
        %230 = vst [vmem:[#allocation2 + $0x30] sm:$0xff] 0.0
        %231 = vst [vmem:[#allocation2 + $0x38] sm:$0xff] 0.0
        %232 = vst [vmem:[#allocation2 + $0x40] sm:$0xff] 0.0
        %233 = vst [vmem:[#allocation2 + $0x48] sm:$0xff] 0.0
        %234 = vst [vmem:[#allocation2 + $0x50] sm:$0xff] 0.0
        %235 = vst [vmem:[#allocation2 + $0x58] sm:$0xff] 0.0
        %236 = vst [vmem:[#allocation2 + $0x60] sm:$0xff] 0.0
        %237 = vst [vmem:[#allocation2 + $0x68] sm:$0xff] 0.0
        %238 = vst [vmem:[#allocation2 + $0x70] sm:$0xff] 0.0
        %239 = vst [vmem:[#allocation2 + $0x78] sm:$0xff] 0.0
        %240 = vst [vmem:[#allocation2 + $0x80] sm:$0xff] 0.0
        %241 = vst [vmem:[#allocation2 + $0x88] sm:$0xff] 0.0
        %242 = vst [vmem:[#allocation2 + $0x90] sm:$0xff] 0.0
        %243 = vst [vmem:[#allocation2 + $0x98] sm:$0xff] 0.0
        %244 = vst [vmem:[#allocation2 + $0xa0] sm:$0xff] 0.0
        %245 = vst [vmem:[#allocation2 + $0xa8] sm:$0xff] 0.0
        %246 = vst [vmem:[#allocation2 + $0xb0] sm:$0xff] 0.0
        %247 = vst [vmem:[#allocation2 + $0xb8] sm:$0xff] 0.0
        %248 = vst [vmem:[#allocation2 + $0xc0] sm:$0xff] 0.0
        %249 = vst [vmem:[#allocation2 + $0xc8] sm:$0xff] 0.0
        %250 = vst [vmem:[#allocation2 + $0xd0] sm:$0xff] 0.0
        %251 = vst [vmem:[#allocation2 + $0xd8] sm:$0xff] 0.0
        %252 = vst [vmem:[#allocation2 + $0xe0] sm:$0xff] 0.0
        %253 = vst [vmem:[#allocation2 + $0xe8] sm:$0xff] 0.0
        %254 = vst [vmem:[#allocation2 + $0xf0] sm:$0xff] 0.0
        %255 = vst [vmem:[#allocation2 + $0xf8] sm:$0xff] 0.0
      $region36: #{dcgan_discriminator_forward.6} parent=31 // pred_fallthru
        _
      %v256 = vld [vmem:[#allocation2] sm:$0xff]
      %v257 = vld [vmem:[#allocation2 + $0x8] sm:$0xff]
      %v258 = vld [vmem:[#allocation2 + $0x10] sm:$0xff]
      %v259 = vld [vmem:[#allocation2 + $0x18] sm:$0xff]
      %v260 = vld [vmem:[#allocation2 + $0x20] sm:$0xff]
      %v261 = vld [vmem:[#allocation2 + $0x28] sm:$0xff]
      %v262 = vld [vmem:[#allocation2 + $0x30] sm:$0xff]
      %v263 = vld [vmem:[#allocation2 + $0x38] sm:$0xff]
      %v264 = vld [vmem:[#allocation2 + $0x40] sm:$0xff]
      %v265 = vld [vmem:[#allocation2 + $0x48] sm:$0xff]
      %v266 = vld [vmem:[#allocation2 + $0x50] sm:$0xff]
      %v267 = vld [vmem:[#allocation2 + $0x58] sm:$0xff]
      %v268 = vld [vmem:[#allocation2 + $0x60] sm:$0xff]
      %v269 = vld [vmem:[#allocation2 + $0x68] sm:$0xff]
      %v270 = vld [vmem:[#allocation2 + $0x70] sm:$0xff]
      %v271 = vld [vmem:[#allocation2 + $0x78] sm:$0xff]
      %v272 = vld [vmem:[#allocation2 + $0x80] sm:$0xff]
      %v273 = vld [vmem:[#allocation2 + $0x88] sm:$0xff]
      %v274 = vld [vmem:[#allocation2 + $0x90] sm:$0xff]
      %v275 = vld [vmem:[#allocation2 + $0x98] sm:$0xff]
      %v276 = vld [vmem:[#allocation2 + $0xa0] sm:$0xff]
      %v277 = vld [vmem:[#allocation2 + $0xa8] sm:$0xff]
      %v278 = vld [vmem:[#allocation2 + $0xb0] sm:$0xff]
      %v279 = vld [vmem:[#allocation2 + $0xb8] sm:$0xff]
      %v280 = vld [vmem:[#allocation2 + $0xc0] sm:$0xff]
      %v281 = vld [vmem:[#allocation2 + $0xc8] sm:$0xff]
      %v282 = vld [vmem:[#allocation2 + $0xd0] sm:$0xff]
      %v283 = vld [vmem:[#allocation2 + $0xd8] sm:$0xff]
      %v284 = vld [vmem:[#allocation2 + $0xe0] sm:$0xff]
      %v285 = vld [vmem:[#allocation2 + $0xe8] sm:$0xff]
      %v286 = vld [vmem:[#allocation2 + $0xf0] sm:$0xff]
      %v287 = vld [vmem:[#allocation2 + $0xf8] sm:$0xff]
      %v288 = vld [vmem:[%s205] sm:$0xf]
      %v289 = vld [vmem:[%s205 + $0x4] sm:$0xf]
      %v290 = vld [vmem:[%s205 + $0x8] sm:$0xf]
      %v291 = vld [vmem:[%s205 + $0xc] sm:$0xf]
      %v292 = vld [vmem:[%s205 + $0x10] sm:$0xf]
      %v293 = vld [vmem:[%s205 + $0x14] sm:$0xf]
      %v294 = vld [vmem:[%s205 + $0x18] sm:$0xf]
      %v295 = vld [vmem:[%s205 + $0x1c] sm:$0xf]
      %v296 = vld [vmem:[%s205 + $0x20] sm:$0xf]
      %v297 = vld [vmem:[%s205 + $0x24] sm:$0xf]
      %v298 = vld [vmem:[%s205 + $0x28] sm:$0xf]
      %v299 = vld [vmem:[%s205 + $0x2c] sm:$0xf]
      %v300 = vld [vmem:[%s205 + $0x30] sm:$0xf]
      %v301 = vld [vmem:[%s205 + $0x34] sm:$0xf]
      %v302 = vld [vmem:[%s205 + $0x38] sm:$0xf]
      %v303 = vld [vmem:[%s205 + $0x3c] sm:$0xf]
      %v304 = vld [vmem:[%s205 + $0x40] sm:$0xf]
      %v305 = vld [vmem:[%s205 + $0x44] sm:$0xf]
      %v306 = vld [vmem:[%s205 + $0x48] sm:$0xf]
      %v307 = vld [vmem:[%s205 + $0x4c] sm:$0xf]
      %v308 = vld [vmem:[%s205 + $0x50] sm:$0xf]
      %v309 = vld [vmem:[%s205 + $0x54] sm:$0xf]
      %v310 = vld [vmem:[%s205 + $0x58] sm:$0xf]
      %v311 = vld [vmem:[%s205 + $0x5c] sm:$0xf]
      %v312 = vld [vmem:[%s205 + $0x60] sm:$0xf]
      %v313 = vld [vmem:[%s205 + $0x64] sm:$0xf]
      %v314 = vld [vmem:[%s205 + $0x68] sm:$0xf]
      %v315 = vld [vmem:[%s205 + $0x6c] sm:$0xf]
      %v316 = vld [vmem:[%s205 + $0x70] sm:$0xf]
      %v317 = vld [vmem:[%s205 + $0x74] sm:$0xf]
      %v318 = vld [vmem:[%s205 + $0x78] sm:$0xf]
      %v319 = vld [vmem:[%s205 + $0x7c] sm:$0xf]
      %v320 = vld [vmem:[%s211] sm:$0xf]
      %v321 = vld [vmem:[%s211 + $0x4] sm:$0xf]
      %v322 = vld [vmem:[%s211 + $0x8] sm:$0xf]
      %v323 = vld [vmem:[%s211 + $0xc] sm:$0xf]
      %v324 = vld [vmem:[%s211 + $0x10] sm:$0xf]
      %v325 = vld [vmem:[%s211 + $0x14] sm:$0xf]
      %v326 = vld [vmem:[%s211 + $0x18] sm:$0xf]
      %v327 = vld [vmem:[%s211 + $0x1c] sm:$0xf]
      %v328 = vld [vmem:[%s211 + $0x20] sm:$0xf]
      %v329 = vld [vmem:[%s211 + $0x24] sm:$0xf]
      %v330 = vld [vmem:[%s211 + $0x28] sm:$0xf]
      %v331 = vld [vmem:[%s211 + $0x2c] sm:$0xf]
      %v332 = vld [vmem:[%s211 + $0x30] sm:$0xf]
      %v333 = vld [vmem:[%s211 + $0x34] sm:$0xf]
      %v334 = vld [vmem:[%s211 + $0x38] sm:$0xf]
      %v335 = vld [vmem:[%s211 + $0x3c] sm:$0xf]
      %v368 = vunpack.c.l.b16 %v288
      %v369 = vunpack.c.l.b16 %v289
      %v370 = vunpack.c.l.b16 %v290
      %v371 = vunpack.c.l.b16 %v291
      %v372 = vunpack.c.l.b16 %v292
      %v373 = vunpack.c.l.b16 %v293
      %v374 = vunpack.c.l.b16 %v294
      %v375 = vunpack.c.l.b16 %v295
      %v376 = vunpack.c.l.b16 %v296
      %v377 = vunpack.c.l.b16 %v297
      %v378 = vunpack.c.l.b16 %v298
      %v379 = vunpack.c.l.b16 %v299
      %v380 = vunpack.c.l.b16 %v300
      %v381 = vunpack.c.l.b16 %v301
      %v382 = vunpack.c.l.b16 %v302
      %v383 = vunpack.c.l.b16 %v303
      %v384 = vunpack.c.l.b16 %v304
      %v385 = vunpack.c.l.b16 %v305
      %v386 = vunpack.c.l.b16 %v306
      %v387 = vunpack.c.l.b16 %v307
      %v388 = vunpack.c.l.b16 %v308
      %v389 = vunpack.c.l.b16 %v309
      %v390 = vunpack.c.l.b16 %v310
      %v391 = vunpack.c.l.b16 %v311
      %v392 = vunpack.c.l.b16 %v312
      %v393 = vunpack.c.l.b16 %v313
      %v394 = vunpack.c.l.b16 %v314
      %v395 = vunpack.c.l.b16 %v315
      %v396 = vunpack.c.l.b16 %v316
      %v397 = vunpack.c.l.b16 %v317
      %v398 = vunpack.c.l.b16 %v318
      %v399 = vunpack.c.l.b16 %v319
      %v400 = vpack.c.b16 %v369, %v368
      %v401 = vpack.c.b16 %v371, %v370
      %v402 = vpack.c.b16 %v373, %v372
      %v403 = vpack.c.b16 %v375, %v374
      %v404 = vpack.c.b16 %v377, %v376
      %v405 = vpack.c.b16 %v379, %v378
      %v406 = vpack.c.b16 %v381, %v380
      %v407 = vpack.c.b16 %v383, %v382
      %v408 = vpack.c.b16 %v385, %v384
      %v409 = vpack.c.b16 %v387, %v386
      %v410 = vpack.c.b16 %v389, %v388
      %v411 = vpack.c.b16 %v391, %v390
      %v412 = vpack.c.b16 %v393, %v392
      %v413 = vpack.c.b16 %v395, %v394
      %v414 = vpack.c.b16 %v397, %v396
      %v415 = vpack.c.b16 %v399, %v398
      %v448 = vunpack.c.l.b16 %v320
      %v449 = vunpack.c.l.b16 %v321
      %v450 = vunpack.c.l.b16 %v322
      %v451 = vunpack.c.l.b16 %v323
      %v452 = vunpack.c.l.b16 %v324
      %v453 = vunpack.c.l.b16 %v325
      %v454 = vunpack.c.l.b16 %v326
      %v455 = vunpack.c.l.b16 %v327
      %v456 = vunpack.c.l.b16 %v328
      %v457 = vunpack.c.l.b16 %v329
      %v458 = vunpack.c.l.b16 %v330
      %v459 = vunpack.c.l.b16 %v331
      %v460 = vunpack.c.l.b16 %v332
      %v461 = vunpack.c.l.b16 %v333
      %v462 = vunpack.c.l.b16 %v334
      %v463 = vunpack.c.l.b16 %v335
      %v464 = vpack.c.b16 %v449, %v448
      %v465 = vpack.c.b16 %v451, %v450
      %v466 = vpack.c.b16 %v453, %v452
      %v467 = vpack.c.b16 %v455, %v454
      %v468 = vpack.c.b16 %v457, %v456
      %v469 = vpack.c.b16 %v459, %v458
      %v470 = vpack.c.b16 %v461, %v460
      %v471 = vpack.c.b16 %v463, %v462
      %480 = vmatprep.subr.bf16.mxu0 0
      %481 = vmatpush1.bf16.msra.mxu0 %v471
      %482 = vmatprep.subr.bf16.mxu0 0
      %483 = vmatpush1.bf16.msra.mxu0 %v470
      %484 = vmatprep.subr.bf16.mxu0 0
      %485 = vmatpush1.bf16.msra.mxu0 %v469
      %486 = vmatprep.subr.bf16.mxu0 0
      %487 = vmatpush1.bf16.msra.mxu0 %v468
      %488 = vmatprep.subr.bf16.mxu0 0
      %489 = vmatpush1.bf16.msra.mxu0 %v467
      %490 = vmatprep.subr.bf16.mxu0 0
      %491 = vmatpush1.bf16.msra.mxu0 %v466
      %492 = vmatprep.subr.bf16.mxu0 0
      %493 = vmatpush1.bf16.msra.mxu0 %v465
      %494 = vmatprep.subr.bf16.mxu0 0
      %495 = vmatpush1.bf16.msra.mxu0 %v464
      %496 = vmatprep.subr.bf16.mxu0 0
      %497 = vmatpush2.bf16.msra.mxu0 0
      %498 = vmatprep.subr.bf16.mxu0 0
      %499 = vmatpush2.bf16.msra.mxu0 0
      %500 = vmatprep.subr.bf16.mxu0 0
      %501 = vmatpush2.bf16.msra.mxu0 0
      %502 = vmatprep.subr.bf16.mxu0 0
      %503 = vmatpush2.bf16.msra.mxu0 0
      %504 = vmatprep.subr.bf16.mxu0 0
      %505 = vmatpush2.bf16.msra.mxu0 0
      %506 = vmatprep.subr.bf16.mxu0 0
      %507 = vmatpush2.bf16.msra.mxu0 0
      %508 = vmatprep.subr.bf16.mxu0 0
      %509 = vmatpush2.bf16.msra.mxu0 0
      %510 = vmatprep.subr.bf16.mxu0 0
      %511 = vmatpush2.bf16.msra.mxu0 0
      %512 = vmatprep.mubr.bf16.mxu0 0
      %513 = vmatmul.mubr.bf16.gmra.mxu0 %v400
      %v514 = vpop.f32.mrf.mxu0
      %v515 = vadd.f32 0.0, %v514
      %v516 = vpop.f32.mrf.mxu0
      %v517 = vpop.f32.mrf.mxu0
      %v518 = vadd.f32 0.0, %v517
      %v519 = vpop.f32.mrf.mxu0
      %520 = vmatprep.mubr.bf16.mxu0 0
      %521 = vmatmul.mubr.bf16.gmra.mxu0 %v401
      %v522 = vpop.f32.mrf.mxu0
      %v523 = vadd.f32 0.0, %v522
      %v524 = vpop.f32.mrf.mxu0
      %v525 = vpop.f32.mrf.mxu0
      %v526 = vadd.f32 0.0, %v525
      %v527 = vpop.f32.mrf.mxu0
      %528 = vmatprep.mubr.bf16.mxu0 0
      %529 = vmatmul.mubr.bf16.gmra.mxu0 %v402
      %v530 = vpop.f32.mrf.mxu0
      %v531 = vadd.f32 0.0, %v530
      %v532 = vpop.f32.mrf.mxu0
      %v533 = vpop.f32.mrf.mxu0
      %v534 = vadd.f32 0.0, %v533
      %v535 = vpop.f32.mrf.mxu0
      %536 = vmatprep.mubr.bf16.mxu0 0
      %537 = vmatmul.mubr.bf16.gmra.mxu0 %v403
      %v538 = vpop.f32.mrf.mxu0
      %v539 = vadd.f32 0.0, %v538
      %v540 = vpop.f32.mrf.mxu0
      %v541 = vpop.f32.mrf.mxu0
      %v542 = vadd.f32 0.0, %v541
      %v543 = vpop.f32.mrf.mxu0
      %544 = vmatprep.mubr.bf16.mxu0 0
      %545 = vmatmul.mubr.bf16.gmra.mxu0 %v404
      %v546 = vpop.f32.mrf.mxu0
      %v547 = vadd.f32 0.0, %v546
      %v548 = vpop.f32.mrf.mxu0
      %v549 = vpop.f32.mrf.mxu0
      %v550 = vadd.f32 0.0, %v549
      %v551 = vpop.f32.mrf.mxu0
      %552 = vmatprep.mubr.bf16.mxu0 0
      %553 = vmatmul.mubr.bf16.gmra.mxu0 %v405
      %v554 = vpop.f32.mrf.mxu0
      %v555 = vadd.f32 0.0, %v554
      %v556 = vpop.f32.mrf.mxu0
      %v557 = vpop.f32.mrf.mxu0
      %v558 = vadd.f32 0.0, %v557
      %v559 = vpop.f32.mrf.mxu0
      %560 = vmatprep.mubr.bf16.mxu0 0
      %561 = vmatmul.mubr.bf16.gmra.mxu0 %v406
      %v562 = vpop.f32.mrf.mxu0
      %v563 = vadd.f32 0.0, %v562
      %v564 = vpop.f32.mrf.mxu0
      %v565 = vpop.f32.mrf.mxu0
      %v566 = vadd.f32 0.0, %v565
      %v567 = vpop.f32.mrf.mxu0
      %568 = vmatprep.mubr.bf16.mxu0 0
      %569 = vmatmul.mubr.bf16.gmra.mxu0 %v407
      %v570 = vpop.f32.mrf.mxu0
      %v571 = vadd.f32 0.0, %v570
      %v572 = vpop.f32.mrf.mxu0
      %v573 = vpop.f32.mrf.mxu0
      %v574 = vadd.f32 0.0, %v573
      %v575 = vpop.f32.mrf.mxu0
      %576 = vmatprep.mubr.bf16.mxu0 0
      %577 = vmatmul.mubr.bf16.gmra.mxu0 %v408
      %v578 = vpop.f32.mrf.mxu0
      %v579 = vadd.f32 0.0, %v578
      %v580 = vpop.f32.mrf.mxu0
      %v581 = vpop.f32.mrf.mxu0
      %v582 = vadd.f32 0.0, %v581
      %v583 = vpop.f32.mrf.mxu0
      %584 = vmatprep.mubr.bf16.mxu0 0
      %585 = vmatmul.mubr.bf16.gmra.mxu0 %v409
      %v586 = vpop.f32.mrf.mxu0
      %v587 = vadd.f32 0.0, %v586
      %v588 = vpop.f32.mrf.mxu0
      %v589 = vpop.f32.mrf.mxu0
      %v590 = vadd.f32 0.0, %v589
      %v591 = vpop.f32.mrf.mxu0
      %592 = vmatprep.mubr.bf16.mxu0 0
      %593 = vmatmul.mubr.bf16.gmra.mxu0 %v410
      %v594 = vpop.f32.mrf.mxu0
      %v595 = vadd.f32 0.0, %v594
      %v596 = vpop.f32.mrf.mxu0
      %v597 = vpop.f32.mrf.mxu0
      %v598 = vadd.f32 0.0, %v597
      %v599 = vpop.f32.mrf.mxu0
      %600 = vmatprep.mubr.bf16.mxu0 0
      %601 = vmatmul.mubr.bf16.gmra.mxu0 %v411
      %v602 = vpop.f32.mrf.mxu0
      %v603 = vadd.f32 0.0, %v602
      %v604 = vpop.f32.mrf.mxu0
      %v605 = vpop.f32.mrf.mxu0
      %v606 = vadd.f32 0.0, %v605
      %v607 = vpop.f32.mrf.mxu0
      %608 = vmatprep.mubr.bf16.mxu0 0
      %609 = vmatmul.mubr.bf16.gmra.mxu0 %v412
      %v610 = vpop.f32.mrf.mxu0
      %v611 = vadd.f32 0.0, %v610
      %v612 = vpop.f32.mrf.mxu0
      %v613 = vpop.f32.mrf.mxu0
      %v614 = vadd.f32 0.0, %v613
      %v615 = vpop.f32.mrf.mxu0
      %616 = vmatprep.mubr.bf16.mxu0 0
      %617 = vmatmul.mubr.bf16.gmra.mxu0 %v413
      %v618 = vpop.f32.mrf.mxu0
      %v619 = vadd.f32 0.0, %v618
      %v620 = vpop.f32.mrf.mxu0
      %v621 = vpop.f32.mrf.mxu0
      %v622 = vadd.f32 0.0, %v621
      %v623 = vpop.f32.mrf.mxu0
      %624 = vmatprep.mubr.bf16.mxu0 0
      %625 = vmatmul.mubr.bf16.gmra.mxu0 %v414
      %v626 = vpop.f32.mrf.mxu0
      %v627 = vadd.f32 0.0, %v626
      %v628 = vpop.f32.mrf.mxu0
      %v629 = vpop.f32.mrf.mxu0
      %v630 = vadd.f32 0.0, %v629
      %v631 = vpop.f32.mrf.mxu0
      %632 = vmatprep.mubr.bf16.mxu0 0
      %633 = vmatmul.mubr.bf16.gmra.mxu0 %v415
      %v634 = vpop.f32.mrf.mxu0
      %v635 = vadd.f32 0.0, %v634
      %v636 = vpop.f32.mrf.mxu0
      %v637 = vpop.f32.mrf.mxu0
      %v638 = vadd.f32 0.0, %v637
      %v639 = vpop.f32.mrf.mxu0
      %640 = vdwg.mxu0
      %v641 = vadd.f32 %v256, %v515
      %v642 = vadd.f32 %v257, %v518
      %v643 = vadd.f32 %v258, %v523
      %v644 = vadd.f32 %v259, %v526
      %v645 = vadd.f32 %v260, %v531
      %v646 = vadd.f32 %v261, %v534
      %v647 = vadd.f32 %v262, %v539
      %v648 = vadd.f32 %v263, %v542
      %v649 = vadd.f32 %v264, %v547
      %v650 = vadd.f32 %v265, %v550
      %v651 = vadd.f32 %v266, %v555
      %v652 = vadd.f32 %v267, %v558
      %v653 = vadd.f32 %v268, %v563
      %v654 = vadd.f32 %v269, %v566
      %v655 = vadd.f32 %v270, %v571
      %v656 = vadd.f32 %v271, %v574
      %v657 = vadd.f32 %v272, %v579
      %v658 = vadd.f32 %v273, %v582
      %v659 = vadd.f32 %v274, %v587
      %v660 = vadd.f32 %v275, %v590
      %v661 = vadd.f32 %v276, %v595
      %v662 = vadd.f32 %v277, %v598
      %v663 = vadd.f32 %v278, %v603
      %v664 = vadd.f32 %v279, %v606
      %v665 = vadd.f32 %v280, %v611
      %v666 = vadd.f32 %v281, %v614
      %v667 = vadd.f32 %v282, %v619
      %v668 = vadd.f32 %v283, %v622
      %v669 = vadd.f32 %v284, %v627
      %v670 = vadd.f32 %v285, %v630
      %v671 = vadd.f32 %v286, %v635
      %v672 = vadd.f32 %v287, %v638
      %673 = vst [vmem:[#allocation2] sm:$0xff] %v641
      %674 = vst [vmem:[#allocation2 + $0x8] sm:$0xff] %v642
      %675 = vst [vmem:[#allocation2 + $0x10] sm:$0xff] %v643
      %676 = vst [vmem:[#allocation2 + $0x18] sm:$0xff] %v644
      %677 = vst [vmem:[#allocation2 + $0x20] sm:$0xff] %v645
      %678 = vst [vmem:[#allocation2 + $0x28] sm:$0xff] %v646
      %679 = vst [vmem:[#allocation2 + $0x30] sm:$0xff] %v647
      %680 = vst [vmem:[#allocation2 + $0x38] sm:$0xff] %v648
      %681 = vst [vmem:[#allocation2 + $0x40] sm:$0xff] %v649
      %682 = vst [vmem:[#allocation2 + $0x48] sm:$0xff] %v650
      %683 = vst [vmem:[#allocation2 + $0x50] sm:$0xff] %v651
      %684 = vst [vmem:[#allocation2 + $0x58] sm:$0xff] %v652
      %685 = vst [vmem:[#allocation2 + $0x60] sm:$0xff] %v653
      %686 = vst [vmem:[#allocation2 + $0x68] sm:$0xff] %v654
      %687 = vst [vmem:[#allocation2 + $0x70] sm:$0xff] %v655
      %688 = vst [vmem:[#allocation2 + $0x78] sm:$0xff] %v656
      %689 = vst [vmem:[#allocation2 + $0x80] sm:$0xff] %v657
      %690 = vst [vmem:[#allocation2 + $0x88] sm:$0xff] %v658
      %691 = vst [vmem:[#allocation2 + $0x90] sm:$0xff] %v659
      %692 = vst [vmem:[#allocation2 + $0x98] sm:$0xff] %v660
      %693 = vst [vmem:[#allocation2 + $0xa0] sm:$0xff] %v661
      %694 = vst [vmem:[#allocation2 + $0xa8] sm:$0xff] %v662
      %695 = vst [vmem:[#allocation2 + $0xb0] sm:$0xff] %v663
      %696 = vst [vmem:[#allocation2 + $0xb8] sm:$0xff] %v664
      %697 = vst [vmem:[#allocation2 + $0xc0] sm:$0xff] %v665
      %698 = vst [vmem:[#allocation2 + $0xc8] sm:$0xff] %v666
      %699 = vst [vmem:[#allocation2 + $0xd0] sm:$0xff] %v667
      %700 = vst [vmem:[#allocation2 + $0xd8] sm:$0xff] %v668
      %701 = vst [vmem:[#allocation2 + $0xe0] sm:$0xff] %v669
      %702 = vst [vmem:[#allocation2 + $0xe8] sm:$0xff] %v670
      %703 = vst [vmem:[#allocation2 + $0xf0] sm:$0xff] %v671
      %704 = vst [vmem:[#allocation2 + $0xf8] sm:$0xff] %v672
      // Predicated region
      $region37: #{dcgan_discriminator_forward.6} parent=31 // pred_check
        %p705 = pneg %p220
      $region38: #{dcgan_discriminator_forward.6} parent=31 // pred_check_branch
        %707 = sbr.rel (%p705) target = $region40
      $region39: #{dcgan_discriminator_forward.6} parent=31 // pred_region
        %v708 = vld [vmem:[#allocation2] sm:$0xff]
        %v709 = vld [vmem:[#allocation2 + $0x8] sm:$0xff]
        %v710 = vld [vmem:[#allocation2 + $0x10] sm:$0xff]
        %v711 = vld [vmem:[#allocation2 + $0x18] sm:$0xff]
        %v712 = vld [vmem:[#allocation2 + $0x20] sm:$0xff]
        %v713 = vld [vmem:[#allocation2 + $0x28] sm:$0xff]
        %v714 = vld [vmem:[#allocation2 + $0x30] sm:$0xff]
        %v715 = vld [vmem:[#allocation2 + $0x38] sm:$0xff]
        %v716 = vld [vmem:[#allocation2 + $0x40] sm:$0xff]
        %v717 = vld [vmem:[#allocation2 + $0x48] sm:$0xff]
        %v718 = vld [vmem:[#allocation2 + $0x50] sm:$0xff]
        %v719 = vld [vmem:[#allocation2 + $0x58] sm:$0xff]
        %v720 = vld [vmem:[#allocation2 + $0x60] sm:$0xff]
        %v721 = vld [vmem:[#allocation2 + $0x68] sm:$0xff]
        %v722 = vld [vmem:[#allocation2 + $0x70] sm:$0xff]
        %v723 = vld [vmem:[#allocation2 + $0x78] sm:$0xff]
        %v724 = vld [vmem:[#allocation2 + $0x80] sm:$0xff]
        %v725 = vld [vmem:[#allocation2 + $0x88] sm:$0xff]
        %v726 = vld [vmem:[#allocation2 + $0x90] sm:$0xff]
        %v727 = vld [vmem:[#allocation2 + $0x98] sm:$0xff]
        %v728 = vld [vmem:[#allocation2 + $0xa0] sm:$0xff]
        %v729 = vld [vmem:[#allocation2 + $0xa8] sm:$0xff]
        %v730 = vld [vmem:[#allocation2 + $0xb0] sm:$0xff]
        %v731 = vld [vmem:[#allocation2 + $0xb8] sm:$0xff]
        %v732 = vld [vmem:[#allocation2 + $0xc0] sm:$0xff]
        %v733 = vld [vmem:[#allocation2 + $0xc8] sm:$0xff]
        %v734 = vld [vmem:[#allocation2 + $0xd0] sm:$0xff]
        %v735 = vld [vmem:[#allocation2 + $0xd8] sm:$0xff]
        %v736 = vld [vmem:[#allocation2 + $0xe0] sm:$0xff]
        %v737 = vld [vmem:[#allocation2 + $0xe8] sm:$0xff]
        %v738 = vld [vmem:[#allocation2 + $0xf0] sm:$0xff]
        %v739 = vld [vmem:[#allocation2 + $0xf8] sm:$0xff]
        %v740 = vld [vmem:[%s2] sm:$0x1]
        %v742 = vlaneseq
        %v743 = vshrl.u32 %v742, 7
        %v744 = vsub.s32 0, %v743
        %v745 = vrot.slane %v740, %v744
        %v747 = vadd.f32 %v708, %v745
        %v748 = vadd.f32 %v709, %v745
        %v749 = vadd.f32 %v710, %v745
        %v750 = vadd.f32 %v711, %v745
        %v751 = vadd.f32 %v712, %v745
        %v752 = vadd.f32 %v713, %v745
        %v753 = vadd.f32 %v714, %v745
        %v754 = vadd.f32 %v715, %v745
        %v755 = vadd.f32 %v716, %v745
        %v756 = vadd.f32 %v717, %v745
        %v757 = vadd.f32 %v718, %v745
        %v758 = vadd.f32 %v719, %v745
        %v759 = vadd.f32 %v720, %v745
        %v760 = vadd.f32 %v721, %v745
        %v761 = vadd.f32 %v722, %v745
        %v762 = vadd.f32 %v723, %v745
        %v763 = vadd.f32 %v724, %v745
        %v764 = vadd.f32 %v725, %v745
        %v765 = vadd.f32 %v726, %v745
        %v766 = vadd.f32 %v727, %v745
        %v767 = vadd.f32 %v728, %v745
        %v768 = vadd.f32 %v729, %v745
        %v769 = vadd.f32 %v730, %v745
        %v770 = vadd.f32 %v731, %v745
        %v771 = vadd.f32 %v732, %v745
        %v772 = vadd.f32 %v733, %v745
        %v773 = vadd.f32 %v734, %v745
        %v774 = vadd.f32 %v735, %v745
        %v775 = vadd.f32 %v736, %v745
        %v776 = vadd.f32 %v737, %v745
        %v777 = vadd.f32 %v738, %v745
        %v778 = vadd.f32 %v739, %v745
        %vm779 = vcmp.ge.f32.partialorder %v747, 0.0
        %vm780 = vcmp.ge.f32.partialorder %v748, 0.0
        %vm781 = vcmp.ge.f32.partialorder %v749, 0.0
        %vm782 = vcmp.ge.f32.partialorder %v750, 0.0
        %vm783 = vcmp.ge.f32.partialorder %v751, 0.0
        %vm784 = vcmp.ge.f32.partialorder %v752, 0.0
        %vm785 = vcmp.ge.f32.partialorder %v753, 0.0
        %vm786 = vcmp.ge.f32.partialorder %v754, 0.0
        %vm787 = vcmp.ge.f32.partialorder %v755, 0.0
        %vm788 = vcmp.ge.f32.partialorder %v756, 0.0
        %vm789 = vcmp.ge.f32.partialorder %v757, 0.0
        %vm790 = vcmp.ge.f32.partialorder %v758, 0.0
        %vm791 = vcmp.ge.f32.partialorder %v759, 0.0
        %vm792 = vcmp.ge.f32.partialorder %v760, 0.0
        %vm793 = vcmp.ge.f32.partialorder %v761, 0.0
        %vm794 = vcmp.ge.f32.partialorder %v762, 0.0
        %vm795 = vcmp.ge.f32.partialorder %v763, 0.0
        %vm796 = vcmp.ge.f32.partialorder %v764, 0.0
        %vm797 = vcmp.ge.f32.partialorder %v765, 0.0
        %vm798 = vcmp.ge.f32.partialorder %v766, 0.0
        %vm799 = vcmp.ge.f32.partialorder %v767, 0.0
        %vm800 = vcmp.ge.f32.partialorder %v768, 0.0
        %vm801 = vcmp.ge.f32.partialorder %v769, 0.0
        %vm802 = vcmp.ge.f32.partialorder %v770, 0.0
        %vm803 = vcmp.ge.f32.partialorder %v771, 0.0
        %vm804 = vcmp.ge.f32.partialorder %v772, 0.0
        %vm805 = vcmp.ge.f32.partialorder %v773, 0.0
        %vm806 = vcmp.ge.f32.partialorder %v774, 0.0
        %vm807 = vcmp.ge.f32.partialorder %v775, 0.0
        %vm808 = vcmp.ge.f32.partialorder %v776, 0.0
        %vm809 = vcmp.ge.f32.partialorder %v777, 0.0
        %vm810 = vcmp.ge.f32.partialorder %v778, 0.0
        %v811 = vmul.f32 %v747, 0.2
        %v812 = vmul.f32 %v748, 0.2
        %v813 = vmul.f32 %v749, 0.2
        %v814 = vmul.f32 %v750, 0.2
        %v815 = vmul.f32 %v751, 0.2
        %v816 = vmul.f32 %v752, 0.2
        %v817 = vmul.f32 %v753, 0.2
        %v818 = vmul.f32 %v754, 0.2
        %v819 = vmul.f32 %v755, 0.2
        %v820 = vmul.f32 %v756, 0.2
        %v821 = vmul.f32 %v757, 0.2
        %v822 = vmul.f32 %v758, 0.2
        %v823 = vmul.f32 %v759, 0.2
        %v824 = vmul.f32 %v760, 0.2
        %v825 = vmul.f32 %v761, 0.2
        %v826 = vmul.f32 %v762, 0.2
        %v827 = vmul.f32 %v763, 0.2
        %v828 = vmul.f32 %v764, 0.2
        %v829 = vmul.f32 %v765, 0.2
        %v830 = vmul.f32 %v766, 0.2
        %v831 = vmul.f32 %v767, 0.2
        %v832 = vmul.f32 %v768, 0.2
        %v833 = vmul.f32 %v769, 0.2
        %v834 = vmul.f32 %v770, 0.2
        %v835 = vmul.f32 %v771, 0.2
        %v836 = vmul.f32 %v772, 0.2
        %v837 = vmul.f32 %v773, 0.2
        %v838 = vmul.f32 %v774, 0.2
        %v839 = vmul.f32 %v775, 0.2
        %v840 = vmul.f32 %v776, 0.2
        %v841 = vmul.f32 %v777, 0.2
        %v842 = vmul.f32 %v778, 0.2
        %v843 = vsel %vm779, %v747, %v811
        %v844 = vsel %vm780, %v748, %v812
        %v845 = vsel %vm781, %v749, %v813
        %v846 = vsel %vm782, %v750, %v814
        %v847 = vsel %vm783, %v751, %v815
        %v848 = vsel %vm784, %v752, %v816
        %v849 = vsel %vm785, %v753, %v817
        %v850 = vsel %vm786, %v754, %v818
        %v851 = vsel %vm787, %v755, %v819
        %v852 = vsel %vm788, %v756, %v820
        %v853 = vsel %vm789, %v757, %v821
        %v854 = vsel %vm790, %v758, %v822
        %v855 = vsel %vm791, %v759, %v823
        %v856 = vsel %vm792, %v760, %v824
        %v857 = vsel %vm793, %v761, %v825
        %v858 = vsel %vm794, %v762, %v826
        %v859 = vsel %vm795, %v763, %v827
        %v860 = vsel %vm796, %v764, %v828
        %v861 = vsel %vm797, %v765, %v829
        %v862 = vsel %vm798, %v766, %v830
        %v863 = vsel %vm799, %v767, %v831
        %v864 = vsel %vm800, %v768, %v832
        %v865 = vsel %vm801, %v769, %v833
        %v866 = vsel %vm802, %v770, %v834
        %v867 = vsel %vm803, %v771, %v835
        %v868 = vsel %vm804, %v772, %v836
        %v869 = vsel %vm805, %v773, %v837
        %v870 = vsel %vm806, %v774, %v838
        %v871 = vsel %vm807, %v775, %v839
        %v872 = vsel %vm808, %v776, %v840
        %v873 = vsel %vm809, %v777, %v841
        %v874 = vsel %vm810, %v778, %v842
        %v875 = vpack.c.bf16 %v844, %v843
        %v876 = vpack.c.bf16 %v846, %v845
        %v877 = vpack.c.bf16 %v848, %v847
        %v878 = vpack.c.bf16 %v850, %v849
        %v879 = vpack.c.bf16 %v852, %v851
        %v880 = vpack.c.bf16 %v854, %v853
        %v881 = vpack.c.bf16 %v856, %v855
        %v882 = vpack.c.bf16 %v858, %v857
        %v883 = vpack.c.bf16 %v860, %v859
        %v884 = vpack.c.bf16 %v862, %v861
        %v885 = vpack.c.bf16 %v864, %v863
        %v886 = vpack.c.bf16 %v866, %v865
        %v887 = vpack.c.bf16 %v868, %v867
        %v888 = vpack.c.bf16 %v870, %v869
        %v889 = vpack.c.bf16 %v872, %v871
        %v890 = vpack.c.bf16 %v874, %v873
        %v907 = vunpack.c.l.b16 %v875
        %v908 = vunpack.c.h.b16 %v875
        %v909 = vunpack.c.l.b16 %v876
        %v910 = vunpack.c.h.b16 %v876
        %v911 = vunpack.c.l.b16 %v877
        %v912 = vunpack.c.h.b16 %v877
        %v913 = vunpack.c.l.b16 %v878
        %v914 = vunpack.c.h.b16 %v878
        %v915 = vunpack.c.l.b16 %v879
        %v916 = vunpack.c.h.b16 %v879
        %v917 = vunpack.c.l.b16 %v880
        %v918 = vunpack.c.h.b16 %v880
        %v919 = vunpack.c.l.b16 %v881
        %v920 = vunpack.c.h.b16 %v881
        %v921 = vunpack.c.l.b16 %v882
        %v922 = vunpack.c.h.b16 %v882
        %v923 = vunpack.c.l.b16 %v883
        %v924 = vunpack.c.h.b16 %v883
        %v925 = vunpack.c.l.b16 %v884
        %v926 = vunpack.c.h.b16 %v884
        %v927 = vunpack.c.l.b16 %v885
        %v928 = vunpack.c.h.b16 %v885
        %v929 = vunpack.c.l.b16 %v886
        %v930 = vunpack.c.h.b16 %v886
        %v931 = vunpack.c.l.b16 %v887
        %v932 = vunpack.c.h.b16 %v887
        %v933 = vunpack.c.l.b16 %v888
        %v934 = vunpack.c.h.b16 %v888
        %v935 = vunpack.c.l.b16 %v889
        %v936 = vunpack.c.h.b16 %v889
        %v937 = vunpack.c.l.b16 %v890
        %v938 = vunpack.c.h.b16 %v890
        %v939 = vpack.c.b16 %v907, %v907
        %v940 = vpack.c.b16 %v908, %v908
        %v941 = vpack.c.b16 %v909, %v909
        %v942 = vpack.c.b16 %v910, %v910
        %v943 = vpack.c.b16 %v911, %v911
        %v944 = vpack.c.b16 %v912, %v912
        %v945 = vpack.c.b16 %v913, %v913
        %v946 = vpack.c.b16 %v914, %v914
        %v947 = vpack.c.b16 %v915, %v915
        %v948 = vpack.c.b16 %v916, %v916
        %v949 = vpack.c.b16 %v917, %v917
        %v950 = vpack.c.b16 %v918, %v918
        %v951 = vpack.c.b16 %v919, %v919
        %v952 = vpack.c.b16 %v920, %v920
        %v953 = vpack.c.b16 %v921, %v921
        %v954 = vpack.c.b16 %v922, %v922
        %v955 = vpack.c.b16 %v923, %v923
        %v956 = vpack.c.b16 %v924, %v924
        %v957 = vpack.c.b16 %v925, %v925
        %v958 = vpack.c.b16 %v926, %v926
        %v959 = vpack.c.b16 %v927, %v927
        %v960 = vpack.c.b16 %v928, %v928
        %v961 = vpack.c.b16 %v929, %v929
        %v962 = vpack.c.b16 %v930, %v930
        %v963 = vpack.c.b16 %v931, %v931
        %v964 = vpack.c.b16 %v932, %v932
        %v965 = vpack.c.b16 %v933, %v933
        %v966 = vpack.c.b16 %v934, %v934
        %v967 = vpack.c.b16 %v935, %v935
        %v968 = vpack.c.b16 %v936, %v936
        %v969 = vpack.c.b16 %v937, %v937
        %v970 = vpack.c.b16 %v938, %v938
        %1003 = vst [vmem:[%s217] sm:$0xf] %v939
        %1004 = vst [vmem:[%s217 + $0x4] sm:$0xf] %v940
        %1005 = vst [vmem:[%s217 + $0x8] sm:$0xf] %v941
        %1006 = vst [vmem:[%s217 + $0xc] sm:$0xf] %v942
        %1007 = vst [vmem:[%s217 + $0x10] sm:$0xf] %v943
        %1008 = vst [vmem:[%s217 + $0x14] sm:$0xf] %v944
        %1009 = vst [vmem:[%s217 + $0x18] sm:$0xf] %v945
        %1010 = vst [vmem:[%s217 + $0x1c] sm:$0xf] %v946
        %1011 = vst [vmem:[%s217 + $0x20] sm:$0xf] %v947
        %1012 = vst [vmem:[%s217 + $0x24] sm:$0xf] %v948
        %1013 = vst [vmem:[%s217 + $0x28] sm:$0xf] %v949
        %1014 = vst [vmem:[%s217 + $0x2c] sm:$0xf] %v950
        %1015 = vst [vmem:[%s217 + $0x30] sm:$0xf] %v951
        %1016 = vst [vmem:[%s217 + $0x34] sm:$0xf] %v952
        %1017 = vst [vmem:[%s217 + $0x38] sm:$0xf] %v953
        %1018 = vst [vmem:[%s217 + $0x3c] sm:$0xf] %v954
        %1019 = vst [vmem:[%s217 + $0x40] sm:$0xf] %v955
        %1020 = vst [vmem:[%s217 + $0x44] sm:$0xf] %v956
        %1021 = vst [vmem:[%s217 + $0x48] sm:$0xf] %v957
        %1022 = vst [vmem:[%s217 + $0x4c] sm:$0xf] %v958
        %1023 = vst [vmem:[%s217 + $0x50] sm:$0xf] %v959
        %1024 = vst [vmem:[%s217 + $0x54] sm:$0xf] %v960
        %1025 = vst [vmem:[%s217 + $0x58] sm:$0xf] %v961
        %1026 = vst [vmem:[%s217 + $0x5c] sm:$0xf] %v962
        %1027 = vst [vmem:[%s217 + $0x60] sm:$0xf] %v963
        %1028 = vst [vmem:[%s217 + $0x64] sm:$0xf] %v964
        %1029 = vst [vmem:[%s217 + $0x68] sm:$0xf] %v965
        %1030 = vst [vmem:[%s217 + $0x6c] sm:$0xf] %v966
        %1031 = vst [vmem:[%s217 + $0x70] sm:$0xf] %v967
        %1032 = vst [vmem:[%s217 + $0x74] sm:$0xf] %v968
        %1033 = vst [vmem:[%s217 + $0x78] sm:$0xf] %v969
        %1034 = vst [vmem:[%s217 + $0x7c] sm:$0xf] %v970
      $region40: #{dcgan_discriminator_forward.6} parent=31 // pred_fallthru
        _
      %s1035 = smul.u32 32, %s18
      %p1036 = scmp.lt.s32.totalorder %s1035, 63
      %s1037 = scalar_select %p1036, %s1035, 63
      %s1038 = smul.addr %s1037, 4
      %s1039 = scalar_lea.vmem %s3, %s1038
      // Predicated region
      $region41: #{dcgan_discriminator_forward.6} parent=31 // pred_check
        %p1040 = pneg %p119
      $region42: #{dcgan_discriminator_forward.6} parent=31 // pred_check_branch
        %1042 = sbr.rel (%p1040) target = $region44
      $region43: #{dcgan_discriminator_forward.6} parent=31 // pred_region
        %s1043 = smul.u32 32, %s18
      $region44: #{dcgan_discriminator_forward.6} parent=31 // pred_fallthru
        _
    $region32: #{dcgan_discriminator_forward.6} parent=5 // pred_fallthru
      _
    %p1044 = scmp.le.s32.totalorder 2, %s9
    // Predicated region
    $region45: #{dcgan_discriminator_forward.6} parent=5 // pred_check
      %p1045 = pneg %p1044
    $region46: #{dcgan_discriminator_forward.6} parent=5 // pred_check_branch
      %1047 = sbr.rel (%p1045) target = $region48
    $region47: #{dcgan_discriminator_forward.6} parent=5 // pred_region
      %s1048 = ssub.s32 %s9, 2
      // Predicated region
      $region49: #{dcgan_discriminator_forward.6} parent=47 // pred_check
        %p1049 = pneg %p125
      $region50: #{dcgan_discriminator_forward.6} parent=47 // pred_check_branch
        %1051 = sbr.rel (%p1049) target = $region52
      $region51: #{dcgan_discriminator_forward.6} parent=47 // pred_region
        %s1052 = smul.u32 32, %s20
        %p1053 = scmp.lt.s32.totalorder %s1052, 63
        %s1054 = scalar_select %p1053, %s1052, 63
        %s1055 = smul.addr %s1054, 4
        %s1056 = scalar_lea.vmem %s3, %s1055
      $region52: #{dcgan_discriminator_forward.6} parent=47 // pred_fallthru
        _
    $region48: #{dcgan_discriminator_forward.6} parent=5 // pred_fallthru
      _
  $region6: #{dcgan_discriminator_forward.6} parent=0 // loop_footer
    %s13 = sadd.s32 1, %s9
  $region7: #{dcgan_discriminator_forward.6} parent=0 // loop_footer_branch
    %8 = sbr.rel target = $region3
  $region8: #{dcgan_discriminator_forward.6} parent=0 // loop_exit
    _

// kernel: dcgan_discriminator_forward.8
$region0: #{dcgan_discriminator_forward.8}
  #allocation0 [shape = 'u32[]', space=smem, size = 0x4, offset = 0x4, fixed_abs, tag = 'smem constant byte address 0x4 - core index']
  #allocation1 [shape = 'u32[144,128]{1,0:T(1,128)}', space=vmem, size = 0x12000, scoped, tag = 'internal scratch']
  %s0 = inlined_call_operand.vmem [shape: f32[128,128], index: 0, kind: input, shape index: {}]
  %s1 = inlined_call_operand.vmem [shape: f32[2,128], index: 1, kind: input, shape index: {}]
  %s2 = inlined_call_operand.vmem [shape: f32[1,128], index: 2, kind: input, shape index: {}]
  %s3 = inlined_call_operand.vmem [shape: f32[1,128], index: 3, kind: input, shape index: {}]
  %s4 = inlined_call_operand.vmem [shape: bf16[128,128], index: 4, kind: output, shape index: {}]
  %s5 = sld [smem:[#allocation0]]
  $region26: #{dcgan_discriminator_forward.8} parent=0
    _
  %s7 = ssub.s32 1, %s5
  %s8 = scalar_select 0, %s7, %s5
  // Predicated region
  $region2: #{dcgan_discriminator_forward.8} parent=0 // pred_check
    _
  $region3: #{dcgan_discriminator_forward.8} parent=0 // pred_check_branch
    %10 = sbr.rel (0) target = $region5
  $region4: #{dcgan_discriminator_forward.8} parent=0 // pred_region
    _
  $region5: #{dcgan_discriminator_forward.8} parent=0 // pred_fallthru
    _
  // Predicated region
  $region6: #{dcgan_discriminator_forward.8} parent=0 // pred_check
    _
  $region7: #{dcgan_discriminator_forward.8} parent=0 // pred_check_branch
    %12 = sbr.rel (0) target = $region9
  $region8: #{dcgan_discriminator_forward.8} parent=0 // pred_region
    _
  $region9: #{dcgan_discriminator_forward.8} parent=0 // pred_fallthru
    _
  // Predicated region
  $region10: #{dcgan_discriminator_forward.8} parent=0 // pred_check
    _
  $region11: #{dcgan_discriminator_forward.8} parent=0 // pred_check_branch
    %14 = sbr.rel (0) target = $region13
  $region12: #{dcgan_discriminator_forward.8} parent=0 // pred_region
    _
  $region13: #{dcgan_discriminator_forward.8} parent=0 // pred_fallthru
    _
  // Predicated region
  $region14: #{dcgan_discriminator_forward.8} parent=0 // pred_check
    _
  $region15: #{dcgan_discriminator_forward.8} parent=0 // pred_check_branch
    %16 = sbr.rel (0) target = $region17
  $region16: #{dcgan_discriminator_forward.8} parent=0 // pred_region
    _
  $region17: #{dcgan_discriminator_forward.8} parent=0 // pred_fallthru
    _
  %v17 = vld [vmem:[%s1] sm:$0x1]
  %v18 = vmul.f32 %v17, 0.0078125
  %v19 = vld [vmem:[%s1 + $0x1] sm:$0x1]
  %v20 = vmul.f32 %v19, 0.0078125
  %v21 = vmul.f32 %v18, %v18
  %v22 = vsub.f32 %v20, %v21
  %v23 = vld [vmem:[%s2] sm:$0x1]
  %v24 = vadd.f32 %v22, 1e-05
  %v25 = vrsqrt.pop %v24
  %v26 = vmul.f32 %v23, %v25
  %v27 = vld [vmem:[%s3] sm:$0x1]
  %v28 = vmul.f32 %v18, %v26
  %v29 = vsub.f32 %v27, %v28
  %v30 = vld [vmem:[%s0] sm:$0xff]
  %v31 = vld [vmem:[%s0 + $0x8] sm:$0xff]
  %v32 = vld [vmem:[%s0 + $0x10] sm:$0xff]
  %v33 = vld [vmem:[%s0 + $0x18] sm:$0xff]
  %v34 = vld [vmem:[%s0 + $0x20] sm:$0xff]
  %v35 = vld [vmem:[%s0 + $0x28] sm:$0xff]
  %v36 = vld [vmem:[%s0 + $0x30] sm:$0xff]
  %v37 = vld [vmem:[%s0 + $0x38] sm:$0xff]
  %v38 = vld [vmem:[%s0 + $0x40] sm:$0xff]
  %v39 = vld [vmem:[%s0 + $0x48] sm:$0xff]
  %v40 = vld [vmem:[%s0 + $0x50] sm:$0xff]
  %v41 = vld [vmem:[%s0 + $0x58] sm:$0xff]
  %v42 = vld [vmem:[%s0 + $0x60] sm:$0xff]
  %v43 = vld [vmem:[%s0 + $0x68] sm:$0xff]
  %v44 = vld [vmem:[%s0 + $0x70] sm:$0xff]
  %v45 = vld [vmem:[%s0 + $0x78] sm:$0xff]
  %v47 = vlaneseq
  %v48 = vshrl.u32 %v47, 7
  %v49 = vsub.s32 0, %v48
  %v50 = vrot.slane %v26, %v49
  %v52 = vmul.f32 %v30, %v50
  %v53 = vmul.f32 %v31, %v50
  %v54 = vmul.f32 %v32, %v50
  %v55 = vmul.f32 %v33, %v50
  %v56 = vmul.f32 %v34, %v50
  %v57 = vmul.f32 %v35, %v50
  %v58 = vmul.f32 %v36, %v50
  %v59 = vmul.f32 %v37, %v50
  %v60 = vmul.f32 %v38, %v50
  %v61 = vmul.f32 %v39, %v50
  %v62 = vmul.f32 %v40, %v50
  %v63 = vmul.f32 %v41, %v50
  %v64 = vmul.f32 %v42, %v50
  %v65 = vmul.f32 %v43, %v50
  %v66 = vmul.f32 %v44, %v50
  %v67 = vmul.f32 %v45, %v50
  %v69 = vlaneseq
  %v70 = vshrl.u32 %v69, 7
  %v71 = vsub.s32 0, %v70
  %v72 = vrot.slane %v29, %v71
  %v74 = vadd.f32 %v52, %v72
  %v75 = vadd.f32 %v53, %v72
  %v76 = vadd.f32 %v54, %v72
  %v77 = vadd.f32 %v55, %v72
  %v78 = vadd.f32 %v56, %v72
  %v79 = vadd.f32 %v57, %v72
  %v80 = vadd.f32 %v58, %v72
  %v81 = vadd.f32 %v59, %v72
  %v82 = vadd.f32 %v60, %v72
  %v83 = vadd.f32 %v61, %v72
  %v84 = vadd.f32 %v62, %v72
  %v85 = vadd.f32 %v63, %v72
  %v86 = vadd.f32 %v64, %v72
  %v87 = vadd.f32 %v65, %v72
  %v88 = vadd.f32 %v66, %v72
  %v89 = vadd.f32 %v67, %v72
  %vm90 = vcmp.ge.f32.partialorder %v74, 0.0
  %vm91 = vcmp.ge.f32.partialorder %v75, 0.0
  %vm92 = vcmp.ge.f32.partialorder %v76, 0.0
  %vm93 = vcmp.ge.f32.partialorder %v77, 0.0
  %vm94 = vcmp.ge.f32.partialorder %v78, 0.0
  %vm95 = vcmp.ge.f32.partialorder %v79, 0.0
  %vm96 = vcmp.ge.f32.partialorder %v80, 0.0
  %vm97 = vcmp.ge.f32.partialorder %v81, 0.0
  %vm98 = vcmp.ge.f32.partialorder %v82, 0.0
  %vm99 = vcmp.ge.f32.partialorder %v83, 0.0
  %vm100 = vcmp.ge.f32.partialorder %v84, 0.0
  %vm101 = vcmp.ge.f32.partialorder %v85, 0.0
  %vm102 = vcmp.ge.f32.partialorder %v86, 0.0
  %vm103 = vcmp.ge.f32.partialorder %v87, 0.0
  %vm104 = vcmp.ge.f32.partialorder %v88, 0.0
  %vm105 = vcmp.ge.f32.partialorder %v89, 0.0
  %v106 = vmul.f32 %v74, 0.2
  %v107 = vmul.f32 %v75, 0.2
  %v108 = vmul.f32 %v76, 0.2
  %v109 = vmul.f32 %v77, 0.2
  %v110 = vmul.f32 %v78, 0.2
  %v111 = vmul.f32 %v79, 0.2
  %v112 = vmul.f32 %v80, 0.2
  %v113 = vmul.f32 %v81, 0.2
  %v114 = vmul.f32 %v82, 0.2
  %v115 = vmul.f32 %v83, 0.2
  %v116 = vmul.f32 %v84, 0.2
  %v117 = vmul.f32 %v85, 0.2
  %v118 = vmul.f32 %v86, 0.2
  %v119 = vmul.f32 %v87, 0.2
  %v120 = vmul.f32 %v88, 0.2
  %v121 = vmul.f32 %v89, 0.2
  %v122 = vsel %vm90, %v74, %v106
  %v123 = vsel %vm91, %v75, %v107
  %v124 = vsel %vm92, %v76, %v108
  %v125 = vsel %vm93, %v77, %v109
  %v126 = vsel %vm94, %v78, %v110
  %v127 = vsel %vm95, %v79, %v111
  %v128 = vsel %vm96, %v80, %v112
  %v129 = vsel %vm97, %v81, %v113
  %v130 = vsel %vm98, %v82, %v114
  %v131 = vsel %vm99, %v83, %v115
  %v132 = vsel %vm100, %v84, %v116
  %v133 = vsel %vm101, %v85, %v117
  %v134 = vsel %vm102, %v86, %v118
  %v135 = vsel %vm103, %v87, %v119
  %v136 = vsel %vm104, %v88, %v120
  %v137 = vsel %vm105, %v89, %v121
  %v138 = vpack.c.bf16 %v123, %v122
  %v139 = vpack.c.bf16 %v125, %v124
  %v140 = vpack.c.bf16 %v127, %v126
  %v141 = vpack.c.bf16 %v129, %v128
  %v142 = vpack.c.bf16 %v131, %v130
  %v143 = vpack.c.bf16 %v133, %v132
  %v144 = vpack.c.bf16 %v135, %v134
  %v145 = vpack.c.bf16 %v137, %v136
  %v154 = vunpack.c.l.b16 %v138
  %v155 = vunpack.c.h.b16 %v138
  %v156 = vunpack.c.l.b16 %v139
  %v157 = vunpack.c.h.b16 %v139
  %v158 = vunpack.c.l.b16 %v140
  %v159 = vunpack.c.h.b16 %v140
  %v160 = vunpack.c.l.b16 %v141
  %v161 = vunpack.c.h.b16 %v141
  %v162 = vunpack.c.l.b16 %v142
  %v163 = vunpack.c.h.b16 %v142
  %v164 = vunpack.c.l.b16 %v143
  %v165 = vunpack.c.h.b16 %v143
  %v166 = vunpack.c.l.b16 %v144
  %v167 = vunpack.c.h.b16 %v144
  %v168 = vunpack.c.l.b16 %v145
  %v169 = vunpack.c.h.b16 %v145
  %v170 = vpack.c.b16 %v154, %v154
  %v171 = vpack.c.b16 %v155, %v155
  %v172 = vpack.c.b16 %v156, %v156
  %v173 = vpack.c.b16 %v157, %v157
  %v174 = vpack.c.b16 %v158, %v158
  %v175 = vpack.c.b16 %v159, %v159
  %v176 = vpack.c.b16 %v160, %v160
  %v177 = vpack.c.b16 %v161, %v161
  %v178 = vpack.c.b16 %v162, %v162
  %v179 = vpack.c.b16 %v163, %v163
  %v180 = vpack.c.b16 %v164, %v164
  %v181 = vpack.c.b16 %v165, %v165
  %v182 = vpack.c.b16 %v166, %v166
  %v183 = vpack.c.b16 %v167, %v167
  %v184 = vpack.c.b16 %v168, %v168
  %v185 = vpack.c.b16 %v169, %v169
  %202 = vst [vmem:[%s4] sm:$0xf] %v170
  %203 = vst [vmem:[%s4 + $0x4] sm:$0xf] %v171
  %204 = vst [vmem:[%s4 + $0x8] sm:$0xf] %v172
  %205 = vst [vmem:[%s4 + $0xc] sm:$0xf] %v173
  %206 = vst [vmem:[%s4 + $0x10] sm:$0xf] %v174
  %207 = vst [vmem:[%s4 + $0x14] sm:$0xf] %v175
  %208 = vst [vmem:[%s4 + $0x18] sm:$0xf] %v176
  %209 = vst [vmem:[%s4 + $0x1c] sm:$0xf] %v177
  %210 = vst [vmem:[%s4 + $0x20] sm:$0xf] %v178
  %211 = vst [vmem:[%s4 + $0x24] sm:$0xf] %v179
  %212 = vst [vmem:[%s4 + $0x28] sm:$0xf] %v180
  %213 = vst [vmem:[%s4 + $0x2c] sm:$0xf] %v181
  %214 = vst [vmem:[%s4 + $0x30] sm:$0xf] %v182
  %215 = vst [vmem:[%s4 + $0x34] sm:$0xf] %v183
  %216 = vst [vmem:[%s4 + $0x38] sm:$0xf] %v184
  %217 = vst [vmem:[%s4 + $0x3c] sm:$0xf] %v185
  // Predicated region
  $region18: #{dcgan_discriminator_forward.8} parent=0 // pred_check
    _
  $region19: #{dcgan_discriminator_forward.8} parent=0 // pred_check_branch
    %219 = sbr.rel (0) target = $region21
  $region20: #{dcgan_discriminator_forward.8} parent=0 // pred_region
    _
  $region21: #{dcgan_discriminator_forward.8} parent=0 // pred_fallthru
    _
  // Predicated region
  $region22: #{dcgan_discriminator_forward.8} parent=0 // pred_check
    _
  $region23: #{dcgan_discriminator_forward.8} parent=0 // pred_check_branch
    %221 = sbr.rel (0) target = $region25
  $region24: #{dcgan_discriminator_forward.8} parent=0 // pred_region
    _
  $region25: #{dcgan_discriminator_forward.8} parent=0 // pred_fallthru
    _

// kernel: dcgan_discriminator_forward.7
$region0: #{dcgan_discriminator_forward.7}
  #allocation0 [shape = 'u32[]', space=smem, size = 0x4, offset = 0x4, fixed_abs, tag = 'smem constant byte address 0x4 - core index']
  #allocation1 [shape = 'u32[144,128]{1,0:T(1,128)}', space=vmem, size = 0x12000, scoped, tag = 'internal scratch']
  #allocation2 [shape = 'f32[128,128]{1,0:T(8,128)}', space=vmem, size = 0x10000, scoped, tag = 'scratch operand']
  %s0 = inlined_call_operand.vmem [shape: bf16[128,256], index: 0, kind: input, shape index: {}]
  %s1 = inlined_call_operand.vmem [shape: bf16[256,128], index: 1, kind: input, shape index: {}]
  %s2 = inlined_call_operand.vmem [shape: f32[1,128], index: 2, kind: input, shape index: {}]
  %s3 = inlined_call_operand.vmem [shape: f32[128,128], index: 3, kind: output, shape index: {0}]
  %s4 = inlined_call_operand.vmem [shape: f32[2,128], index: 4, kind: output, shape index: {1}]
  %5 = xla_tuple %s3, %s4
  %s6 = sld [smem:[#allocation0]]
  $region42: #{dcgan_discriminator_forward.7} parent=0
    _
  %s8 = ssub.s32 1, %s6
  %s9 = scalar_select 0, %s8, %s6
  // Predicated region
  $region2: #{dcgan_discriminator_forward.7} parent=0 // pred_check
    _
  $region3: #{dcgan_discriminator_forward.7} parent=0 // pred_check_branch
    %11 = sbr.rel (0) target = $region5
  $region4: #{dcgan_discriminator_forward.7} parent=0 // pred_region
    _
  $region5: #{dcgan_discriminator_forward.7} parent=0 // pred_fallthru
    _
  // Predicated region
  $region6: #{dcgan_discriminator_forward.7} parent=0 // pred_check
    _
  $region7: #{dcgan_discriminator_forward.7} parent=0 // pred_check_branch
    %13 = sbr.rel (0) target = $region9
  $region8: #{dcgan_discriminator_forward.7} parent=0 // pred_region
    _
  $region9: #{dcgan_discriminator_forward.7} parent=0 // pred_fallthru
    _
  // Predicated region
  $region10: #{dcgan_discriminator_forward.7} parent=0 // pred_check
    _
  $region11: #{dcgan_discriminator_forward.7} parent=0 // pred_check_branch
    %15 = sbr.rel (0) target = $region13
  $region12: #{dcgan_discriminator_forward.7} parent=0 // pred_region
    _
  $region13: #{dcgan_discriminator_forward.7} parent=0 // pred_fallthru
    _
  %p17 = scmp.eq.s32.totalorder 0, 0
  %p18 = scmp.eq.s32.totalorder 0, 0
  %p19 = pnand %p17, %p18
  %p20 = pneg %p19
  // Predicated region
  $region14: #{dcgan_discriminator_forward.7} parent=0 // pred_check
    _
  $region15: #{dcgan_discriminator_forward.7} parent=0 // pred_check_branch
    %22 = sbr.rel (%p19) target = $region17
  $region16: #{dcgan_discriminator_forward.7} parent=0 // pred_region
    %23 = vst [vmem:[%s4] sm:$0x3] 0.0
  $region17: #{dcgan_discriminator_forward.7} parent=0 // pred_fallthru
    _
  // Predicated region
  $region18: #{dcgan_discriminator_forward.7} parent=0 // pred_check
    %p24 = pneg %p18
  $region19: #{dcgan_discriminator_forward.7} parent=0 // pred_check_branch
    %26 = sbr.rel (%p24) target = $region21
  $region20: #{dcgan_discriminator_forward.7} parent=0 // pred_region
    %27 = vst [vmem:[#allocation2] sm:$0xff] 0.0
    %28 = vst [vmem:[#allocation2 + $0x8] sm:$0xff] 0.0
    %29 = vst [vmem:[#allocation2 + $0x10] sm:$0xff] 0.0
    %30 = vst [vmem:[#allocation2 + $0x18] sm:$0xff] 0.0
    %31 = vst [vmem:[#allocation2 + $0x20] sm:$0xff] 0.0
    %32 = vst [vmem:[#allocation2 + $0x28] sm:$0xff] 0.0
    %33 = vst [vmem:[#allocation2 + $0x30] sm:$0xff] 0.0
    %34 = vst [vmem:[#allocation2 + $0x38] sm:$0xff] 0.0
    %35 = vst [vmem:[#allocation2 + $0x40] sm:$0xff] 0.0
    %36 = vst [vmem:[#allocation2 + $0x48] sm:$0xff] 0.0
    %37 = vst [vmem:[#allocation2 + $0x50] sm:$0xff] 0.0
    %38 = vst [vmem:[#allocation2 + $0x58] sm:$0xff] 0.0
    %39 = vst [vmem:[#allocation2 + $0x60] sm:$0xff] 0.0
    %40 = vst [vmem:[#allocation2 + $0x68] sm:$0xff] 0.0
    %41 = vst [vmem:[#allocation2 + $0x70] sm:$0xff] 0.0
    %42 = vst [vmem:[#allocation2 + $0x78] sm:$0xff] 0.0
  $region21: #{dcgan_discriminator_forward.7} parent=0 // pred_fallthru
    _
  %v43 = vld [vmem:[#allocation2] sm:$0xff]
  %v44 = vld [vmem:[#allocation2 + $0x8] sm:$0xff]
  %v45 = vld [vmem:[#allocation2 + $0x10] sm:$0xff]
  %v46 = vld [vmem:[#allocation2 + $0x18] sm:$0xff]
  %v47 = vld [vmem:[#allocation2 + $0x20] sm:$0xff]
  %v48 = vld [vmem:[#allocation2 + $0x28] sm:$0xff]
  %v49 = vld [vmem:[#allocation2 + $0x30] sm:$0xff]
  %v50 = vld [vmem:[#allocation2 + $0x38] sm:$0xff]
  %v51 = vld [vmem:[#allocation2 + $0x40] sm:$0xff]
  %v52 = vld [vmem:[#allocation2 + $0x48] sm:$0xff]
  %v53 = vld [vmem:[#allocation2 + $0x50] sm:$0xff]
  %v54 = vld [vmem:[#allocation2 + $0x58] sm:$0xff]
  %v55 = vld [vmem:[#allocation2 + $0x60] sm:$0xff]
  %v56 = vld [vmem:[#allocation2 + $0x68] sm:$0xff]
  %v57 = vld [vmem:[#allocation2 + $0x70] sm:$0xff]
  %v58 = vld [vmem:[#allocation2 + $0x78] sm:$0xff]
  %v59 = vld [vmem:[%s0] sm:$0xff]
  %v60 = vld [vmem:[%s0 + $0x8] sm:$0xff]
  %v61 = vld [vmem:[%s0 + $0x10] sm:$0xff]
  %v62 = vld [vmem:[%s0 + $0x18] sm:$0xff]
  %v63 = vld [vmem:[%s0 + $0x20] sm:$0xff]
  %v64 = vld [vmem:[%s0 + $0x28] sm:$0xff]
  %v65 = vld [vmem:[%s0 + $0x30] sm:$0xff]
  %v66 = vld [vmem:[%s0 + $0x38] sm:$0xff]
  %v67 = vld [vmem:[%s0 + $0x40] sm:$0xff]
  %v68 = vld [vmem:[%s0 + $0x48] sm:$0xff]
  %v69 = vld [vmem:[%s0 + $0x50] sm:$0xff]
  %v70 = vld [vmem:[%s0 + $0x58] sm:$0xff]
  %v71 = vld [vmem:[%s0 + $0x60] sm:$0xff]
  %v72 = vld [vmem:[%s0 + $0x68] sm:$0xff]
  %v73 = vld [vmem:[%s0 + $0x70] sm:$0xff]
  %v74 = vld [vmem:[%s0 + $0x78] sm:$0xff]
  %v75 = vld [vmem:[%s1] sm:$0xf]
  %v76 = vld [vmem:[%s1 + $0x4] sm:$0xf]
  %v77 = vld [vmem:[%s1 + $0x8] sm:$0xf]
  %v78 = vld [vmem:[%s1 + $0xc] sm:$0xf]
  %v79 = vld [vmem:[%s1 + $0x10] sm:$0xf]
  %v80 = vld [vmem:[%s1 + $0x14] sm:$0xf]
  %v81 = vld [vmem:[%s1 + $0x18] sm:$0xf]
  %v82 = vld [vmem:[%s1 + $0x1c] sm:$0xf]
  %v83 = vld [vmem:[%s1 + $0x20] sm:$0xf]
  %v84 = vld [vmem:[%s1 + $0x24] sm:$0xf]
  %v85 = vld [vmem:[%s1 + $0x28] sm:$0xf]
  %v86 = vld [vmem:[%s1 + $0x2c] sm:$0xf]
  %v87 = vld [vmem:[%s1 + $0x30] sm:$0xf]
  %v88 = vld [vmem:[%s1 + $0x34] sm:$0xf]
  %v89 = vld [vmem:[%s1 + $0x38] sm:$0xf]
  %v90 = vld [vmem:[%s1 + $0x3c] sm:$0xf]
  %v91 = vld [vmem:[%s1 + $0x40] sm:$0xf]
  %v92 = vld [vmem:[%s1 + $0x44] sm:$0xf]
  %v93 = vld [vmem:[%s1 + $0x48] sm:$0xf]
  %v94 = vld [vmem:[%s1 + $0x4c] sm:$0xf]
  %v95 = vld [vmem:[%s1 + $0x50] sm:$0xf]
  %v96 = vld [vmem:[%s1 + $0x54] sm:$0xf]
  %v97 = vld [vmem:[%s1 + $0x58] sm:$0xf]
  %v98 = vld [vmem:[%s1 + $0x5c] sm:$0xf]
  %v99 = vld [vmem:[%s1 + $0x60] sm:$0xf]
  %v100 = vld [vmem:[%s1 + $0x64] sm:$0xf]
  %v101 = vld [vmem:[%s1 + $0x68] sm:$0xf]
  %v102 = vld [vmem:[%s1 + $0x6c] sm:$0xf]
  %v103 = vld [vmem:[%s1 + $0x70] sm:$0xf]
  %v104 = vld [vmem:[%s1 + $0x74] sm:$0xf]
  %v105 = vld [vmem:[%s1 + $0x78] sm:$0xf]
  %v106 = vld [vmem:[%s1 + $0x7c] sm:$0xf]
  %v123 = vunpack.c.l.b16 %v59
  %v124 = vunpack.c.h.b16 %v59
  %v125 = vunpack.c.l.b16 %v60
  %v126 = vunpack.c.h.b16 %v60
  %v127 = vunpack.c.l.b16 %v61
  %v128 = vunpack.c.h.b16 %v61
  %v129 = vunpack.c.l.b16 %v62
  %v130 = vunpack.c.h.b16 %v62
  %v131 = vunpack.c.l.b16 %v63
  %v132 = vunpack.c.h.b16 %v63
  %v133 = vunpack.c.l.b16 %v64
  %v134 = vunpack.c.h.b16 %v64
  %v135 = vunpack.c.l.b16 %v65
  %v136 = vunpack.c.h.b16 %v65
  %v137 = vunpack.c.l.b16 %v66
  %v138 = vunpack.c.h.b16 %v66
  %v139 = vunpack.c.l.b16 %v67
  %v140 = vunpack.c.h.b16 %v67
  %v141 = vunpack.c.l.b16 %v68
  %v142 = vunpack.c.h.b16 %v68
  %v143 = vunpack.c.l.b16 %v69
  %v144 = vunpack.c.h.b16 %v69
  %v145 = vunpack.c.l.b16 %v70
  %v146 = vunpack.c.h.b16 %v70
  %v147 = vunpack.c.l.b16 %v71
  %v148 = vunpack.c.h.b16 %v71
  %v149 = vunpack.c.l.b16 %v72
  %v150 = vunpack.c.h.b16 %v72
  %v151 = vunpack.c.l.b16 %v73
  %v152 = vunpack.c.h.b16 %v73
  %v153 = vunpack.c.l.b16 %v74
  %v154 = vunpack.c.h.b16 %v74
  %v155 = vpack.c.b16 %v125, %v123
  %v156 = vpack.c.b16 %v126, %v124
  %v157 = vpack.c.b16 %v129, %v127
  %v158 = vpack.c.b16 %v130, %v128
  %v159 = vpack.c.b16 %v133, %v131
  %v160 = vpack.c.b16 %v134, %v132
  %v161 = vpack.c.b16 %v137, %v135
  %v162 = vpack.c.b16 %v138, %v136
  %v163 = vpack.c.b16 %v141, %v139
  %v164 = vpack.c.b16 %v142, %v140
  %v165 = vpack.c.b16 %v145, %v143
  %v166 = vpack.c.b16 %v146, %v144
  %v167 = vpack.c.b16 %v149, %v147
  %v168 = vpack.c.b16 %v150, %v148
  %v169 = vpack.c.b16 %v153, %v151
  %v170 = vpack.c.b16 %v154, %v152
  %v219 = vunpack.c.l.b16 %v75
  %v220 = vunpack.c.l.b16 %v76
  %v221 = vunpack.c.l.b16 %v77
  %v222 = vunpack.c.l.b16 %v78
  %v223 = vunpack.c.l.b16 %v79
  %v224 = vunpack.c.l.b16 %v80
  %v225 = vunpack.c.l.b16 %v81
  %v226 = vunpack.c.l.b16 %v82
  %v227 = vunpack.c.l.b16 %v83
  %v228 = vunpack.c.l.b16 %v84
  %v229 = vunpack.c.l.b16 %v85
  %v230 = vunpack.c.l.b16 %v86
  %v231 = vunpack.c.l.b16 %v87
  %v232 = vunpack.c.l.b16 %v88
  %v233 = vunpack.c.l.b16 %v89
  %v234 = vunpack.c.l.b16 %v90
  %v235 = vunpack.c.l.b16 %v91
  %v236 = vunpack.c.l.b16 %v92
  %v237 = vunpack.c.l.b16 %v93
  %v238 = vunpack.c.l.b16 %v94
  %v239 = vunpack.c.l.b16 %v95
  %v240 = vunpack.c.l.b16 %v96
  %v241 = vunpack.c.l.b16 %v97
  %v242 = vunpack.c.l.b16 %v98
  %v243 = vunpack.c.l.b16 %v99
  %v244 = vunpack.c.l.b16 %v100
  %v245 = vunpack.c.l.b16 %v101
  %v246 = vunpack.c.l.b16 %v102
  %v247 = vunpack.c.l.b16 %v103
  %v248 = vunpack.c.l.b16 %v104
  %v249 = vunpack.c.l.b16 %v105
  %v250 = vunpack.c.l.b16 %v106
  %v251 = vpack.c.b16 %v220, %v219
  %v252 = vpack.c.b16 %v222, %v221
  %v253 = vpack.c.b16 %v224, %v223
  %v254 = vpack.c.b16 %v226, %v225
  %v255 = vpack.c.b16 %v228, %v227
  %v256 = vpack.c.b16 %v230, %v229
  %v257 = vpack.c.b16 %v232, %v231
  %v258 = vpack.c.b16 %v234, %v233
  %v259 = vpack.c.b16 %v236, %v235
  %v260 = vpack.c.b16 %v238, %v237
  %v261 = vpack.c.b16 %v240, %v239
  %v262 = vpack.c.b16 %v242, %v241
  %v263 = vpack.c.b16 %v244, %v243
  %v264 = vpack.c.b16 %v246, %v245
  %v265 = vpack.c.b16 %v248, %v247
  %v266 = vpack.c.b16 %v250, %v249
  %283 = vmatprep.subr.bf16.mxu0 0
  %284 = vmatpush1.bf16.msra.mxu0 %v258
  %285 = vmatprep.subr.bf16.mxu0 0
  %286 = vmatpush1.bf16.msra.mxu0 %v257
  %287 = vmatprep.subr.bf16.mxu0 0
  %288 = vmatpush1.bf16.msra.mxu0 %v256
  %289 = vmatprep.subr.bf16.mxu0 0
  %290 = vmatpush1.bf16.msra.mxu0 %v255
  %291 = vmatprep.subr.bf16.mxu0 0
  %292 = vmatpush1.bf16.msra.mxu0 %v254
  %293 = vmatprep.subr.bf16.mxu0 0
  %294 = vmatpush1.bf16.msra.mxu0 %v253
  %295 = vmatprep.subr.bf16.mxu0 0
  %296 = vmatpush1.bf16.msra.mxu0 %v252
  %297 = vmatprep.subr.bf16.mxu0 0
  %298 = vmatpush1.bf16.msra.mxu0 %v251
  %299 = vmatprep.subr.bf16.mxu0 0
  %300 = vmatpush2.bf16.msra.mxu0 %v266
  %301 = vmatprep.subr.bf16.mxu0 0
  %302 = vmatpush2.bf16.msra.mxu0 %v265
  %303 = vmatprep.subr.bf16.mxu0 0
  %304 = vmatpush2.bf16.msra.mxu0 %v264
  %305 = vmatprep.subr.bf16.mxu0 0
  %306 = vmatpush2.bf16.msra.mxu0 %v263
  %307 = vmatprep.subr.bf16.mxu0 0
  %308 = vmatpush2.bf16.msra.mxu0 %v262
  %309 = vmatprep.subr.bf16.mxu0 0
  %310 = vmatpush2.bf16.msra.mxu0 %v261
  %311 = vmatprep.subr.bf16.mxu0 0
  %312 = vmatpush2.bf16.msra.mxu0 %v260
  %313 = vmatprep.subr.bf16.mxu0 0
  %314 = vmatpush2.bf16.msra.mxu0 %v259
  %315 = vmatprep.mubr.bf16.mxu0 %v156
  %316 = vmatmul.mubr.bf16.gmra.mxu0 %v155
  %v317 = vpop.f32.mrf.mxu0
  %v318 = vadd.f32 0.0, %v317
  %v319 = vpop.f32.mrf.mxu0
  %v320 = vpop.f32.mrf.mxu0
  %v321 = vadd.f32 0.0, %v320
  %v322 = vpop.f32.mrf.mxu0
  %323 = vmatprep.mubr.bf16.mxu0 %v158
  %324 = vmatmul.mubr.bf16.gmra.mxu0 %v157
  %v325 = vpop.f32.mrf.mxu0
  %v326 = vadd.f32 0.0, %v325
  %v327 = vpop.f32.mrf.mxu0
  %v328 = vpop.f32.mrf.mxu0
  %v329 = vadd.f32 0.0, %v328
  %v330 = vpop.f32.mrf.mxu0
  %331 = vmatprep.mubr.bf16.mxu0 %v160
  %332 = vmatmul.mubr.bf16.gmra.mxu0 %v159
  %v333 = vpop.f32.mrf.mxu0
  %v334 = vadd.f32 0.0, %v333
  %v335 = vpop.f32.mrf.mxu0
  %v336 = vpop.f32.mrf.mxu0
  %v337 = vadd.f32 0.0, %v336
  %v338 = vpop.f32.mrf.mxu0
  %339 = vmatprep.mubr.bf16.mxu0 %v162
  %340 = vmatmul.mubr.bf16.gmra.mxu0 %v161
  %v341 = vpop.f32.mrf.mxu0
  %v342 = vadd.f32 0.0, %v341
  %v343 = vpop.f32.mrf.mxu0
  %v344 = vpop.f32.mrf.mxu0
  %v345 = vadd.f32 0.0, %v344
  %v346 = vpop.f32.mrf.mxu0
  %347 = vmatprep.mubr.bf16.mxu0 %v164
  %348 = vmatmul.mubr.bf16.gmra.mxu0 %v163
  %v349 = vpop.f32.mrf.mxu0
  %v350 = vadd.f32 0.0, %v349
  %v351 = vpop.f32.mrf.mxu0
  %v352 = vpop.f32.mrf.mxu0
  %v353 = vadd.f32 0.0, %v352
  %v354 = vpop.f32.mrf.mxu0
  %355 = vmatprep.mubr.bf16.mxu0 %v166
  %356 = vmatmul.mubr.bf16.gmra.mxu0 %v165
  %v357 = vpop.f32.mrf.mxu0
  %v358 = vadd.f32 0.0, %v357
  %v359 = vpop.f32.mrf.mxu0
  %v360 = vpop.f32.mrf.mxu0
  %v361 = vadd.f32 0.0, %v360
  %v362 = vpop.f32.mrf.mxu0
  %363 = vmatprep.mubr.bf16.mxu0 %v168
  %364 = vmatmul.mubr.bf16.gmra.mxu0 %v167
  %v365 = vpop.f32.mrf.mxu0
  %v366 = vadd.f32 0.0, %v365
  %v367 = vpop.f32.mrf.mxu0
  %v368 = vpop.f32.mrf.mxu0
  %v369 = vadd.f32 0.0, %v368
  %v370 = vpop.f32.mrf.mxu0
  %371 = vmatprep.mubr.bf16.mxu0 %v170
  %372 = vmatmul.mubr.bf16.gmra.mxu0 %v169
  %v373 = vpop.f32.mrf.mxu0
  %v374 = vadd.f32 0.0, %v373
  %v375 = vpop.f32.mrf.mxu0
  %v376 = vpop.f32.mrf.mxu0
  %v377 = vadd.f32 0.0, %v376
  %v378 = vpop.f32.mrf.mxu0
  %379 = vdwg.mxu0
  %v380 = vadd.f32 %v43, %v318
  %v381 = vadd.f32 %v44, %v321
  %v382 = vadd.f32 %v45, %v326
  %v383 = vadd.f32 %v46, %v329
  %v384 = vadd.f32 %v47, %v334
  %v385 = vadd.f32 %v48, %v337
  %v386 = vadd.f32 %v49, %v342
  %v387 = vadd.f32 %v50, %v345
  %v388 = vadd.f32 %v51, %v350
  %v389 = vadd.f32 %v52, %v353
  %v390 = vadd.f32 %v53, %v358
  %v391 = vadd.f32 %v54, %v361
  %v392 = vadd.f32 %v55, %v366
  %v393 = vadd.f32 %v56, %v369
  %v394 = vadd.f32 %v57, %v374
  %v395 = vadd.f32 %v58, %v377
  %396 = vst [vmem:[#allocation2] sm:$0xff] %v380
  %397 = vst [vmem:[#allocation2 + $0x8] sm:$0xff] %v381
  %398 = vst [vmem:[#allocation2 + $0x10] sm:$0xff] %v382
  %399 = vst [vmem:[#allocation2 + $0x18] sm:$0xff] %v383
  %400 = vst [vmem:[#allocation2 + $0x20] sm:$0xff] %v384
  %401 = vst [vmem:[#allocation2 + $0x28] sm:$0xff] %v385
  %402 = vst [vmem:[#allocation2 + $0x30] sm:$0xff] %v386
  %403 = vst [vmem:[#allocation2 + $0x38] sm:$0xff] %v387
  %404 = vst [vmem:[#allocation2 + $0x40] sm:$0xff] %v388
  %405 = vst [vmem:[#allocation2 + $0x48] sm:$0xff] %v389
  %406 = vst [vmem:[#allocation2 + $0x50] sm:$0xff] %v390
  %407 = vst [vmem:[#allocation2 + $0x58] sm:$0xff] %v391
  %408 = vst [vmem:[#allocation2 + $0x60] sm:$0xff] %v392
  %409 = vst [vmem:[#allocation2 + $0x68] sm:$0xff] %v393
  %410 = vst [vmem:[#allocation2 + $0x70] sm:$0xff] %v394
  %411 = vst [vmem:[#allocation2 + $0x78] sm:$0xff] %v395
  // Predicated region
  $region22: #{dcgan_discriminator_forward.7} parent=0 // pred_check
    %p412 = pneg %p18
  $region23: #{dcgan_discriminator_forward.7} parent=0 // pred_check_branch
    %414 = sbr.rel (%p412) target = $region25
  $region24: #{dcgan_discriminator_forward.7} parent=0 // pred_region
    %v415 = vld [vmem:[#allocation2] sm:$0xff]
    %v416 = vld [vmem:[#allocation2 + $0x8] sm:$0xff]
    %v417 = vld [vmem:[#allocation2 + $0x10] sm:$0xff]
    %v418 = vld [vmem:[#allocation2 + $0x18] sm:$0xff]
    %v419 = vld [vmem:[#allocation2 + $0x20] sm:$0xff]
    %v420 = vld [vmem:[#allocation2 + $0x28] sm:$0xff]
    %v421 = vld [vmem:[#allocation2 + $0x30] sm:$0xff]
    %v422 = vld [vmem:[#allocation2 + $0x38] sm:$0xff]
    %v423 = vld [vmem:[#allocation2 + $0x40] sm:$0xff]
    %v424 = vld [vmem:[#allocation2 + $0x48] sm:$0xff]
    %v425 = vld [vmem:[#allocation2 + $0x50] sm:$0xff]
    %v426 = vld [vmem:[#allocation2 + $0x58] sm:$0xff]
    %v427 = vld [vmem:[#allocation2 + $0x60] sm:$0xff]
    %v428 = vld [vmem:[#allocation2 + $0x68] sm:$0xff]
    %v429 = vld [vmem:[#allocation2 + $0x70] sm:$0xff]
    %v430 = vld [vmem:[#allocation2 + $0x78] sm:$0xff]
    %v431 = vld [vmem:[%s2] sm:$0x1]
    %v433 = vlaneseq
    %v434 = vshrl.u32 %v433, 7
    %v435 = vsub.s32 0, %v434
    %v436 = vrot.slane %v431, %v435
    %v438 = vadd.f32 %v415, %v436
    %v439 = vadd.f32 %v416, %v436
    %v440 = vadd.f32 %v417, %v436
    %v441 = vadd.f32 %v418, %v436
    %v442 = vadd.f32 %v419, %v436
    %v443 = vadd.f32 %v420, %v436
    %v444 = vadd.f32 %v421, %v436
    %v445 = vadd.f32 %v422, %v436
    %v446 = vadd.f32 %v423, %v436
    %v447 = vadd.f32 %v424, %v436
    %v448 = vadd.f32 %v425, %v436
    %v449 = vadd.f32 %v426, %v436
    %v450 = vadd.f32 %v427, %v436
    %v451 = vadd.f32 %v428, %v436
    %v452 = vadd.f32 %v429, %v436
    %v453 = vadd.f32 %v430, %v436
    %454 = vst [vmem:[%s3] sm:$0xff] %v438
    %455 = vst [vmem:[%s3 + $0x8] sm:$0xff] %v439
    %456 = vst [vmem:[%s3 + $0x10] sm:$0xff] %v440
    %457 = vst [vmem:[%s3 + $0x18] sm:$0xff] %v441
    %458 = vst [vmem:[%s3 + $0x20] sm:$0xff] %v442
    %459 = vst [vmem:[%s3 + $0x28] sm:$0xff] %v443
    %460 = vst [vmem:[%s3 + $0x30] sm:$0xff] %v444
    %461 = vst [vmem:[%s3 + $0x38] sm:$0xff] %v445
    %462 = vst [vmem:[%s3 + $0x40] sm:$0xff] %v446
    %463 = vst [vmem:[%s3 + $0x48] sm:$0xff] %v447
    %464 = vst [vmem:[%s3 + $0x50] sm:$0xff] %v448
    %465 = vst [vmem:[%s3 + $0x58] sm:$0xff] %v449
    %466 = vst [vmem:[%s3 + $0x60] sm:$0xff] %v450
    %467 = vst [vmem:[%s3 + $0x68] sm:$0xff] %v451
    %468 = vst [vmem:[%s3 + $0x70] sm:$0xff] %v452
    %469 = vst [vmem:[%s3 + $0x78] sm:$0xff] %v453
    %v470 = vadd.f32 %v438, %v439
    %v471 = vadd.f32 %v470, %v440
    %v472 = vadd.f32 %v471, %v441
    %v473 = vadd.f32 %v472, %v442
    %v474 = vadd.f32 %v473, %v443
    %v475 = vadd.f32 %v474, %v444
    %v476 = vadd.f32 %v475, %v445
    %v477 = vadd.f32 %v476, %v446
    %v478 = vadd.f32 %v477, %v447
    %v479 = vadd.f32 %v478, %v448
    %v480 = vadd.f32 %v479, %v449
    %v481 = vadd.f32 %v480, %v450
    %v482 = vadd.f32 %v481, %v451
    %v483 = vadd.f32 %v482, %v452
    %v484 = vadd.f32 %v483, %v453
    %v485 = vrot.slane %v484, 4
    %v486 = vadd.f32 %v484, %v485
    %v487 = vrot.slane %v486, 2
    %v488 = vadd.f32 %v486, %v487
    %v489 = vrot.slane %v488, 1
    %v490 = vadd.f32 %v488, %v489
    %v491 = vmul.f32 %v438, %v438
    %v492 = vmul.f32 %v439, %v439
    %v493 = vmul.f32 %v440, %v440
    %v494 = vmul.f32 %v441, %v441
    %v495 = vmul.f32 %v442, %v442
    %v496 = vmul.f32 %v443, %v443
    %v497 = vmul.f32 %v444, %v444
    %v498 = vmul.f32 %v445, %v445
    %v499 = vmul.f32 %v446, %v446
    %v500 = vmul.f32 %v447, %v447
    %v501 = vmul.f32 %v448, %v448
    %v502 = vmul.f32 %v449, %v449
    %v503 = vmul.f32 %v450, %v450
    %v504 = vmul.f32 %v451, %v451
    %v505 = vmul.f32 %v452, %v452
    %v506 = vmul.f32 %v453, %v453
    %v507 = vadd.f32 %v491, %v492
    %v508 = vadd.f32 %v507, %v493
    %v509 = vadd.f32 %v508, %v494
    %v510 = vadd.f32 %v509, %v495
    %v511 = vadd.f32 %v510, %v496
    %v512 = vadd.f32 %v511, %v497
    %v513 = vadd.f32 %v512, %v498
    %v514 = vadd.f32 %v513, %v499
    %v515 = vadd.f32 %v514, %v500
    %v516 = vadd.f32 %v515, %v501
    %v517 = vadd.f32 %v516, %v502
    %v518 = vadd.f32 %v517, %v503
    %v519 = vadd.f32 %v518, %v504
    %v520 = vadd.f32 %v519, %v505
    %v521 = vadd.f32 %v520, %v506
    %v522 = vrot.slane %v521, 4
    %v523 = vadd.f32 %v521, %v522
    %v524 = vrot.slane %v523, 2
    %v525 = vadd.f32 %v523, %v524
    %v526 = vrot.slane %v525, 1
    %v527 = vadd.f32 %v525, %v526
    %v528 = vld [vmem:[%s4] sm:$0x3]
    %vm529 = vcmask 1040384
    %v530 = vsel %vm529, %v490, %v527
    %v531 = vadd.f32 %v528, %v530
    %532 = vst [vmem:[%s4] sm:$0x3] %v531
  $region25: #{dcgan_discriminator_forward.7} parent=0 // pred_fallthru
    _
  // Predicated region
  $region26: #{dcgan_discriminator_forward.7} parent=0 // pred_check
    _
  $region27: #{dcgan_discriminator_forward.7} parent=0 // pred_check_branch
    %534 = sbr.rel (0) target = $region29
  $region28: #{dcgan_discriminator_forward.7} parent=0 // pred_region
    _
  $region29: #{dcgan_discriminator_forward.7} parent=0 // pred_fallthru
    _
  // Predicated region
  $region30: #{dcgan_discriminator_forward.7} parent=0 // pred_check
    _
  $region31: #{dcgan_discriminator_forward.7} parent=0 // pred_check_branch
    %536 = sbr.rel (0) target = $region33
  $region32: #{dcgan_discriminator_forward.7} parent=0 // pred_region
    _
  $region33: #{dcgan_discriminator_forward.7} parent=0 // pred_fallthru
    _
  // Predicated region
  $region34: #{dcgan_discriminator_forward.7} parent=0 // pred_check
    _
  $region35: #{dcgan_discriminator_forward.7} parent=0 // pred_check_branch
    %538 = sbr.rel (0) target = $region37
  $region36: #{dcgan_discriminator_forward.7} parent=0 // pred_region
    _
  $region37: #{dcgan_discriminator_forward.7} parent=0 // pred_fallthru
    _
  // Predicated region
  $region38: #{dcgan_discriminator_forward.7} parent=0 // pred_check
    _
  $region39: #{dcgan_discriminator_forward.7} parent=0 // pred_check_branch
    %540 = sbr.rel (0) target = $region41
  $region40: #{dcgan_discriminator_forward.7} parent=0 // pred_region
    _
  $region41: #{dcgan_discriminator_forward.7} parent=0 // pred_fallthru
    _

// kernel: dcgan_discriminator_forward.9
$region0: #{dcgan_discriminator_forward.9}
  #allocation0 [shape = 'u32[]', space=smem, size = 0x4, offset = 0x4, fixed_abs, tag = 'smem constant byte address 0x4 - core index']
  #allocation1 [shape = 'u32[144,128]{1,0:T(1,128)}', space=vmem, size = 0x12000, scoped, tag = 'internal scratch']
  #allocation2 [shape = 'f32[32,128]{1,0:T(8,128)}', space=vmem, size = 0x4000, scoped, tag = 'scratch operand']
  %s0 = inlined_call_operand.vmem [shape: bf16[32,512], index: 0, kind: input, shape index: {}]
  %s1 = inlined_call_operand.vmem [shape: bf16[512,128], index: 1, kind: input, shape index: {}]
  %s2 = inlined_call_operand.vmem [shape: f32[1,128], index: 2, kind: input, shape index: {}]
  %s3 = inlined_call_operand.vmem [shape: f32[32,128], index: 3, kind: output, shape index: {0}]
  %s4 = inlined_call_operand.vmem [shape: f32[2,128], index: 4, kind: output, shape index: {1}]
  %5 = xla_tuple %s3, %s4
  %s6 = sld [smem:[#allocation0]]
  $region42: #{dcgan_discriminator_forward.9} parent=0
    _
  %s8 = ssub.s32 1, %s6
  %s9 = scalar_select 0, %s8, %s6
  // Predicated region
  $region2: #{dcgan_discriminator_forward.9} parent=0 // pred_check
    _
  $region3: #{dcgan_discriminator_forward.9} parent=0 // pred_check_branch
    %11 = sbr.rel (0) target = $region5
  $region4: #{dcgan_discriminator_forward.9} parent=0 // pred_region
    _
  $region5: #{dcgan_discriminator_forward.9} parent=0 // pred_fallthru
    _
  // Predicated region
  $region6: #{dcgan_discriminator_forward.9} parent=0 // pred_check
    _
  $region7: #{dcgan_discriminator_forward.9} parent=0 // pred_check_branch
    %13 = sbr.rel (0) target = $region9
  $region8: #{dcgan_discriminator_forward.9} parent=0 // pred_region
    _
  $region9: #{dcgan_discriminator_forward.9} parent=0 // pred_fallthru
    _
  // Predicated region
  $region10: #{dcgan_discriminator_forward.9} parent=0 // pred_check
    _
  $region11: #{dcgan_discriminator_forward.9} parent=0 // pred_check_branch
    %15 = sbr.rel (0) target = $region13
  $region12: #{dcgan_discriminator_forward.9} parent=0 // pred_region
    _
  $region13: #{dcgan_discriminator_forward.9} parent=0 // pred_fallthru
    _
  %p17 = scmp.eq.s32.totalorder 0, 0
  %p18 = scmp.eq.s32.totalorder 0, 0
  %p19 = pnand %p17, %p18
  %p20 = pneg %p19
  // Predicated region
  $region14: #{dcgan_discriminator_forward.9} parent=0 // pred_check
    _
  $region15: #{dcgan_discriminator_forward.9} parent=0 // pred_check_branch
    %22 = sbr.rel (%p19) target = $region17
  $region16: #{dcgan_discriminator_forward.9} parent=0 // pred_region
    %23 = vst [vmem:[%s4] sm:$0x3] 0.0
  $region17: #{dcgan_discriminator_forward.9} parent=0 // pred_fallthru
    _
  // Predicated region
  $region18: #{dcgan_discriminator_forward.9} parent=0 // pred_check
    %p24 = pneg %p18
  $region19: #{dcgan_discriminator_forward.9} parent=0 // pred_check_branch
    %26 = sbr.rel (%p24) target = $region21
  $region20: #{dcgan_discriminator_forward.9} parent=0 // pred_region
    %27 = vst [vmem:[#allocation2] sm:$0xff] 0.0
    %28 = vst [vmem:[#allocation2 + $0x8] sm:$0xff] 0.0
    %29 = vst [vmem:[#allocation2 + $0x10] sm:$0xff] 0.0
    %30 = vst [vmem:[#allocation2 + $0x18] sm:$0xff] 0.0
  $region21: #{dcgan_discriminator_forward.9} parent=0 // pred_fallthru
    _
  %v31 = vld [vmem:[#allocation2] sm:$0xff]
  %v32 = vld [vmem:[#allocation2 + $0x8] sm:$0xff]
  %v33 = vld [vmem:[#allocation2 + $0x10] sm:$0xff]
  %v34 = vld [vmem:[#allocation2 + $0x18] sm:$0xff]
  %v35 = vld [vmem:[%s0] sm:$0xff]
  %v36 = vld [vmem:[%s0 + $0x8] sm:$0xff]
  %v37 = vld [vmem:[%s0 + $0x10] sm:$0xff]
  %v38 = vld [vmem:[%s0 + $0x18] sm:$0xff]
  %v39 = vld [vmem:[%s0 + $0x20] sm:$0xff]
  %v40 = vld [vmem:[%s0 + $0x28] sm:$0xff]
  %v41 = vld [vmem:[%s0 + $0x30] sm:$0xff]
  %v42 = vld [vmem:[%s0 + $0x38] sm:$0xff]
  %v43 = vld [vmem:[%s1] sm:$0xf]
  %v44 = vld [vmem:[%s1 + $0x4] sm:$0xf]
  %v45 = vld [vmem:[%s1 + $0x8] sm:$0xf]
  %v46 = vld [vmem:[%s1 + $0xc] sm:$0xf]
  %v47 = vld [vmem:[%s1 + $0x10] sm:$0xf]
  %v48 = vld [vmem:[%s1 + $0x14] sm:$0xf]
  %v49 = vld [vmem:[%s1 + $0x18] sm:$0xf]
  %v50 = vld [vmem:[%s1 + $0x1c] sm:$0xf]
  %v51 = vld [vmem:[%s1 + $0x20] sm:$0xf]
  %v52 = vld [vmem:[%s1 + $0x24] sm:$0xf]
  %v53 = vld [vmem:[%s1 + $0x28] sm:$0xf]
  %v54 = vld [vmem:[%s1 + $0x2c] sm:$0xf]
  %v55 = vld [vmem:[%s1 + $0x30] sm:$0xf]
  %v56 = vld [vmem:[%s1 + $0x34] sm:$0xf]
  %v57 = vld [vmem:[%s1 + $0x38] sm:$0xf]
  %v58 = vld [vmem:[%s1 + $0x3c] sm:$0xf]
  %v59 = vld [vmem:[%s1 + $0x40] sm:$0xf]
  %v60 = vld [vmem:[%s1 + $0x44] sm:$0xf]
  %v61 = vld [vmem:[%s1 + $0x48] sm:$0xf]
  %v62 = vld [vmem:[%s1 + $0x4c] sm:$0xf]
  %v63 = vld [vmem:[%s1 + $0x50] sm:$0xf]
  %v64 = vld [vmem:[%s1 + $0x54] sm:$0xf]
  %v65 = vld [vmem:[%s1 + $0x58] sm:$0xf]
  %v66 = vld [vmem:[%s1 + $0x5c] sm:$0xf]
  %v67 = vld [vmem:[%s1 + $0x60] sm:$0xf]
  %v68 = vld [vmem:[%s1 + $0x64] sm:$0xf]
  %v69 = vld [vmem:[%s1 + $0x68] sm:$0xf]
  %v70 = vld [vmem:[%s1 + $0x6c] sm:$0xf]
  %v71 = vld [vmem:[%s1 + $0x70] sm:$0xf]
  %v72 = vld [vmem:[%s1 + $0x74] sm:$0xf]
  %v73 = vld [vmem:[%s1 + $0x78] sm:$0xf]
  %v74 = vld [vmem:[%s1 + $0x7c] sm:$0xf]
  %v75 = vld [vmem:[%s1 + $0x80] sm:$0xf]
  %v76 = vld [vmem:[%s1 + $0x84] sm:$0xf]
  %v77 = vld [vmem:[%s1 + $0x88] sm:$0xf]
  %v78 = vld [vmem:[%s1 + $0x8c] sm:$0xf]
  %v79 = vld [vmem:[%s1 + $0x90] sm:$0xf]
  %v80 = vld [vmem:[%s1 + $0x94] sm:$0xf]
  %v81 = vld [vmem:[%s1 + $0x98] sm:$0xf]
  %v82 = vld [vmem:[%s1 + $0x9c] sm:$0xf]
  %v83 = vld [vmem:[%s1 + $0xa0] sm:$0xf]
  %v84 = vld [vmem:[%s1 + $0xa4] sm:$0xf]
  %v85 = vld [vmem:[%s1 + $0xa8] sm:$0xf]
  %v86 = vld [vmem:[%s1 + $0xac] sm:$0xf]
  %v87 = vld [vmem:[%s1 + $0xb0] sm:$0xf]
  %v88 = vld [vmem:[%s1 + $0xb4] sm:$0xf]
  %v89 = vld [vmem:[%s1 + $0xb8] sm:$0xf]
  %v90 = vld [vmem:[%s1 + $0xbc] sm:$0xf]
  %v91 = vld [vmem:[%s1 + $0xc0] sm:$0xf]
  %v92 = vld [vmem:[%s1 + $0xc4] sm:$0xf]
  %v93 = vld [vmem:[%s1 + $0xc8] sm:$0xf]
  %v94 = vld [vmem:[%s1 + $0xcc] sm:$0xf]
  %v95 = vld [vmem:[%s1 + $0xd0] sm:$0xf]
  %v96 = vld [vmem:[%s1 + $0xd4] sm:$0xf]
  %v97 = vld [vmem:[%s1 + $0xd8] sm:$0xf]
  %v98 = vld [vmem:[%s1 + $0xdc] sm:$0xf]
  %v99 = vld [vmem:[%s1 + $0xe0] sm:$0xf]
  %v100 = vld [vmem:[%s1 + $0xe4] sm:$0xf]
  %v101 = vld [vmem:[%s1 + $0xe8] sm:$0xf]
  %v102 = vld [vmem:[%s1 + $0xec] sm:$0xf]
  %v103 = vld [vmem:[%s1 + $0xf0] sm:$0xf]
  %v104 = vld [vmem:[%s1 + $0xf4] sm:$0xf]
  %v105 = vld [vmem:[%s1 + $0xf8] sm:$0xf]
  %v106 = vld [vmem:[%s1 + $0xfc] sm:$0xf]
  %v115 = vunpack.c.l.b16 %v35
  %v116 = vunpack.c.h.b16 %v35
  %v117 = vunpack.c.l.b16 %v36
  %v118 = vunpack.c.h.b16 %v36
  %v119 = vunpack.c.l.b16 %v37
  %v120 = vunpack.c.h.b16 %v37
  %v121 = vunpack.c.l.b16 %v38
  %v122 = vunpack.c.h.b16 %v38
  %v123 = vunpack.c.l.b16 %v39
  %v124 = vunpack.c.h.b16 %v39
  %v125 = vunpack.c.l.b16 %v40
  %v126 = vunpack.c.h.b16 %v40
  %v127 = vunpack.c.l.b16 %v41
  %v128 = vunpack.c.h.b16 %v41
  %v129 = vunpack.c.l.b16 %v42
  %v130 = vunpack.c.h.b16 %v42
  %v131 = vpack.c.b16 %v119, %v115
  %v132 = vpack.c.b16 %v120, %v116
  %v133 = vpack.c.b16 %v121, %v117
  %v134 = vpack.c.b16 %v122, %v118
  %v135 = vpack.c.b16 %v127, %v123
  %v136 = vpack.c.b16 %v128, %v124
  %v137 = vpack.c.b16 %v129, %v125
  %v138 = vpack.c.b16 %v130, %v126
  %v211 = vunpack.c.l.b16 %v43
  %v212 = vunpack.c.l.b16 %v44
  %v213 = vunpack.c.l.b16 %v45
  %v214 = vunpack.c.l.b16 %v46
  %v215 = vunpack.c.l.b16 %v47
  %v216 = vunpack.c.l.b16 %v48
  %v217 = vunpack.c.l.b16 %v49
  %v218 = vunpack.c.l.b16 %v50
  %v219 = vunpack.c.l.b16 %v51
  %v220 = vunpack.c.l.b16 %v52
  %v221 = vunpack.c.l.b16 %v53
  %v222 = vunpack.c.l.b16 %v54
  %v223 = vunpack.c.l.b16 %v55
  %v224 = vunpack.c.l.b16 %v56
  %v225 = vunpack.c.l.b16 %v57
  %v226 = vunpack.c.l.b16 %v58
  %v227 = vunpack.c.l.b16 %v59
  %v228 = vunpack.c.l.b16 %v60
  %v229 = vunpack.c.l.b16 %v61
  %v230 = vunpack.c.l.b16 %v62
  %v231 = vunpack.c.l.b16 %v63
  %v232 = vunpack.c.l.b16 %v64
  %v233 = vunpack.c.l.b16 %v65
  %v234 = vunpack.c.l.b16 %v66
  %v235 = vunpack.c.l.b16 %v67
  %v236 = vunpack.c.l.b16 %v68
  %v237 = vunpack.c.l.b16 %v69
  %v238 = vunpack.c.l.b16 %v70
  %v239 = vunpack.c.l.b16 %v71
  %v240 = vunpack.c.l.b16 %v72
  %v241 = vunpack.c.l.b16 %v73
  %v242 = vunpack.c.l.b16 %v74
  %v243 = vunpack.c.l.b16 %v75
  %v244 = vunpack.c.l.b16 %v76
  %v245 = vunpack.c.l.b16 %v77
  %v246 = vunpack.c.l.b16 %v78
  %v247 = vunpack.c.l.b16 %v79
  %v248 = vunpack.c.l.b16 %v80
  %v249 = vunpack.c.l.b16 %v81
  %v250 = vunpack.c.l.b16 %v82
  %v251 = vunpack.c.l.b16 %v83
  %v252 = vunpack.c.l.b16 %v84
  %v253 = vunpack.c.l.b16 %v85
  %v254 = vunpack.c.l.b16 %v86
  %v255 = vunpack.c.l.b16 %v87
  %v256 = vunpack.c.l.b16 %v88
  %v257 = vunpack.c.l.b16 %v89
  %v258 = vunpack.c.l.b16 %v90
  %v259 = vunpack.c.l.b16 %v91
  %v260 = vunpack.c.l.b16 %v92
  %v261 = vunpack.c.l.b16 %v93
  %v262 = vunpack.c.l.b16 %v94
  %v263 = vunpack.c.l.b16 %v95
  %v264 = vunpack.c.l.b16 %v96
  %v265 = vunpack.c.l.b16 %v97
  %v266 = vunpack.c.l.b16 %v98
  %v267 = vunpack.c.l.b16 %v99
  %v268 = vunpack.c.l.b16 %v100
  %v269 = vunpack.c.l.b16 %v101
  %v270 = vunpack.c.l.b16 %v102
  %v271 = vunpack.c.l.b16 %v103
  %v272 = vunpack.c.l.b16 %v104
  %v273 = vunpack.c.l.b16 %v105
  %v274 = vunpack.c.l.b16 %v106
  %v275 = vpack.c.b16 %v212, %v211
  %v276 = vpack.c.b16 %v214, %v213
  %v277 = vpack.c.b16 %v216, %v215
  %v278 = vpack.c.b16 %v218, %v217
  %v279 = vpack.c.b16 %v220, %v219
  %v280 = vpack.c.b16 %v222, %v221
  %v281 = vpack.c.b16 %v224, %v223
  %v282 = vpack.c.b16 %v226, %v225
  %v283 = vpack.c.b16 %v228, %v227
  %v284 = vpack.c.b16 %v230, %v229
  %v285 = vpack.c.b16 %v232, %v231
  %v286 = vpack.c.b16 %v234, %v233
  %v287 = vpack.c.b16 %v236, %v235
  %v288 = vpack.c.b16 %v238, %v237
  %v289 = vpack.c.b16 %v240, %v239
  %v290 = vpack.c.b16 %v242, %v241
  %v291 = vpack.c.b16 %v244, %v243
  %v292 = vpack.c.b16 %v246, %v245
  %v293 = vpack.c.b16 %v248, %v247
  %v294 = vpack.c.b16 %v250, %v249
  %v295 = vpack.c.b16 %v252, %v251
  %v296 = vpack.c.b16 %v254, %v253
  %v297 = vpack.c.b16 %v256, %v255
  %v298 = vpack.c.b16 %v258, %v257
  %v299 = vpack.c.b16 %v260, %v259
  %v300 = vpack.c.b16 %v262, %v261
  %v301 = vpack.c.b16 %v264, %v263
  %v302 = vpack.c.b16 %v266, %v265
  %v303 = vpack.c.b16 %v268, %v267
  %v304 = vpack.c.b16 %v270, %v269
  %v305 = vpack.c.b16 %v272, %v271
  %v306 = vpack.c.b16 %v274, %v273
  %339 = vmatprep.subr.bf16.mxu0 0
  %340 = vmatpush1.bf16.msra.mxu0 %v282
  %341 = vmatprep.subr.bf16.mxu0 0
  %342 = vmatpush1.bf16.msra.mxu0 %v281
  %343 = vmatprep.subr.bf16.mxu0 0
  %344 = vmatpush1.bf16.msra.mxu0 %v280
  %345 = vmatprep.subr.bf16.mxu0 0
  %346 = vmatpush1.bf16.msra.mxu0 %v279
  %347 = vmatprep.subr.bf16.mxu0 0
  %348 = vmatpush1.bf16.msra.mxu0 %v278
  %349 = vmatprep.subr.bf16.mxu0 0
  %350 = vmatpush1.bf16.msra.mxu0 %v277
  %351 = vmatprep.subr.bf16.mxu0 0
  %352 = vmatpush1.bf16.msra.mxu0 %v276
  %353 = vmatprep.subr.bf16.mxu0 0
  %354 = vmatpush1.bf16.msra.mxu0 %v275
  %355 = vmatprep.subr.bf16.mxu0 0
  %356 = vmatpush2.bf16.msra.mxu0 %v290
  %357 = vmatprep.subr.bf16.mxu0 0
  %358 = vmatpush2.bf16.msra.mxu0 %v289
  %359 = vmatprep.subr.bf16.mxu0 0
  %360 = vmatpush2.bf16.msra.mxu0 %v288
  %361 = vmatprep.subr.bf16.mxu0 0
  %362 = vmatpush2.bf16.msra.mxu0 %v287
  %363 = vmatprep.subr.bf16.mxu0 0
  %364 = vmatpush2.bf16.msra.mxu0 %v286
  %365 = vmatprep.subr.bf16.mxu0 0
  %366 = vmatpush2.bf16.msra.mxu0 %v285
  %367 = vmatprep.subr.bf16.mxu0 0
  %368 = vmatpush2.bf16.msra.mxu0 %v284
  %369 = vmatprep.subr.bf16.mxu0 0
  %370 = vmatpush2.bf16.msra.mxu0 %v283
  %371 = vmatprep.mubr.bf16.mxu0 %v132
  %372 = vmatmul.mubr.bf16.gmra.mxu0 %v131
  %v373 = vpop.f32.mrf.mxu0
  %v374 = vadd.f32 0.0, %v373
  %v375 = vpop.f32.mrf.mxu0
  %v376 = vpop.f32.mrf.mxu0
  %v377 = vadd.f32 0.0, %v376
  %v378 = vpop.f32.mrf.mxu0
  %379 = vmatprep.mubr.bf16.mxu0 %v136
  %380 = vmatmul.mubr.bf16.gmra.mxu0 %v135
  %v381 = vpop.f32.mrf.mxu0
  %v382 = vadd.f32 0.0, %v381
  %v383 = vpop.f32.mrf.mxu0
  %v384 = vpop.f32.mrf.mxu0
  %v385 = vadd.f32 0.0, %v384
  %v386 = vpop.f32.mrf.mxu0
  %387 = vdwg.mxu0
  %388 = vmatprep.subr.bf16.mxu0 0
  %389 = vmatpush1.bf16.msra.mxu0 %v298
  %390 = vmatprep.subr.bf16.mxu0 0
  %391 = vmatpush1.bf16.msra.mxu0 %v297
  %392 = vmatprep.subr.bf16.mxu0 0
  %393 = vmatpush1.bf16.msra.mxu0 %v296
  %394 = vmatprep.subr.bf16.mxu0 0
  %395 = vmatpush1.bf16.msra.mxu0 %v295
  %396 = vmatprep.subr.bf16.mxu0 0
  %397 = vmatpush1.bf16.msra.mxu0 %v294
  %398 = vmatprep.subr.bf16.mxu0 0
  %399 = vmatpush1.bf16.msra.mxu0 %v293
  %400 = vmatprep.subr.bf16.mxu0 0
  %401 = vmatpush1.bf16.msra.mxu0 %v292
  %402 = vmatprep.subr.bf16.mxu0 0
  %403 = vmatpush1.bf16.msra.mxu0 %v291
  %404 = vmatprep.subr.bf16.mxu0 0
  %405 = vmatpush2.bf16.msra.mxu0 %v306
  %406 = vmatprep.subr.bf16.mxu0 0
  %407 = vmatpush2.bf16.msra.mxu0 %v305
  %408 = vmatprep.subr.bf16.mxu0 0
  %409 = vmatpush2.bf16.msra.mxu0 %v304
  %410 = vmatprep.subr.bf16.mxu0 0
  %411 = vmatpush2.bf16.msra.mxu0 %v303
  %412 = vmatprep.subr.bf16.mxu0 0
  %413 = vmatpush2.bf16.msra.mxu0 %v302
  %414 = vmatprep.subr.bf16.mxu0 0
  %415 = vmatpush2.bf16.msra.mxu0 %v301
  %416 = vmatprep.subr.bf16.mxu0 0
  %417 = vmatpush2.bf16.msra.mxu0 %v300
  %418 = vmatprep.subr.bf16.mxu0 0
  %419 = vmatpush2.bf16.msra.mxu0 %v299
  %420 = vmatprep.mubr.bf16.mxu0 %v134
  %421 = vmatmul.mubr.bf16.gmra.mxu0 %v133
  %v422 = vpop.f32.mrf.mxu0
  %v423 = vadd.f32 %v374, %v422
  %v424 = vpop.f32.mrf.mxu0
  %v425 = vpop.f32.mrf.mxu0
  %v426 = vadd.f32 %v377, %v425
  %v427 = vpop.f32.mrf.mxu0
  %428 = vmatprep.mubr.bf16.mxu0 %v138
  %429 = vmatmul.mubr.bf16.gmra.mxu0 %v137
  %v430 = vpop.f32.mrf.mxu0
  %v431 = vadd.f32 %v382, %v430
  %v432 = vpop.f32.mrf.mxu0
  %v433 = vpop.f32.mrf.mxu0
  %v434 = vadd.f32 %v385, %v433
  %v435 = vpop.f32.mrf.mxu0
  %436 = vdwg.mxu0
  %v437 = vadd.f32 %v31, %v423
  %v438 = vadd.f32 %v32, %v426
  %v439 = vadd.f32 %v33, %v431
  %v440 = vadd.f32 %v34, %v434
  %441 = vst [vmem:[#allocation2] sm:$0xff] %v437
  %442 = vst [vmem:[#allocation2 + $0x8] sm:$0xff] %v438
  %443 = vst [vmem:[#allocation2 + $0x10] sm:$0xff] %v439
  %444 = vst [vmem:[#allocation2 + $0x18] sm:$0xff] %v440
  // Predicated region
  $region22: #{dcgan_discriminator_forward.9} parent=0 // pred_check
    %p445 = pneg %p18
  $region23: #{dcgan_discriminator_forward.9} parent=0 // pred_check_branch
    %447 = sbr.rel (%p445) target = $region25
  $region24: #{dcgan_discriminator_forward.9} parent=0 // pred_region
    %v448 = vld [vmem:[#allocation2] sm:$0xff]
    %v449 = vld [vmem:[#allocation2 + $0x8] sm:$0xff]
    %v450 = vld [vmem:[#allocation2 + $0x10] sm:$0xff]
    %v451 = vld [vmem:[#allocation2 + $0x18] sm:$0xff]
    %v452 = vld [vmem:[%s2] sm:$0x1]
    %v454 = vlaneseq
    %v455 = vshrl.u32 %v454, 7
    %v456 = vsub.s32 0, %v455
    %v457 = vrot.slane %v452, %v456
    %v459 = vadd.f32 %v448, %v457
    %v460 = vadd.f32 %v449, %v457
    %v461 = vadd.f32 %v450, %v457
    %v462 = vadd.f32 %v451, %v457
    %463 = vst [vmem:[%s3] sm:$0xff] %v459
    %464 = vst [vmem:[%s3 + $0x8] sm:$0xff] %v460
    %465 = vst [vmem:[%s3 + $0x10] sm:$0xff] %v461
    %466 = vst [vmem:[%s3 + $0x18] sm:$0xff] %v462
    %v467 = vadd.f32 %v459, %v460
    %v468 = vadd.f32 %v467, %v461
    %v469 = vadd.f32 %v468, %v462
    %v470 = vrot.slane %v469, 4
    %v471 = vadd.f32 %v469, %v470
    %v472 = vrot.slane %v471, 2
    %v473 = vadd.f32 %v471, %v472
    %v474 = vrot.slane %v473, 1
    %v475 = vadd.f32 %v473, %v474
    %v476 = vmul.f32 %v459, %v459
    %v477 = vmul.f32 %v460, %v460
    %v478 = vmul.f32 %v461, %v461
    %v479 = vmul.f32 %v462, %v462
    %v480 = vadd.f32 %v476, %v477
    %v481 = vadd.f32 %v480, %v478
    %v482 = vadd.f32 %v481, %v479
    %v483 = vrot.slane %v482, 4
    %v484 = vadd.f32 %v482, %v483
    %v485 = vrot.slane %v484, 2
    %v486 = vadd.f32 %v484, %v485
    %v487 = vrot.slane %v486, 1
    %v488 = vadd.f32 %v486, %v487
    %v489 = vld [vmem:[%s4] sm:$0x3]
    %vm490 = vcmask 1040384
    %v491 = vsel %vm490, %v475, %v488
    %v492 = vadd.f32 %v489, %v491
    %493 = vst [vmem:[%s4] sm:$0x3] %v492
  $region25: #{dcgan_discriminator_forward.9} parent=0 // pred_fallthru
    _
  // Predicated region
  $region26: #{dcgan_discriminator_forward.9} parent=0 // pred_check
    _
  $region27: #{dcgan_discriminator_forward.9} parent=0 // pred_check_branch
    %495 = sbr.rel (0) target = $region29
  $region28: #{dcgan_discriminator_forward.9} parent=0 // pred_region
    _
  $region29: #{dcgan_discriminator_forward.9} parent=0 // pred_fallthru
    _
  // Predicated region
  $region30: #{dcgan_discriminator_forward.9} parent=0 // pred_check
    _
  $region31: #{dcgan_discriminator_forward.9} parent=0 // pred_check_branch
    %497 = sbr.rel (0) target = $region33
  $region32: #{dcgan_discriminator_forward.9} parent=0 // pred_region
    _
  $region33: #{dcgan_discriminator_forward.9} parent=0 // pred_fallthru
    _
  // Predicated region
  $region34: #{dcgan_discriminator_forward.9} parent=0 // pred_check
    _
  $region35: #{dcgan_discriminator_forward.9} parent=0 // pred_check_branch
    %499 = sbr.rel (0) target = $region37
  $region36: #{dcgan_discriminator_forward.9} parent=0 // pred_region
    _
  $region37: #{dcgan_discriminator_forward.9} parent=0 // pred_fallthru
    _
  // Predicated region
  $region38: #{dcgan_discriminator_forward.9} parent=0 // pred_check
    _
  $region39: #{dcgan_discriminator_forward.9} parent=0 // pred_check_branch
    %501 = sbr.rel (0) target = $region41
  $region40: #{dcgan_discriminator_forward.9} parent=0 // pred_region
    _
  $region41: #{dcgan_discriminator_forward.9} parent=0 // pred_fallthru
    _

// kernel: dcgan_discriminator_forward.10
$region0: #{dcgan_discriminator_forward.10}
  #allocation0 [shape = 'u32[]', space=smem, size = 0x4, offset = 0x4, fixed_abs, tag = 'smem constant byte address 0x4 - core index']
  #allocation1 [shape = 'u32[144,128]{1,0:T(1,128)}', space=vmem, size = 0x12000, scoped, tag = 'internal scratch']
  %s0 = inlined_call_operand.vmem [shape: f32[32,128], index: 0, kind: input, shape index: {}]
  %s1 = inlined_call_operand.vmem [shape: f32[2,128], index: 1, kind: input, shape index: {}]
  %s2 = inlined_call_operand.vmem [shape: f32[1,128], index: 2, kind: input, shape index: {}]
  %s3 = inlined_call_operand.vmem [shape: f32[1,128], index: 3, kind: input, shape index: {}]
  %s4 = inlined_call_operand.vmem [shape: bf16[32,128], index: 4, kind: output, shape index: {}]
  %s5 = sld [smem:[#allocation0]]
  $region26: #{dcgan_discriminator_forward.10} parent=0
    _
  %s7 = ssub.s32 1, %s5
  %s8 = scalar_select 0, %s7, %s5
  // Predicated region
  $region2: #{dcgan_discriminator_forward.10} parent=0 // pred_check
    _
  $region3: #{dcgan_discriminator_forward.10} parent=0 // pred_check_branch
    %10 = sbr.rel (0) target = $region5
  $region4: #{dcgan_discriminator_forward.10} parent=0 // pred_region
    _
  $region5: #{dcgan_discriminator_forward.10} parent=0 // pred_fallthru
    _
  // Predicated region
  $region6: #{dcgan_discriminator_forward.10} parent=0 // pred_check
    _
  $region7: #{dcgan_discriminator_forward.10} parent=0 // pred_check_branch
    %12 = sbr.rel (0) target = $region9
  $region8: #{dcgan_discriminator_forward.10} parent=0 // pred_region
    _
  $region9: #{dcgan_discriminator_forward.10} parent=0 // pred_fallthru
    _
  // Predicated region
  $region10: #{dcgan_discriminator_forward.10} parent=0 // pred_check
    _
  $region11: #{dcgan_discriminator_forward.10} parent=0 // pred_check_branch
    %14 = sbr.rel (0) target = $region13
  $region12: #{dcgan_discriminator_forward.10} parent=0 // pred_region
    _
  $region13: #{dcgan_discriminator_forward.10} parent=0 // pred_fallthru
    _
  // Predicated region
  $region14: #{dcgan_discriminator_forward.10} parent=0 // pred_check
    _
  $region15: #{dcgan_discriminator_forward.10} parent=0 // pred_check_branch
    %16 = sbr.rel (0) target = $region17
  $region16: #{dcgan_discriminator_forward.10} parent=0 // pred_region
    _
  $region17: #{dcgan_discriminator_forward.10} parent=0 // pred_fallthru
    _
  %v17 = vld [vmem:[%s1] sm:$0x1]
  %v18 = vmul.f32 %v17, 0.03125
  %v19 = vld [vmem:[%s1 + $0x1] sm:$0x1]
  %v20 = vmul.f32 %v19, 0.03125
  %v21 = vmul.f32 %v18, %v18
  %v22 = vsub.f32 %v20, %v21
  %v23 = vld [vmem:[%s2] sm:$0x1]
  %v24 = vadd.f32 %v22, 1e-05
  %v25 = vrsqrt.pop %v24
  %v26 = vmul.f32 %v23, %v25
  %v27 = vld [vmem:[%s3] sm:$0x1]
  %v28 = vmul.f32 %v18, %v26
  %v29 = vsub.f32 %v27, %v28
  %v30 = vld [vmem:[%s0] sm:$0xff]
  %v31 = vld [vmem:[%s0 + $0x8] sm:$0xff]
  %v32 = vld [vmem:[%s0 + $0x10] sm:$0xff]
  %v33 = vld [vmem:[%s0 + $0x18] sm:$0xff]
  %v35 = vlaneseq
  %v36 = vshrl.u32 %v35, 7
  %v37 = vsub.s32 0, %v36
  %v38 = vrot.slane %v26, %v37
  %v40 = vmul.f32 %v30, %v38
  %v41 = vmul.f32 %v31, %v38
  %v42 = vmul.f32 %v32, %v38
  %v43 = vmul.f32 %v33, %v38
  %v45 = vlaneseq
  %v46 = vshrl.u32 %v45, 7
  %v47 = vsub.s32 0, %v46
  %v48 = vrot.slane %v29, %v47
  %v50 = vadd.f32 %v40, %v48
  %v51 = vadd.f32 %v41, %v48
  %v52 = vadd.f32 %v42, %v48
  %v53 = vadd.f32 %v43, %v48
  %vm54 = vcmp.ge.f32.partialorder %v50, 0.0
  %vm55 = vcmp.ge.f32.partialorder %v51, 0.0
  %vm56 = vcmp.ge.f32.partialorder %v52, 0.0
  %vm57 = vcmp.ge.f32.partialorder %v53, 0.0
  %v58 = vmul.f32 %v50, 0.2
  %v59 = vmul.f32 %v51, 0.2
  %v60 = vmul.f32 %v52, 0.2
  %v61 = vmul.f32 %v53, 0.2
  %v62 = vsel %vm54, %v50, %v58
  %v63 = vsel %vm55, %v51, %v59
  %v64 = vsel %vm56, %v52, %v60
  %v65 = vsel %vm57, %v53, %v61
  %v66 = vpack.c.bf16 %v63, %v62
  %v67 = vpack.c.bf16 %v65, %v64
  %v70 = vunpack.c.l.b16 %v66
  %v71 = vunpack.c.h.b16 %v66
  %v72 = vunpack.c.l.b16 %v67
  %v73 = vunpack.c.h.b16 %v67
  %v74 = vpack.c.b16 %v70, %v70
  %v75 = vpack.c.b16 %v71, %v71
  %v76 = vpack.c.b16 %v72, %v72
  %v77 = vpack.c.b16 %v73, %v73
  %82 = vst [vmem:[%s4] sm:$0xf] %v74
  %83 = vst [vmem:[%s4 + $0x4] sm:$0xf] %v75
  %84 = vst [vmem:[%s4 + $0x8] sm:$0xf] %v76
  %85 = vst [vmem:[%s4 + $0xc] sm:$0xf] %v77
  // Predicated region
  $region18: #{dcgan_discriminator_forward.10} parent=0 // pred_check
    _
  $region19: #{dcgan_discriminator_forward.10} parent=0 // pred_check_branch
    %87 = sbr.rel (0) target = $region21
  $region20: #{dcgan_discriminator_forward.10} parent=0 // pred_region
    _
  $region21: #{dcgan_discriminator_forward.10} parent=0 // pred_fallthru
    _
  // Predicated region
  $region22: #{dcgan_discriminator_forward.10} parent=0 // pred_check
    _
  $region23: #{dcgan_discriminator_forward.10} parent=0 // pred_check_branch
    %89 = sbr.rel (0) target = $region25
  $region24: #{dcgan_discriminator_forward.10} parent=0 // pred_region
    _
  $region25: #{dcgan_discriminator_forward.10} parent=0 // pred_fallthru
    _

// kernel: dcgan_discriminator_forward.11
$region0: #{dcgan_discriminator_forward.11}
  #allocation0 [shape = 'u32[]', space=smem, size = 0x4, offset = 0x4, fixed_abs, tag = 'smem constant byte address 0x4 - core index']
  #allocation1 [shape = 'u32[144,128]{1,0:T(1,128)}', space=vmem, size = 0x12000, scoped, tag = 'internal scratch']
  %s0 = inlined_call_operand.vmem [shape: bf16[2,512], index: 0, kind: input, shape index: {}]
  %s1 = inlined_call_operand.vmem [shape: bf16[512,128], index: 1, kind: input, shape index: {}]
  %s2 = inlined_call_operand.vmem [shape: f32[1,128], index: 2, kind: input, shape index: {}]
  %s3 = inlined_call_operand.vmem [shape: f32[2,128], index: 3, kind: output, shape index: {}]
  %s4 = sld [smem:[#allocation0]]
  $region22: #{dcgan_discriminator_forward.11} parent=0
    _
  %s6 = ssub.s32 1, %s4
  %s7 = scalar_select 0, %s6, %s4
  // Predicated region
  $region2: #{dcgan_discriminator_forward.11} parent=0 // pred_check
    _
  $region3: #{dcgan_discriminator_forward.11} parent=0 // pred_check_branch
    %9 = sbr.rel (0) target = $region5
  $region4: #{dcgan_discriminator_forward.11} parent=0 // pred_region
    _
  $region5: #{dcgan_discriminator_forward.11} parent=0 // pred_fallthru
    _
  // Predicated region
  $region6: #{dcgan_discriminator_forward.11} parent=0 // pred_check
    _
  $region7: #{dcgan_discriminator_forward.11} parent=0 // pred_check_branch
    %11 = sbr.rel (0) target = $region9
  $region8: #{dcgan_discriminator_forward.11} parent=0 // pred_region
    _
  $region9: #{dcgan_discriminator_forward.11} parent=0 // pred_fallthru
    _
  // Predicated region
  $region10: #{dcgan_discriminator_forward.11} parent=0 // pred_check
    _
  $region11: #{dcgan_discriminator_forward.11} parent=0 // pred_check_branch
    %13 = sbr.rel (0) target = $region13
  $region12: #{dcgan_discriminator_forward.11} parent=0 // pred_region
    _
  $region13: #{dcgan_discriminator_forward.11} parent=0 // pred_fallthru
    _
  %v15 = vld [vmem:[%s0] sm:$0xf]
  %v16 = vld [vmem:[%s1] sm:$0xf]
  %v17 = vld [vmem:[%s1 + $0x4] sm:$0xf]
  %v18 = vld [vmem:[%s1 + $0x8] sm:$0xf]
  %v19 = vld [vmem:[%s1 + $0xc] sm:$0xf]
  %v20 = vld [vmem:[%s1 + $0x10] sm:$0xf]
  %v21 = vld [vmem:[%s1 + $0x14] sm:$0xf]
  %v22 = vld [vmem:[%s1 + $0x18] sm:$0xf]
  %v23 = vld [vmem:[%s1 + $0x1c] sm:$0xf]
  %v24 = vld [vmem:[%s1 + $0x20] sm:$0xf]
  %v25 = vld [vmem:[%s1 + $0x24] sm:$0xf]
  %v26 = vld [vmem:[%s1 + $0x28] sm:$0xf]
  %v27 = vld [vmem:[%s1 + $0x2c] sm:$0xf]
  %v28 = vld [vmem:[%s1 + $0x30] sm:$0xf]
  %v29 = vld [vmem:[%s1 + $0x34] sm:$0xf]
  %v30 = vld [vmem:[%s1 + $0x38] sm:$0xf]
  %v31 = vld [vmem:[%s1 + $0x3c] sm:$0xf]
  %v32 = vld [vmem:[%s1 + $0x40] sm:$0xf]
  %v33 = vld [vmem:[%s1 + $0x44] sm:$0xf]
  %v34 = vld [vmem:[%s1 + $0x48] sm:$0xf]
  %v35 = vld [vmem:[%s1 + $0x4c] sm:$0xf]
  %v36 = vld [vmem:[%s1 + $0x50] sm:$0xf]
  %v37 = vld [vmem:[%s1 + $0x54] sm:$0xf]
  %v38 = vld [vmem:[%s1 + $0x58] sm:$0xf]
  %v39 = vld [vmem:[%s1 + $0x5c] sm:$0xf]
  %v40 = vld [vmem:[%s1 + $0x60] sm:$0xf]
  %v41 = vld [vmem:[%s1 + $0x64] sm:$0xf]
  %v42 = vld [vmem:[%s1 + $0x68] sm:$0xf]
  %v43 = vld [vmem:[%s1 + $0x6c] sm:$0xf]
  %v44 = vld [vmem:[%s1 + $0x70] sm:$0xf]
  %v45 = vld [vmem:[%s1 + $0x74] sm:$0xf]
  %v46 = vld [vmem:[%s1 + $0x78] sm:$0xf]
  %v47 = vld [vmem:[%s1 + $0x7c] sm:$0xf]
  %v48 = vld [vmem:[%s1 + $0x80] sm:$0xf]
  %v49 = vld [vmem:[%s1 + $0x84] sm:$0xf]
  %v50 = vld [vmem:[%s1 + $0x88] sm:$0xf]
  %v51 = vld [vmem:[%s1 + $0x8c] sm:$0xf]
  %v52 = vld [vmem:[%s1 + $0x90] sm:$0xf]
  %v53 = vld [vmem:[%s1 + $0x94] sm:$0xf]
  %v54 = vld [vmem:[%s1 + $0x98] sm:$0xf]
  %v55 = vld [vmem:[%s1 + $0x9c] sm:$0xf]
  %v56 = vld [vmem:[%s1 + $0xa0] sm:$0xf]
  %v57 = vld [vmem:[%s1 + $0xa4] sm:$0xf]
  %v58 = vld [vmem:[%s1 + $0xa8] sm:$0xf]
  %v59 = vld [vmem:[%s1 + $0xac] sm:$0xf]
  %v60 = vld [vmem:[%s1 + $0xb0] sm:$0xf]
  %v61 = vld [vmem:[%s1 + $0xb4] sm:$0xf]
  %v62 = vld [vmem:[%s1 + $0xb8] sm:$0xf]
  %v63 = vld [vmem:[%s1 + $0xbc] sm:$0xf]
  %v64 = vld [vmem:[%s1 + $0xc0] sm:$0xf]
  %v65 = vld [vmem:[%s1 + $0xc4] sm:$0xf]
  %v66 = vld [vmem:[%s1 + $0xc8] sm:$0xf]
  %v67 = vld [vmem:[%s1 + $0xcc] sm:$0xf]
  %v68 = vld [vmem:[%s1 + $0xd0] sm:$0xf]
  %v69 = vld [vmem:[%s1 + $0xd4] sm:$0xf]
  %v70 = vld [vmem:[%s1 + $0xd8] sm:$0xf]
  %v71 = vld [vmem:[%s1 + $0xdc] sm:$0xf]
  %v72 = vld [vmem:[%s1 + $0xe0] sm:$0xf]
  %v73 = vld [vmem:[%s1 + $0xe4] sm:$0xf]
  %v74 = vld [vmem:[%s1 + $0xe8] sm:$0xf]
  %v75 = vld [vmem:[%s1 + $0xec] sm:$0xf]
  %v76 = vld [vmem:[%s1 + $0xf0] sm:$0xf]
  %v77 = vld [vmem:[%s1 + $0xf4] sm:$0xf]
  %v78 = vld [vmem:[%s1 + $0xf8] sm:$0xf]
  %v79 = vld [vmem:[%s1 + $0xfc] sm:$0xf]
  %v80 = vld [vmem:[%s2] sm:$0x1]
  %v82 = vlaneseq
  %v83 = vshrl.u32 %v82, 7
  %v84 = vsub.s32 0, %v83
  %v85 = vrot.slane %v80, %v84
  %v89 = vunpack.c.l.s4 1966171168
  %v90 = vunpack.c.0.s8 %v89
  %v91 = vlaneseq
  %v92 = vshrl.u32 %v91, 7
  %v93 = vsub.s32 %v90, %v92
  %v94 = vrot.slane %v15, %v93
  %v95 = vcombine.high %v94, %v94
  %v97 = vunpack.c.l.s4 1966171168
  %v98 = vunpack.c.0.s8 %v97
  %v99 = vlaneseq
  %v100 = vshrl.u32 %v99, 7
  %v101 = vsub.s32 %v98, %v100
  %v102 = vrot.slane %v94, %v101
  %v104 = vunpack.c.l.s4 1966171168
  %v105 = vunpack.c.0.s8 %v104
  %v106 = vlaneseq
  %v107 = vshrl.u32 %v106, 7
  %v108 = vsub.s32 %v105, %v107
  %v109 = vrot.slane %v95, %v108
  %v110 = vcombine.high %v102, %v102
  %v111 = vcombine.high %v109, %v109
  %v180 = vunpack.c.l.b16 %v16
  %v181 = vunpack.c.l.b16 %v17
  %v182 = vunpack.c.l.b16 %v18
  %v183 = vunpack.c.l.b16 %v19
  %v184 = vunpack.c.l.b16 %v20
  %v185 = vunpack.c.l.b16 %v21
  %v186 = vunpack.c.l.b16 %v22
  %v187 = vunpack.c.l.b16 %v23
  %v188 = vunpack.c.l.b16 %v24
  %v189 = vunpack.c.l.b16 %v25
  %v190 = vunpack.c.l.b16 %v26
  %v191 = vunpack.c.l.b16 %v27
  %v192 = vunpack.c.l.b16 %v28
  %v193 = vunpack.c.l.b16 %v29
  %v194 = vunpack.c.l.b16 %v30
  %v195 = vunpack.c.l.b16 %v31
  %v196 = vunpack.c.l.b16 %v32
  %v197 = vunpack.c.l.b16 %v33
  %v198 = vunpack.c.l.b16 %v34
  %v199 = vunpack.c.l.b16 %v35
  %v200 = vunpack.c.l.b16 %v36
  %v201 = vunpack.c.l.b16 %v37
  %v202 = vunpack.c.l.b16 %v38
  %v203 = vunpack.c.l.b16 %v39
  %v204 = vunpack.c.l.b16 %v40
  %v205 = vunpack.c.l.b16 %v41
  %v206 = vunpack.c.l.b16 %v42
  %v207 = vunpack.c.l.b16 %v43
  %v208 = vunpack.c.l.b16 %v44
  %v209 = vunpack.c.l.b16 %v45
  %v210 = vunpack.c.l.b16 %v46
  %v211 = vunpack.c.l.b16 %v47
  %v212 = vunpack.c.l.b16 %v48
  %v213 = vunpack.c.l.b16 %v49
  %v214 = vunpack.c.l.b16 %v50
  %v215 = vunpack.c.l.b16 %v51
  %v216 = vunpack.c.l.b16 %v52
  %v217 = vunpack.c.l.b16 %v53
  %v218 = vunpack.c.l.b16 %v54
  %v219 = vunpack.c.l.b16 %v55
  %v220 = vunpack.c.l.b16 %v56
  %v221 = vunpack.c.l.b16 %v57
  %v222 = vunpack.c.l.b16 %v58
  %v223 = vunpack.c.l.b16 %v59
  %v224 = vunpack.c.l.b16 %v60
  %v225 = vunpack.c.l.b16 %v61
  %v226 = vunpack.c.l.b16 %v62
  %v227 = vunpack.c.l.b16 %v63
  %v228 = vunpack.c.l.b16 %v64
  %v229 = vunpack.c.l.b16 %v65
  %v230 = vunpack.c.l.b16 %v66
  %v231 = vunpack.c.l.b16 %v67
  %v232 = vunpack.c.l.b16 %v68
  %v233 = vunpack.c.l.b16 %v69
  %v234 = vunpack.c.l.b16 %v70
  %v235 = vunpack.c.l.b16 %v71
  %v236 = vunpack.c.l.b16 %v72
  %v237 = vunpack.c.l.b16 %v73
  %v238 = vunpack.c.l.b16 %v74
  %v239 = vunpack.c.l.b16 %v75
  %v240 = vunpack.c.l.b16 %v76
  %v241 = vunpack.c.l.b16 %v77
  %v242 = vunpack.c.l.b16 %v78
  %v243 = vunpack.c.l.b16 %v79
  %v244 = vpack.c.b16 %v181, %v180
  %v245 = vpack.c.b16 %v183, %v182
  %v246 = vpack.c.b16 %v185, %v184
  %v247 = vpack.c.b16 %v187, %v186
  %v248 = vpack.c.b16 %v189, %v188
  %v249 = vpack.c.b16 %v191, %v190
  %v250 = vpack.c.b16 %v193, %v192
  %v251 = vpack.c.b16 %v195, %v194
  %v252 = vpack.c.b16 %v197, %v196
  %v253 = vpack.c.b16 %v199, %v198
  %v254 = vpack.c.b16 %v201, %v200
  %v255 = vpack.c.b16 %v203, %v202
  %v256 = vpack.c.b16 %v205, %v204
  %v257 = vpack.c.b16 %v207, %v206
  %v258 = vpack.c.b16 %v209, %v208
  %v259 = vpack.c.b16 %v211, %v210
  %v260 = vpack.c.b16 %v213, %v212
  %v261 = vpack.c.b16 %v215, %v214
  %v262 = vpack.c.b16 %v217, %v216
  %v263 = vpack.c.b16 %v219, %v218
  %v264 = vpack.c.b16 %v221, %v220
  %v265 = vpack.c.b16 %v223, %v222
  %v266 = vpack.c.b16 %v225, %v224
  %v267 = vpack.c.b16 %v227, %v226
  %v268 = vpack.c.b16 %v229, %v228
  %v269 = vpack.c.b16 %v231, %v230
  %v270 = vpack.c.b16 %v233, %v232
  %v271 = vpack.c.b16 %v235, %v234
  %v272 = vpack.c.b16 %v237, %v236
  %v273 = vpack.c.b16 %v239, %v238
  %v274 = vpack.c.b16 %v241, %v240
  %v275 = vpack.c.b16 %v243, %v242
  %308 = vmatprep.subr.bf16.mxu0 0
  %309 = vmatpush1.bf16.msra.mxu0 %v251
  %310 = vmatprep.subr.bf16.mxu0 0
  %311 = vmatpush1.bf16.msra.mxu0 %v250
  %312 = vmatprep.subr.bf16.mxu0 0
  %313 = vmatpush1.bf16.msra.mxu0 %v249
  %314 = vmatprep.subr.bf16.mxu0 0
  %315 = vmatpush1.bf16.msra.mxu0 %v248
  %316 = vmatprep.subr.bf16.mxu0 0
  %317 = vmatpush1.bf16.msra.mxu0 %v247
  %318 = vmatprep.subr.bf16.mxu0 0
  %319 = vmatpush1.bf16.msra.mxu0 %v246
  %320 = vmatprep.subr.bf16.mxu0 0
  %321 = vmatpush1.bf16.msra.mxu0 %v245
  %322 = vmatprep.subr.bf16.mxu0 0
  %323 = vmatpush1.bf16.msra.mxu0 %v244
  %324 = vmatprep.subr.bf16.mxu0 0
  %325 = vmatpush2.bf16.msra.mxu0 %v259
  %326 = vmatprep.subr.bf16.mxu0 0
  %327 = vmatpush2.bf16.msra.mxu0 %v258
  %328 = vmatprep.subr.bf16.mxu0 0
  %329 = vmatpush2.bf16.msra.mxu0 %v257
  %330 = vmatprep.subr.bf16.mxu0 0
  %331 = vmatpush2.bf16.msra.mxu0 %v256
  %332 = vmatprep.subr.bf16.mxu0 0
  %333 = vmatpush2.bf16.msra.mxu0 %v255
  %334 = vmatprep.subr.bf16.mxu0 0
  %335 = vmatpush2.bf16.msra.mxu0 %v254
  %336 = vmatprep.subr.bf16.mxu0 0
  %337 = vmatpush2.bf16.msra.mxu0 %v253
  %338 = vmatprep.subr.bf16.mxu0 0
  %339 = vmatpush2.bf16.msra.mxu0 %v252
  %340 = vmatprep.mubr.bf16.mxu0 %v109
  %341 = vmatmul.mubr.bf16.gmra.mxu0 %v102
  %v342 = vpop.f32.mrf.mxu0
  %v343 = vadd.f32 %v85, %v342
  %v344 = vpop.f32.mrf.mxu0
  %v345 = vpop.f32.mrf.mxu0
  %v346 = vpop.f32.mrf.mxu0
  %347 = vdwg.mxu0
  %348 = vmatprep.subr.bf16.mxu0 0
  %349 = vmatpush1.bf16.msra.mxu0 %v267
  %350 = vmatprep.subr.bf16.mxu0 0
  %351 = vmatpush1.bf16.msra.mxu0 %v266
  %352 = vmatprep.subr.bf16.mxu0 0
  %353 = vmatpush1.bf16.msra.mxu0 %v265
  %354 = vmatprep.subr.bf16.mxu0 0
  %355 = vmatpush1.bf16.msra.mxu0 %v264
  %356 = vmatprep.subr.bf16.mxu0 0
  %357 = vmatpush1.bf16.msra.mxu0 %v263
  %358 = vmatprep.subr.bf16.mxu0 0
  %359 = vmatpush1.bf16.msra.mxu0 %v262
  %360 = vmatprep.subr.bf16.mxu0 0
  %361 = vmatpush1.bf16.msra.mxu0 %v261
  %362 = vmatprep.subr.bf16.mxu0 0
  %363 = vmatpush1.bf16.msra.mxu0 %v260
  %364 = vmatprep.subr.bf16.mxu0 0
  %365 = vmatpush2.bf16.msra.mxu0 %v275
  %366 = vmatprep.subr.bf16.mxu0 0
  %367 = vmatpush2.bf16.msra.mxu0 %v274
  %368 = vmatprep.subr.bf16.mxu0 0
  %369 = vmatpush2.bf16.msra.mxu0 %v273
  %370 = vmatprep.subr.bf16.mxu0 0
  %371 = vmatpush2.bf16.msra.mxu0 %v272
  %372 = vmatprep.subr.bf16.mxu0 0
  %373 = vmatpush2.bf16.msra.mxu0 %v271
  %374 = vmatprep.subr.bf16.mxu0 0
  %375 = vmatpush2.bf16.msra.mxu0 %v270
  %376 = vmatprep.subr.bf16.mxu0 0
  %377 = vmatpush2.bf16.msra.mxu0 %v269
  %378 = vmatprep.subr.bf16.mxu0 0
  %379 = vmatpush2.bf16.msra.mxu0 %v268
  %380 = vmatprep.mubr.bf16.mxu0 %v111
  %381 = vmatmul.mubr.bf16.gmra.mxu0 %v110
  %v382 = vpop.f32.mrf.mxu0
  %v383 = vadd.f32 %v343, %v382
  %v384 = vpop.f32.mrf.mxu0
  %v385 = vpop.f32.mrf.mxu0
  %v386 = vpop.f32.mrf.mxu0
  %387 = vdwg.mxu0
  %v388 = vxor.u32 %v383, 2147483648
  %v389 = vmul.f32 %v388, 1.442695
  %v390 = vpow.pop %v389
  %v391 = vadd.f32 %v390, 1.0
  %v392 = vrcp.pop %v391
  %v393 = vmul.f32 1.0, %v392
  %394 = vst [vmem:[%s3] sm:$0x3] %v393
  // Predicated region
  $region14: #{dcgan_discriminator_forward.11} parent=0 // pred_check
    _
  $region15: #{dcgan_discriminator_forward.11} parent=0 // pred_check_branch
    %396 = sbr.rel (0) target = $region17
  $region16: #{dcgan_discriminator_forward.11} parent=0 // pred_region
    _
  $region17: #{dcgan_discriminator_forward.11} parent=0 // pred_fallthru
    _
  // Predicated region
  $region18: #{dcgan_discriminator_forward.11} parent=0 // pred_check
    _
  $region19: #{dcgan_discriminator_forward.11} parent=0 // pred_check_branch
    %398 = sbr.rel (0) target = $region21
  $region20: #{dcgan_discriminator_forward.11} parent=0 // pred_region
    _
  $region21: #{dcgan_discriminator_forward.11} parent=0 // pred_fallthru
    _

</llo_original>
